<compile_context>
chip_gen: v5e
topology: v5e:2x2
jax: 0.10.0
libtpu: 0.0.40
codegen_flags: <defaults>
</compile_context>

<pallas_src>
import math

import jax
import jax.numpy as jnp
from jax.experimental import pallas as pl
from jax.experimental.pallas import tpu as pltpu

# ----------------------------- model config ---------------------------------
N_HEAD = 2      # attention heads
N_LAYER = 2     # transformer blocks
LN_EPS = 1e-5
NEG_INF = -1e9

# padded (lane-dense) kernel dimensions
H_PAD = 128     # hidden dim padded to one full lane width
HD_PAD = 128    # per-head dim padded to one full lane width
FF_PAD = 128    # MLP inner dim padded (4*H <= 128 at toy size)
C_PAD = 128     # classifier output lanes
B_PAD = 8       # output rows padded to one sublane tile

# packed small-vector rows (per layer), all width H_PAD
R_LN1G, R_LN1B, R_LN2G, R_LN2B = 0, 1, 2, 3
R_BPROJ, R_BOUT, R_BFC = 4, 5, 6
R_BQ, R_BK, R_BV = 8, 10, 12          # + head index
N_VEC_ROWS = 16


# ------------------------------ small helpers --------------------------------
def _gelu_new(x):
    return 0.5 * x * (1.0 + jnp.tanh(math.sqrt(2.0 / math.pi) * (x + 0.044715 * x ** 3)))


def _layer_norm_ref(v, g, b):
    mu = jnp.mean(v, axis=-1, keepdims=True)
    var = jnp.mean((v - mu) ** 2, axis=-1, keepdims=True)
    return (v - mu) * jax.lax.rsqrt(var + LN_EPS) * g + b


# ------------------------- fused Pallas forward kernel ------------------------
def fused_forward(x_pad, attn_bias, sel, kp, n_valid):
    """One pallas_call: N_LAYER GPT-2 blocks + final LN + gather + classifier.

    x_pad:     (B*S, H_PAD) f32 embeddings, zero on padded lanes.
    attn_bias: (B*S, B*S) f32 additive mask (0 keep / -1e9 drop).
    sel:       (B_PAD, B*S) f32 one-hot row selector for the masked positions.
    """
    BS = x_pad.shape[0]
    inv_n = 1.0 / float(n_valid)          # LN statistics over the logical H only

    def ln(v, g, b):
        # padded lanes of v are zero, so sums over H_PAD equal sums over H
        mu = jnp.sum(v, axis=-1, keepdims=True) * inv_n
        ex2 = jnp.sum(v * v, axis=-1, keepdims=True) * inv_n
        var = ex2 - mu * mu
        return (v - mu) * jax.lax.rsqrt(var + LN_EPS) * g + b

    def softmax(s):
        m = jnp.max(s, axis=-1, keepdims=True)
        e = jnp.exp(s - m)
        return e * pl.reciprocal(jnp.sum(e, axis=-1, keepdims=True), approx=True)

    def kernel(x_ref, bias_ref, sel_ref, vecs_ref,
               wq_ref, wk_ref, wv_ref, wproj_ref, wfc_ref, wout_ref,
               lnf_ref, wcls_ref, bcls_ref, out_ref):
        bf16, f32 = jnp.bfloat16, jnp.float32
        x = x_ref[...]                    # (BS, H_PAD) f32 residual stream
        bias = bias_ref[...]              # (BS, BS) f32 additive attention mask

        for l in range(N_LAYER):          # static unroll (toy depth)
            v = vecs_ref[l]               # (16, H_PAD) packed small params
            # ---- attention (pre-LN), head-major weights, MXU-accumulated proj ----
            h1 = ln(x, v[R_LN1G:R_LN1G + 1], v[R_LN1B:R_LN1B + 1]).astype(bf16)
            attn = None
            for h in range(N_HEAD):
                q = jnp.dot(h1, wq_ref[l, h],
                            preferred_element_type=f32) + v[R_BQ + h:R_BQ + h + 1]
                k = jnp.dot(h1, wk_ref[l, h],
                            preferred_element_type=f32) + v[R_BK + h:R_BK + h + 1]
                vv = jnp.dot(h1, wv_ref[l, h],
                             preferred_element_type=f32) + v[R_BV + h:R_BV + h + 1]
                # scores: contract last dims, no explicit transpose; 1/sqrt(hd)
                # is pre-folded into the Q weights/bias.
                s = jax.lax.dot_general(q.astype(bf16), k.astype(bf16),
                                        (((1,), (1,)), ((), ())),
                                        preferred_element_type=f32) + bias
                p = softmax(s)
                ctx = jnp.dot(p.astype(bf16), vv.astype(bf16),
                              preferred_element_type=f32)
                t = jnp.dot(ctx.astype(bf16), wproj_ref[l, h],
                            preferred_element_type=f32)
                attn = t if attn is None else attn + t
            x = x + attn + v[R_BPROJ:R_BPROJ + 1]

            # ---- MLP (pre-LN, gelu_new as in GPT-2) ----
            h2 = ln(x, v[R_LN2G:R_LN2G + 1], v[R_LN2B:R_LN2B + 1]).astype(bf16)
            fc = jnp.dot(h2, wfc_ref[l],
                         preferred_element_type=f32) + v[R_BFC:R_BFC + 1]
            x = x + jnp.dot(_gelu_new(fc).astype(bf16), wout_ref[l],
                            preferred_element_type=f32) + v[R_BOUT:R_BOUT + 1]

        # masked-position gather: one-hot selection as an exact f32 MXU matmul
        rows = jnp.dot(sel_ref[...], x, preferred_element_type=f32)  # (B_PAD, H_PAD)
        lnf = lnf_ref[...]
        nrm = ln(rows, lnf[0:1], lnf[1:2]).astype(bf16)
        # lane-dense classifier: (8, 128) full-tile unmasked store
        out_ref[...] = jnp.dot(nrm, wcls_ref[...],
                               preferred_element_type=f32) + bcls_ref[...]

    tensors = (x_pad, attn_bias, sel,
               kp["vecs"], kp["w_q"], kp["w_k"], kp["w_v"],
               kp["w_proj"], kp["w_fc"], kp["w_out"],
               kp["lnf"], kp["w_cls"], kp["b_cls"])

    def full_spec(a):
        nd = a.ndim
        return pl.BlockSpec(a.shape, lambda i, nd=nd: (0,) * nd)

    return pl.pallas_call(
        kernel,
        out_shape=jax.ShapeDtypeStruct((B_PAD, C_PAD), jnp.float32),
        grid=(1,),                                  # whole (toy) batch in one step
        in_specs=[full_spec(t) for t in tensors],
        out_specs=pl.BlockSpec((B_PAD, C_PAD), lambda i: (0, 0)),
        compiler_params=pltpu.CompilerParams(
            dimension_semantics=("arbitrary",),
            vmem_limit_bytes=32 * 1024 * 1024),
    )(*tensors)


# --------------------------- parameter initialization ------------------------
def init_params(key, vocab, max_pos, H, num_classes):
    """Logical (unpadded) GPT-2-style parameters; randomized biases/LN params
    so the kernel's packing is actually exercised by the correctness check."""
    scale = 0.02
    ks = iter(jax.random.split(key, 32))
    n = lambda shape: scale * jax.random.normal(next(ks), shape, jnp.float32)

    p = {
        "wte": n((vocab, H)),
        "wpe": n((max_pos, H)),
        "ln1_g": 1.0 + n((N_LAYER, H)), "ln1_b": n((N_LAYER, H)),
        "ln2_g": 1.0 + n((N_LAYER, H)), "ln2_b": n((N_LAYER, H)),
        "lnf_g": 1.0 + n((H,)), "lnf_b": n((H,)),
        "b_qkv": n((N_LAYER, 3 * H)),
        "b_proj": n((N_LAYER, H)),
        "b_fc": n((N_LAYER, 4 * H)),
        "b_out": n((N_LAYER, H)),
        "w_cls": n((num_classes, H)),      # nn.Linear convention: (C, H)
        "b_cls": n((num_classes,)),
    }
    wqkv, wproj, wfc, wout = [], [], [], []
    for _ in range(N_LAYER):
        wqkv.append(n((H, 3 * H)))
        wproj.append(n((H, H)))
        wfc.append(n((H, 4 * H)))
        wout.append(n((4 * H, H)))
    p["w_qkv"] = jnp.stack(wqkv)
    p["w_proj"] = jnp.stack(wproj)
    p["w_fc"] = jnp.stack(wfc)
    p["w_out"] = jnp.stack(wout)
    return p


def pack_kernel_params(p):
    """Padded, head-major, bf16 kernel-side tensors (zero padding everywhere so
    padded lanes of the residual stream stay exactly zero)."""
    H = p["wte"].shape[1]
    hd = H // N_HEAD
    FF = 4 * H
    L = N_LAYER
    C = p["w_cls"].shape[0]
    assert H <= H_PAD and hd <= HD_PAD and FF <= FF_PAD and C <= C_PAD
    inv_sqrt_hd = 1.0 / math.sqrt(hd)

    # packed per-layer small vectors (f32, used by VPU)
    vecs = jnp.zeros((L, N_VEC_ROWS, H_PAD), jnp.float32)
    vecs = vecs.at[:, R_LN1G, :H].set(p["ln1_g"]).at[:, R_LN1B, :H].set(p["ln1_b"])
    vecs = vecs.at[:, R_LN2G, :H].set(p["ln2_g"]).at[:, R_LN2B, :H].set(p["ln2_b"])
    vecs = vecs.at[:, R_BPROJ, :H].set(p["b_proj"]).at[:, R_BOUT, :H].set(p["b_out"])
    vecs = vecs.at[:, R_BFC, :FF].set(p["b_fc"])
    bq = p["b_qkv"][:, 0 * H:1 * H].reshape(L, N_HEAD, hd) * inv_sqrt_hd  # fold scale
    bk = p["b_qkv"][:, 1 * H:2 * H].reshape(L, N_HEAD, hd)
    bv = p["b_qkv"][:, 2 * H:3 * H].reshape(L, N_HEAD, hd)
    for h in range(N_HEAD):
        vecs = vecs.at[:, R_BQ + h, :hd].set(bq[:, h])
        vecs = vecs.at[:, R_BK + h, :hd].set(bk[:, h])
        vecs = vecs.at[:, R_BV + h, :hd].set(bv[:, h])

    def head_major_in(w):      # (L, H, H) -> (L, NH, H, hd)
        return w.reshape(L, H, N_HEAD, hd).transpose(0, 2, 1, 3)

    def pad_in(w):             # (L, NH, H, hd) -> (L, NH, H_PAD, HD_PAD) bf16
        out = jnp.zeros((L, N_HEAD, H_PAD, HD_PAD), jnp.float32)
        return out.at[:, :, :H, :hd].set(w).astype(jnp.bfloat16)

    w_q = pad_in(head_major_in(p["w_qkv"][:, :, 0 * H:1 * H]) * inv_sqrt_hd)
    w_k = pad_in(head_major_in(p["w_qkv"][:, :, 1 * H:2 * H]))
    w_v = pad_in(head_major_in(p["w_qkv"][:, :, 2 * H:3 * H]))

    w_proj = jnp.zeros((L, N_HEAD, HD_PAD, H_PAD), jnp.float32)
    w_proj = w_proj.at[:, :, :hd, :H].set(
        p["w_proj"].reshape(L, N_HEAD, hd, H)).astype(jnp.bfloat16)

    w_fc = jnp.zeros((L, H_PAD, FF_PAD), jnp.float32)
    w_fc = w_fc.at[:, :H, :FF].set(p["w_fc"]).astype(jnp.bfloat16)
    w_out = jnp.zeros((L, FF_PAD, H_PAD), jnp.float32)
    w_out = w_out.at[:, :FF, :H].set(p["w_out"]).astype(jnp.bfloat16)

    lnf = jnp.zeros((2, H_PAD), jnp.float32)
    lnf = lnf.at[0, :H].set(p["lnf_g"]).at[1, :H].set(p["lnf_b"])

    w_cls = jnp.zeros((H_PAD, C_PAD), jnp.float32)
    w_cls = w_cls.at[:H, :C].set(p["w_cls"].T).astype(jnp.bfloat16)
    b_cls = jnp.zeros((1, C_PAD), jnp.float32).at[0, :C].set(p["b_cls"])

    return {"vecs": vecs, "w_q": w_q, "w_k": w_k, "w_v": w_v,
            "w_proj": w_proj, "w_fc": w_fc, "w_out": w_out,
            "lnf": lnf, "w_cls": w_cls, "b_cls": b_cls}


# ------------------------------- forward pass --------------------------------
def punctuation_classifier_forward(params, kparams, input_ids, attention_mask,
                                   masked_position, num_classes):
    B, S = input_ids.shape
    H = params["wte"].shape[1]
    BS = B * S

    # embeddings lookup (JAX glue gather), flattened batch, zero-padded lanes
    x = params["wte"][input_ids] + params["wpe"][jnp.arange(S)][None, :, :]
    x_pad = jnp.zeros((BS, H_PAD), jnp.float32).at[:, :H].set(
        x.reshape(BS, H).astype(jnp.float32))

    # additive attention bias: block-diagonal causal + key padding, built once here
    # TODO(synk): at larger B/S switch to per-batch (S,S) attention (batch grid
    #             axis) instead of flattened (B*S)^2 scores.
    idx = jnp.arange(BS)
    same_b = (idx[:, None] // S) == (idx[None, :] // S)
    causal = (idx[None, :] % S) <= (idx[:, None] % S)
    key_keep = attention_mask.astype(jnp.float32).reshape(1, BS) > 0.5
    attn_bias = jnp.where(same_b & causal & key_keep, 0.0, NEG_INF).astype(jnp.float32)

    # one-hot row selector for the masked-position gather (clamped -> no OOB reads)
    pos = jnp.clip(masked_position.astype(jnp.int32), 0, S - 1)
    flat = jnp.arange(B) * S + pos
    sel = jnp.zeros((B_PAD, BS), jnp.float32).at[jnp.arange(B), flat].set(1.0)

    logits_pad = fused_forward(x_pad, attn_bias, sel, kparams, H)
    return logits_pad[:B, :num_classes]


# --------------------------- pure-JAX reference ------------------------------
def reference_forward(p, input_ids, attention_mask, masked_position, num_classes):
    B, S = input_ids.shape
    H = p["wte"].shape[1]
    hd = H // N_HEAD
    x = (p["wte"][input_ids] + p["wpe"][jnp.arange(S)][None]).astype(jnp.float32)

    causal = jnp.tril(jnp.ones((S, S), bool))
    keep = causal[None] & (attention_mask.astype(jnp.float32)[:, None, :] > 0.5)

    for l in range(N_LAYER):
        h1 = _layer_norm_ref(x, p["ln1_g"][l], p["ln1_b"][l])
        qkv = h1 @ p["w_qkv"][l] + p["b_qkv"][l]
        ctx = []
        for h in range(N_HEAD):
            q = qkv[..., h * hd:(h + 1) * hd]
            k = qkv[..., H + h * hd:H + (h + 1) * hd]
            vv = qkv[..., 2 * H + h * hd:2 * H + (h + 1) * hd]
            s = jnp.einsum("bqd,bkd->bqk", q, k) / math.sqrt(hd)
            s = jnp.where(keep, s, NEG_INF)
            ctx.append(jnp.einsum("bqk,bkd->bqd", jax.nn.softmax(s, -1), vv))
        x = x + jnp.concatenate(ctx, -1) @ p["w_proj"][l] + p["b_proj"][l]
        h2 = _layer_norm_ref(x, p["ln2_g"][l], p["ln2_b"][l])
        fc = h2 @ p["w_fc"][l] + p["b_fc"][l]
        x = x + _gelu_new(fc) @ p["w_out"][l] + p["b_out"][l]

    rows = x[jnp.arange(B), masked_position]
    rows = _layer_norm_ref(rows, p["lnf_g"], p["lnf_b"])
    return rows @ p["w_cls"].T + p["b_cls"]


# ----------------------------------- main ------------------------------------
if __name__ == "__main__":
    B, S, H = 2, 8, 32
    VOCAB, MAX_POS, NUM_CLASSES = 50, 16, 5

    key = jax.random.PRNGKey(0)
    k_param, k_ids = jax.random.split(key)

    params = init_params(k_param, VOCAB, MAX_POS, H, NUM_CLASSES)
    kparams = pack_kernel_params(params)

    input_ids = jax.random.randint(k_ids, (B, S), 0, VOCAB, dtype=jnp.int32)
    attention_mask = jnp.array([[1, 1, 1, 1, 1, 1, 1, 1],
                                [1, 1, 1, 1, 1, 0, 0, 0]], dtype=jnp.float32)
    # global `masked_position = 1` from the reference, broadcast per batch row
    masked_position = jnp.array([1, 1], dtype=jnp.int32)

    logits = punctuation_classifier_forward(params, kparams, input_ids,
                                            attention_mask, masked_position,
                                            NUM_CLASSES)
    logits = jax.block_until_ready(logits)

    assert logits.shape == (B, NUM_CLASSES), logits.shape
    assert bool(jnp.all(jnp.isfinite(logits)))

    # sanity-check against a pure-JAX f32 reference (loose tol: bf16 MXU inputs
    # + approx-reciprocal softmax)
    ref = reference_forward(params, input_ids, attention_mask, masked_position,
                            NUM_CLASSES)
    assert bool(jnp.allclose(logits, ref, rtol=3e-2, atol=3e-2)), (logits, ref)

    print("KERNEL_OK")
</pallas_src>

<mosaic_0001>
module attributes {stable_mosaic.version = 11 : i64} {
  func.func @kernel(%arg0: i32, %arg1: memref<16x128xf32, #tpu.memory_space<vmem>>, %arg2: memref<16x16xf32, #tpu.memory_space<vmem>>, %arg3: memref<8x16xf32, #tpu.memory_space<vmem>>, %arg4: memref<2x16x128xf32, #tpu.memory_space<vmem>>, %arg5: memref<2x2x128x128xbf16, #tpu.memory_space<vmem>>, %arg6: memref<2x2x128x128xbf16, #tpu.memory_space<vmem>>, %arg7: memref<2x2x128x128xbf16, #tpu.memory_space<vmem>>, %arg8: memref<2x2x128x128xbf16, #tpu.memory_space<vmem>>, %arg9: memref<2x128x128xbf16, #tpu.memory_space<vmem>>, %arg10: memref<2x128x128xbf16, #tpu.memory_space<vmem>>, %arg11: memref<2x128xf32, #tpu.memory_space<vmem>>, %arg12: memref<128x128xbf16, #tpu.memory_space<vmem>>, %arg13: memref<1x128xf32, #tpu.memory_space<vmem>>, %arg14: memref<8x128xf32, #tpu.memory_space<vmem>>) attributes {dimension_semantics = [#tpu.dimension_semantics<arbitrary>], iteration_bounds = array<i64: 1>, scalar_prefetch = 0 : i64, scratch_operands = 0 : i64, tpu.core_type = #tpu.core_type<tc>, window_params = [{pipeline_mode = #tpu.pipeline_mode<synchronous>, transform_indices = @transform_0, window_bounds = array<i64: 16, 128>}, {pipeline_mode = #tpu.pipeline_mode<synchronous>, transform_indices = @transform_1, window_bounds = array<i64: 16, 16>}, {pipeline_mode = #tpu.pipeline_mode<synchronous>, transform_indices = @transform_2, window_bounds = array<i64: 8, 16>}, {pipeline_mode = #tpu.pipeline_mode<synchronous>, transform_indices = @transform_3, window_bounds = array<i64: 2, 16, 128>}, {pipeline_mode = #tpu.pipeline_mode<synchronous>, transform_indices = @transform_4, window_bounds = array<i64: 2, 2, 128, 128>}, {pipeline_mode = #tpu.pipeline_mode<synchronous>, transform_indices = @transform_5, window_bounds = array<i64: 2, 2, 128, 128>}, {pipeline_mode = #tpu.pipeline_mode<synchronous>, transform_indices = @transform_6, window_bounds = array<i64: 2, 2, 128, 128>}, {pipeline_mode = #tpu.pipeline_mode<synchronous>, transform_indices = @transform_7, window_bounds = array<i64: 2, 2, 128, 128>}, {pipeline_mode = #tpu.pipeline_mode<synchronous>, transform_indices = @transform_8, window_bounds = array<i64: 2, 128, 128>}, {pipeline_mode = #tpu.pipeline_mode<synchronous>, transform_indices = @transform_9, window_bounds = array<i64: 2, 128, 128>}, {pipeline_mode = #tpu.pipeline_mode<synchronous>, transform_indices = @transform_10, window_bounds = array<i64: 2, 128>}, {pipeline_mode = #tpu.pipeline_mode<synchronous>, transform_indices = @transform_11, window_bounds = array<i64: 128, 128>}, {pipeline_mode = #tpu.pipeline_mode<synchronous>, transform_indices = @transform_12, window_bounds = array<i64: 1, 128>}, {pipeline_mode = #tpu.pipeline_mode<synchronous>, transform_indices = @transform_13, window_bounds = array<i64: 8, 128>}]} {
    %c0 = arith.constant 0 : index
    %c0_0 = arith.constant 0 : index
    %0 = vector.load %arg1[%c0, %c0_0] : memref<16x128xf32, #tpu.memory_space<vmem>>, vector<16x128xf32>
    %c0_1 = arith.constant 0 : index
    %c0_2 = arith.constant 0 : index
    %1 = vector.load %arg2[%c0_1, %c0_2] : memref<16x16xf32, #tpu.memory_space<vmem>>, vector<16x16xf32>
    %c0_3 = arith.constant 0 : index
    %c0_4 = arith.constant 0 : index
    %c0_5 = arith.constant 0 : index
    %2 = vector.load %arg4[%c0_3, %c0_4, %c0_5] : memref<2x16x128xf32, #tpu.memory_space<vmem>>, vector<1x16x128xf32>
    %3 = vector.shape_cast %2 : vector<1x16x128xf32> to vector<16x128xf32>
    %4 = vector.extract_strided_slice %3 {offsets = [0, 0], sizes = [1, 128], strides = [1, 1]} : vector<16x128xf32> to vector<1x128xf32>
    %5 = vector.extract_strided_slice %3 {offsets = [1, 0], sizes = [1, 128], strides = [1, 1]} : vector<16x128xf32> to vector<1x128xf32>
    %cst = arith.constant dense<0.000000e+00> : vector<16xf32>
    %6 = vector.multi_reduction <add>, %0, %cst [1] : vector<16x128xf32> to vector<16xf32>
    %7 = vector.shape_cast %6 : vector<16xf32> to vector<16x1xf32>
    %cst_6 = arith.constant 3.125000e-02 : f32
    %8 = vector.broadcast %cst_6 : f32 to vector<16x1xf32>
    %9 = arith.mulf %7, %8 : vector<16x1xf32>
    %10 = arith.mulf %0, %0 : vector<16x128xf32>
    %cst_7 = arith.constant dense<0.000000e+00> : vector<16xf32>
    %11 = vector.multi_reduction <add>, %10, %cst_7 [1] : vector<16x128xf32> to vector<16xf32>
    %12 = vector.shape_cast %11 : vector<16xf32> to vector<16x1xf32>
    %cst_8 = arith.constant 3.125000e-02 : f32
    %13 = vector.broadcast %cst_8 : f32 to vector<16x1xf32>
    %14 = arith.mulf %12, %13 : vector<16x1xf32>
    %15 = arith.mulf %9, %9 : vector<16x1xf32>
    %16 = arith.subf %14, %15 : vector<16x1xf32>
    %17 = vector.broadcast %9 : vector<16x1xf32> to vector<16x128xf32>
    %18 = arith.subf %0, %17 : vector<16x128xf32>
    %cst_9 = arith.constant 9.99999974E-6 : f32
    %19 = vector.broadcast %cst_9 : f32 to vector<16x1xf32>
    %20 = arith.addf %16, %19 : vector<16x1xf32>
    %21 = math.rsqrt %20 : vector<16x1xf32>
    %22 = vector.broadcast %21 : vector<16x1xf32> to vector<16x128xf32>
    %23 = arith.mulf %18, %22 : vector<16x128xf32>
    %24 = vector.broadcast %4 : vector<1x128xf32> to vector<16x128xf32>
    %25 = arith.mulf %23, %24 : vector<16x128xf32>
    %26 = vector.broadcast %5 : vector<1x128xf32> to vector<16x128xf32>
    %27 = arith.addf %25, %26 : vector<16x128xf32>
    %28 = arith.truncf %27 : vector<16x128xf32> to vector<16x128xbf16>
    %c0_10 = arith.constant 0 : index
    %c0_11 = arith.constant 0 : index
    %c0_12 = arith.constant 0 : index
    %c0_13 = arith.constant 0 : index
    %29 = vector.load %arg5[%c0_10, %c0_11, %c0_12, %c0_13] : memref<2x2x128x128xbf16, #tpu.memory_space<vmem>>, vector<1x1x128x128xbf16>
    %30 = vector.shape_cast %29 : vector<1x1x128x128xbf16> to vector<128x128xbf16>
    %cst_14 = arith.constant dense<0.000000e+00> : vector<16x128xf32>
    %31 = tpu.matmul %28, %30, %cst_14 {dimension_numbers = #tpu.dot_dimension_numbers<[1], [0], [0], [1], [0, 0, 1, 1], [], []>} : vector<16x128xbf16>, vector<128x128xbf16>, vector<16x128xf32> -> vector<16x128xf32>
    %32 = vector.extract_strided_slice %3 {offsets = [8, 0], sizes = [1, 128], strides = [1, 1]} : vector<16x128xf32> to vector<1x128xf32>
    %33 = vector.broadcast %32 : vector<1x128xf32> to vector<16x128xf32>
    %34 = arith.addf %31, %33 : vector<16x128xf32>
    %c0_15 = arith.constant 0 : index
    %c0_16 = arith.constant 0 : index
    %c0_17 = arith.constant 0 : index
    %c0_18 = arith.constant 0 : index
    %35 = vector.load %arg6[%c0_15, %c0_16, %c0_17, %c0_18] : memref<2x2x128x128xbf16, #tpu.memory_space<vmem>>, vector<1x1x128x128xbf16>
    %36 = vector.shape_cast %35 : vector<1x1x128x128xbf16> to vector<128x128xbf16>
    %cst_19 = arith.constant dense<0.000000e+00> : vector<16x128xf32>
    %37 = tpu.matmul %28, %36, %cst_19 {dimension_numbers = #tpu.dot_dimension_numbers<[1], [0], [0], [1], [0, 0, 1, 1], [], []>} : vector<16x128xbf16>, vector<128x128xbf16>, vector<16x128xf32> -> vector<16x128xf32>
    %38 = vector.extract_strided_slice %3 {offsets = [10, 0], sizes = [1, 128], strides = [1, 1]} : vector<16x128xf32> to vector<1x128xf32>
    %39 = vector.broadcast %38 : vector<1x128xf32> to vector<16x128xf32>
    %40 = arith.addf %37, %39 : vector<16x128xf32>
    %c0_20 = arith.constant 0 : index
    %c0_21 = arith.constant 0 : index
    %c0_22 = arith.constant 0 : index
    %c0_23 = arith.constant 0 : index
    %41 = vector.load %arg7[%c0_20, %c0_21, %c0_22, %c0_23] : memref<2x2x128x128xbf16, #tpu.memory_space<vmem>>, vector<1x1x128x128xbf16>
    %42 = vector.shape_cast %41 : vector<1x1x128x128xbf16> to vector<128x128xbf16>
    %cst_24 = arith.constant dense<0.000000e+00> : vector<16x128xf32>
    %43 = tpu.matmul %28, %42, %cst_24 {dimension_numbers = #tpu.dot_dimension_numbers<[1], [0], [0], [1], [0, 0, 1, 1], [], []>} : vector<16x128xbf16>, vector<128x128xbf16>, vector<16x128xf32> -> vector<16x128xf32>
    %44 = vector.extract_strided_slice %3 {offsets = [12, 0], sizes = [1, 128], strides = [1, 1]} : vector<16x128xf32> to vector<1x128xf32>
    %45 = vector.broadcast %44 : vector<1x128xf32> to vector<16x128xf32>
    %46 = arith.addf %43, %45 : vector<16x128xf32>
    %47 = arith.truncf %34 : vector<16x128xf32> to vector<16x128xbf16>
    %48 = arith.truncf %40 : vector<16x128xf32> to vector<16x128xbf16>
    %cst_25 = arith.constant dense<0.000000e+00> : vector<16x16xf32>
    %49 = tpu.matmul %47, %48, %cst_25 {dimension_numbers = #tpu.dot_dimension_numbers<[1], [1], [0], [0], [0, 0, 1, 0], [], []>} : vector<16x128xbf16>, vector<16x128xbf16>, vector<16x16xf32> -> vector<16x16xf32>
    %50 = arith.addf %49, %1 : vector<16x16xf32>
    %cst_26 = arith.constant dense<0xFF800000> : vector<16xf32>
    %51 = vector.multi_reduction <maximumf>, %50, %cst_26 [1] : vector<16x16xf32> to vector<16xf32>
    %52 = vector.shape_cast %51 : vector<16xf32> to vector<16x1xf32>
    %53 = vector.broadcast %52 : vector<16x1xf32> to vector<16x16xf32>
    %54 = arith.subf %50, %53 : vector<16x16xf32>
    %55 = math.exp %54 : vector<16x16xf32>
    %cst_27 = arith.constant dense<0.000000e+00> : vector<16xf32>
    %56 = vector.multi_reduction <add>, %55, %cst_27 [1] : vector<16x16xf32> to vector<16xf32>
    %57 = vector.shape_cast %56 : vector<16xf32> to vector<16x1xf32>
    %58 = tpu.reciprocal %57 {approx = true} : vector<16x1xf32> -> vector<16x1xf32>
    %59 = vector.broadcast %58 : vector<16x1xf32> to vector<16x16xf32>
    %60 = arith.mulf %55, %59 : vector<16x16xf32>
    %61 = arith.truncf %60 : vector<16x16xf32> to vector<16x16xbf16>
    %62 = arith.truncf %46 : vector<16x128xf32> to vector<16x128xbf16>
    %cst_28 = arith.constant dense<0.000000e+00> : vector<16x128xf32>
    %63 = tpu.matmul %61, %62, %cst_28 {dimension_numbers = #tpu.dot_dimension_numbers<[1], [0], [0], [1], [0, 0, 1, 1], [], []>} : vector<16x16xbf16>, vector<16x128xbf16>, vector<16x128xf32> -> vector<16x128xf32>
    %64 = arith.truncf %63 : vector<16x128xf32> to vector<16x128xbf16>
    %c0_29 = arith.constant 0 : index
    %c0_30 = arith.constant 0 : index
    %c0_31 = arith.constant 0 : index
    %c0_32 = arith.constant 0 : index
    %65 = vector.load %arg8[%c0_29, %c0_30, %c0_31, %c0_32] : memref<2x2x128x128xbf16, #tpu.memory_space<vmem>>, vector<1x1x128x128xbf16>
    %66 = vector.shape_cast %65 : vector<1x1x128x128xbf16> to vector<128x128xbf16>
    %cst_33 = arith.constant dense<0.000000e+00> : vector<16x128xf32>
    %67 = tpu.matmul %64, %66, %cst_33 {dimension_numbers = #tpu.dot_dimension_numbers<[1], [0], [0], [1], [0, 0, 1, 1], [], []>} : vector<16x128xbf16>, vector<128x128xbf16>, vector<16x128xf32> -> vector<16x128xf32>
    %c0_34 = arith.constant 0 : index
    %c1 = arith.constant 1 : index
    %c0_35 = arith.constant 0 : index
    %c0_36 = arith.constant 0 : index
    %68 = vector.load %arg5[%c0_34, %c1, %c0_35, %c0_36] : memref<2x2x128x128xbf16, #tpu.memory_space<vmem>>, vector<1x1x128x128xbf16>
    %69 = vector.shape_cast %68 : vector<1x1x128x128xbf16> to vector<128x128xbf16>
    %cst_37 = arith.constant dense<0.000000e+00> : vector<16x128xf32>
    %70 = tpu.matmul %28, %69, %cst_37 {dimension_numbers = #tpu.dot_dimension_numbers<[1], [0], [0], [1], [0, 0, 1, 1], [], []>} : vector<16x128xbf16>, vector<128x128xbf16>, vector<16x128xf32> -> vector<16x128xf32>
    %71 = vector.extract_strided_slice %3 {offsets = [9, 0], sizes = [1, 128], strides = [1, 1]} : vector<16x128xf32> to vector<1x128xf32>
    %72 = vector.broadcast %71 : vector<1x128xf32> to vector<16x128xf32>
    %73 = arith.addf %70, %72 : vector<16x128xf32>
    %c0_38 = arith.constant 0 : index
    %c1_39 = arith.constant 1 : index
    %c0_40 = arith.constant 0 : index
    %c0_41 = arith.constant 0 : index
    %74 = vector.load %arg6[%c0_38, %c1_39, %c0_40, %c0_41] : memref<2x2x128x128xbf16, #tpu.memory_space<vmem>>, vector<1x1x128x128xbf16>
    %75 = vector.shape_cast %74 : vector<1x1x128x128xbf16> to vector<128x128xbf16>
    %cst_42 = arith.constant dense<0.000000e+00> : vector<16x128xf32>
    %76 = tpu.matmul %28, %75, %cst_42 {dimension_numbers = #tpu.dot_dimension_numbers<[1], [0], [0], [1], [0, 0, 1, 1], [], []>} : vector<16x128xbf16>, vector<128x128xbf16>, vector<16x128xf32> -> vector<16x128xf32>
    %77 = vector.extract_strided_slice %3 {offsets = [11, 0], sizes = [1, 128], strides = [1, 1]} : vector<16x128xf32> to vector<1x128xf32>
    %78 = vector.broadcast %77 : vector<1x128xf32> to vector<16x128xf32>
    %79 = arith.addf %76, %78 : vector<16x128xf32>
    %c0_43 = arith.constant 0 : index
    %c1_44 = arith.constant 1 : index
    %c0_45 = arith.constant 0 : index
    %c0_46 = arith.constant 0 : index
    %80 = vector.load %arg7[%c0_43, %c1_44, %c0_45, %c0_46] : memref<2x2x128x128xbf16, #tpu.memory_space<vmem>>, vector<1x1x128x128xbf16>
    %81 = vector.shape_cast %80 : vector<1x1x128x128xbf16> to vector<128x128xbf16>
    %cst_47 = arith.constant dense<0.000000e+00> : vector<16x128xf32>
    %82 = tpu.matmul %28, %81, %cst_47 {dimension_numbers = #tpu.dot_dimension_numbers<[1], [0], [0], [1], [0, 0, 1, 1], [], []>} : vector<16x128xbf16>, vector<128x128xbf16>, vector<16x128xf32> -> vector<16x128xf32>
    %83 = vector.extract_strided_slice %3 {offsets = [13, 0], sizes = [1, 128], strides = [1, 1]} : vector<16x128xf32> to vector<1x128xf32>
    %84 = vector.broadcast %83 : vector<1x128xf32> to vector<16x128xf32>
    %85 = arith.addf %82, %84 : vector<16x128xf32>
    %86 = arith.truncf %73 : vector<16x128xf32> to vector<16x128xbf16>
    %87 = arith.truncf %79 : vector<16x128xf32> to vector<16x128xbf16>
    %cst_48 = arith.constant dense<0.000000e+00> : vector<16x16xf32>
    %88 = tpu.matmul %86, %87, %cst_48 {dimension_numbers = #tpu.dot_dimension_numbers<[1], [1], [0], [0], [0, 0, 1, 0], [], []>} : vector<16x128xbf16>, vector<16x128xbf16>, vector<16x16xf32> -> vector<16x16xf32>
    %89 = arith.addf %88, %1 : vector<16x16xf32>
    %cst_49 = arith.constant dense<0xFF800000> : vector<16xf32>
    %90 = vector.multi_reduction <maximumf>, %89, %cst_49 [1] : vector<16x16xf32> to vector<16xf32>
    %91 = vector.shape_cast %90 : vector<16xf32> to vector<16x1xf32>
    %92 = vector.broadcast %91 : vector<16x1xf32> to vector<16x16xf32>
    %93 = arith.subf %89, %92 : vector<16x16xf32>
    %94 = math.exp %93 : vector<16x16xf32>
    %cst_50 = arith.constant dense<0.000000e+00> : vector<16xf32>
    %95 = vector.multi_reduction <add>, %94, %cst_50 [1] : vector<16x16xf32> to vector<16xf32>
    %96 = vector.shape_cast %95 : vector<16xf32> to vector<16x1xf32>
    %97 = tpu.reciprocal %96 {approx = true} : vector<16x1xf32> -> vector<16x1xf32>
    %98 = vector.broadcast %97 : vector<16x1xf32> to vector<16x16xf32>
    %99 = arith.mulf %94, %98 : vector<16x16xf32>
    %100 = arith.truncf %99 : vector<16x16xf32> to vector<16x16xbf16>
    %101 = arith.truncf %85 : vector<16x128xf32> to vector<16x128xbf16>
    %cst_51 = arith.constant dense<0.000000e+00> : vector<16x128xf32>
    %102 = tpu.matmul %100, %101, %cst_51 {dimension_numbers = #tpu.dot_dimension_numbers<[1], [0], [0], [1], [0, 0, 1, 1], [], []>} : vector<16x16xbf16>, vector<16x128xbf16>, vector<16x128xf32> -> vector<16x128xf32>
    %103 = arith.truncf %102 : vector<16x128xf32> to vector<16x128xbf16>
    %c0_52 = arith.constant 0 : index
    %c1_53 = arith.constant 1 : index
    %c0_54 = arith.constant 0 : index
    %c0_55 = arith.constant 0 : index
    %104 = vector.load %arg8[%c0_52, %c1_53, %c0_54, %c0_55] : memref<2x2x128x128xbf16, #tpu.memory_space<vmem>>, vector<1x1x128x128xbf16>
    %105 = vector.shape_cast %104 : vector<1x1x128x128xbf16> to vector<128x128xbf16>
    %cst_56 = arith.constant dense<0.000000e+00> : vector<16x128xf32>
    %106 = tpu.matmul %103, %105, %cst_56 {dimension_numbers = #tpu.dot_dimension_numbers<[1], [0], [0], [1], [0, 0, 1, 1], [], []>} : vector<16x128xbf16>, vector<128x128xbf16>, vector<16x128xf32> -> vector<16x128xf32>
    %107 = arith.addf %67, %106 : vector<16x128xf32>
    %108 = arith.addf %0, %107 : vector<16x128xf32>
    %109 = vector.extract_strided_slice %3 {offsets = [4, 0], sizes = [1, 128], strides = [1, 1]} : vector<16x128xf32> to vector<1x128xf32>
    %110 = vector.broadcast %109 : vector<1x128xf32> to vector<16x128xf32>
    %111 = arith.addf %108, %110 : vector<16x128xf32>
    %112 = vector.extract_strided_slice %3 {offsets = [2, 0], sizes = [1, 128], strides = [1, 1]} : vector<16x128xf32> to vector<1x128xf32>
    %113 = vector.extract_strided_slice %3 {offsets = [3, 0], sizes = [1, 128], strides = [1, 1]} : vector<16x128xf32> to vector<1x128xf32>
    %cst_57 = arith.constant dense<0.000000e+00> : vector<16xf32>
    %114 = vector.multi_reduction <add>, %111, %cst_57 [1] : vector<16x128xf32> to vector<16xf32>
    %115 = vector.shape_cast %114 : vector<16xf32> to vector<16x1xf32>
    %cst_58 = arith.constant 3.125000e-02 : f32
    %116 = vector.broadcast %cst_58 : f32 to vector<16x1xf32>
    %117 = arith.mulf %115, %116 : vector<16x1xf32>
    %118 = arith.mulf %111, %111 : vector<16x128xf32>
    %cst_59 = arith.constant dense<0.000000e+00> : vector<16xf32>
    %119 = vector.multi_reduction <add>, %118, %cst_59 [1] : vector<16x128xf32> to vector<16xf32>
    %120 = vector.shape_cast %119 : vector<16xf32> to vector<16x1xf32>
    %cst_60 = arith.constant 3.125000e-02 : f32
    %121 = vector.broadcast %cst_60 : f32 to vector<16x1xf32>
    %122 = arith.mulf %120, %121 : vector<16x1xf32>
    %123 = arith.mulf %117, %117 : vector<16x1xf32>
    %124 = arith.subf %122, %123 : vector<16x1xf32>
    %125 = vector.broadcast %117 : vector<16x1xf32> to vector<16x128xf32>
    %126 = arith.subf %111, %125 : vector<16x128xf32>
    %cst_61 = arith.constant 9.99999974E-6 : f32
    %127 = vector.broadcast %cst_61 : f32 to vector<16x1xf32>
    %128 = arith.addf %124, %127 : vector<16x1xf32>
    %129 = math.rsqrt %128 : vector<16x1xf32>
    %130 = vector.broadcast %129 : vector<16x1xf32> to vector<16x128xf32>
    %131 = arith.mulf %126, %130 : vector<16x128xf32>
    %132 = vector.broadcast %112 : vector<1x128xf32> to vector<16x128xf32>
    %133 = arith.mulf %131, %132 : vector<16x128xf32>
    %134 = vector.broadcast %113 : vector<1x128xf32> to vector<16x128xf32>
    %135 = arith.addf %133, %134 : vector<16x128xf32>
    %136 = arith.truncf %135 : vector<16x128xf32> to vector<16x128xbf16>
    %c0_62 = arith.constant 0 : index
    %c0_63 = arith.constant 0 : index
    %c0_64 = arith.constant 0 : index
    %137 = vector.load %arg9[%c0_62, %c0_63, %c0_64] : memref<2x128x128xbf16, #tpu.memory_space<vmem>>, vector<1x128x128xbf16>
    %138 = vector.shape_cast %137 : vector<1x128x128xbf16> to vector<128x128xbf16>
    %cst_65 = arith.constant dense<0.000000e+00> : vector<16x128xf32>
    %139 = tpu.matmul %136, %138, %cst_65 {dimension_numbers = #tpu.dot_dimension_numbers<[1], [0], [0], [1], [0, 0, 1, 1], [], []>} : vector<16x128xbf16>, vector<128x128xbf16>, vector<16x128xf32> -> vector<16x128xf32>
    %140 = vector.extract_strided_slice %3 {offsets = [6, 0], sizes = [1, 128], strides = [1, 1]} : vector<16x128xf32> to vector<1x128xf32>
    %141 = vector.broadcast %140 : vector<1x128xf32> to vector<16x128xf32>
    %142 = arith.addf %139, %141 : vector<16x128xf32>
    %cst_66 = arith.constant 5.000000e-01 : f32
    %143 = vector.broadcast %cst_66 : f32 to vector<16x128xf32>
    %144 = arith.mulf %143, %142 : vector<16x128xf32>
    %145 = arith.mulf %142, %142 : vector<16x128xf32>
    %146 = arith.mulf %142, %145 : vector<16x128xf32>
    %cst_67 = arith.constant 4.471500e-02 : f32
    %147 = vector.broadcast %cst_67 : f32 to vector<16x128xf32>
    %148 = arith.mulf %147, %146 : vector<16x128xf32>
    %149 = arith.addf %142, %148 : vector<16x128xf32>
    %cst_68 = arith.constant 0.797884583 : f32
    %150 = vector.broadcast %cst_68 : f32 to vector<16x128xf32>
    %151 = arith.mulf %150, %149 : vector<16x128xf32>
    %152 = math.tanh %151 : vector<16x128xf32>
    %cst_69 = arith.constant 1.000000e+00 : f32
    %153 = vector.broadcast %cst_69 : f32 to vector<16x128xf32>
    %154 = arith.addf %153, %152 : vector<16x128xf32>
    %155 = arith.mulf %144, %154 : vector<16x128xf32>
    %156 = arith.truncf %155 : vector<16x128xf32> to vector<16x128xbf16>
    %c0_70 = arith.constant 0 : index
    %c0_71 = arith.constant 0 : index
    %c0_72 = arith.constant 0 : index
    %157 = vector.load %arg10[%c0_70, %c0_71, %c0_72] : memref<2x128x128xbf16, #tpu.memory_space<vmem>>, vector<1x128x128xbf16>
    %158 = vector.shape_cast %157 : vector<1x128x128xbf16> to vector<128x128xbf16>
    %cst_73 = arith.constant dense<0.000000e+00> : vector<16x128xf32>
    %159 = tpu.matmul %156, %158, %cst_73 {dimension_numbers = #tpu.dot_dimension_numbers<[1], [0], [0], [1], [0, 0, 1, 1], [], []>} : vector<16x128xbf16>, vector<128x128xbf16>, vector<16x128xf32> -> vector<16x128xf32>
    %160 = arith.addf %111, %159 : vector<16x128xf32>
    %161 = vector.extract_strided_slice %3 {offsets = [5, 0], sizes = [1, 128], strides = [1, 1]} : vector<16x128xf32> to vector<1x128xf32>
    %162 = vector.broadcast %161 : vector<1x128xf32> to vector<16x128xf32>
    %163 = arith.addf %160, %162 : vector<16x128xf32>
    %c1_74 = arith.constant 1 : index
    %c0_75 = arith.constant 0 : index
    %c0_76 = arith.constant 0 : index
    %164 = vector.load %arg4[%c1_74, %c0_75, %c0_76] : memref<2x16x128xf32, #tpu.memory_space<vmem>>, vector<1x16x128xf32>
    %165 = vector.shape_cast %164 : vector<1x16x128xf32> to vector<16x128xf32>
    %166 = vector.extract_strided_slice %165 {offsets = [0, 0], sizes = [1, 128], strides = [1, 1]} : vector<16x128xf32> to vector<1x128xf32>
    %167 = vector.extract_strided_slice %165 {offsets = [1, 0], sizes = [1, 128], strides = [1, 1]} : vector<16x128xf32> to vector<1x128xf32>
    %cst_77 = arith.constant dense<0.000000e+00> : vector<16xf32>
    %168 = vector.multi_reduction <add>, %163, %cst_77 [1] : vector<16x128xf32> to vector<16xf32>
    %169 = vector.shape_cast %168 : vector<16xf32> to vector<16x1xf32>
    %cst_78 = arith.constant 3.125000e-02 : f32
    %170 = vector.broadcast %cst_78 : f32 to vector<16x1xf32>
    %171 = arith.mulf %169, %170 : vector<16x1xf32>
    %172 = arith.mulf %163, %163 : vector<16x128xf32>
    %cst_79 = arith.constant dense<0.000000e+00> : vector<16xf32>
    %173 = vector.multi_reduction <add>, %172, %cst_79 [1] : vector<16x128xf32> to vector<16xf32>
    %174 = vector.shape_cast %173 : vector<16xf32> to vector<16x1xf32>
    %cst_80 = arith.constant 3.125000e-02 : f32
    %175 = vector.broadcast %cst_80 : f32 to vector<16x1xf32>
    %176 = arith.mulf %174, %175 : vector<16x1xf32>
    %177 = arith.mulf %171, %171 : vector<16x1xf32>
    %178 = arith.subf %176, %177 : vector<16x1xf32>
    %179 = vector.broadcast %171 : vector<16x1xf32> to vector<16x128xf32>
    %180 = arith.subf %163, %179 : vector<16x128xf32>
    %cst_81 = arith.constant 9.99999974E-6 : f32
    %181 = vector.broadcast %cst_81 : f32 to vector<16x1xf32>
    %182 = arith.addf %178, %181 : vector<16x1xf32>
    %183 = math.rsqrt %182 : vector<16x1xf32>
    %184 = vector.broadcast %183 : vector<16x1xf32> to vector<16x128xf32>
    %185 = arith.mulf %180, %184 : vector<16x128xf32>
    %186 = vector.broadcast %166 : vector<1x128xf32> to vector<16x128xf32>
    %187 = arith.mulf %185, %186 : vector<16x128xf32>
    %188 = vector.broadcast %167 : vector<1x128xf32> to vector<16x128xf32>
    %189 = arith.addf %187, %188 : vector<16x128xf32>
    %190 = arith.truncf %189 : vector<16x128xf32> to vector<16x128xbf16>
    %c1_82 = arith.constant 1 : index
    %c0_83 = arith.constant 0 : index
    %c0_84 = arith.constant 0 : index
    %c0_85 = arith.constant 0 : index
    %191 = vector.load %arg5[%c1_82, %c0_83, %c0_84, %c0_85] : memref<2x2x128x128xbf16, #tpu.memory_space<vmem>>, vector<1x1x128x128xbf16>
    %192 = vector.shape_cast %191 : vector<1x1x128x128xbf16> to vector<128x128xbf16>
    %cst_86 = arith.constant dense<0.000000e+00> : vector<16x128xf32>
    %193 = tpu.matmul %190, %192, %cst_86 {dimension_numbers = #tpu.dot_dimension_numbers<[1], [0], [0], [1], [0, 0, 1, 1], [], []>} : vector<16x128xbf16>, vector<128x128xbf16>, vector<16x128xf32> -> vector<16x128xf32>
    %194 = vector.extract_strided_slice %165 {offsets = [8, 0], sizes = [1, 128], strides = [1, 1]} : vector<16x128xf32> to vector<1x128xf32>
    %195 = vector.broadcast %194 : vector<1x128xf32> to vector<16x128xf32>
    %196 = arith.addf %193, %195 : vector<16x128xf32>
    %c1_87 = arith.constant 1 : index
    %c0_88 = arith.constant 0 : index
    %c0_89 = arith.constant 0 : index
    %c0_90 = arith.constant 0 : index
    %197 = vector.load %arg6[%c1_87, %c0_88, %c0_89, %c0_90] : memref<2x2x128x128xbf16, #tpu.memory_space<vmem>>, vector<1x1x128x128xbf16>
    %198 = vector.shape_cast %197 : vector<1x1x128x128xbf16> to vector<128x128xbf16>
    %cst_91 = arith.constant dense<0.000000e+00> : vector<16x128xf32>
    %199 = tpu.matmul %190, %198, %cst_91 {dimension_numbers = #tpu.dot_dimension_numbers<[1], [0], [0], [1], [0, 0, 1, 1], [], []>} : vector<16x128xbf16>, vector<128x128xbf16>, vector<16x128xf32> -> vector<16x128xf32>
    %200 = vector.extract_strided_slice %165 {offsets = [10, 0], sizes = [1, 128], strides = [1, 1]} : vector<16x128xf32> to vector<1x128xf32>
    %201 = vector.broadcast %200 : vector<1x128xf32> to vector<16x128xf32>
    %202 = arith.addf %199, %201 : vector<16x128xf32>
    %c1_92 = arith.constant 1 : index
    %c0_93 = arith.constant 0 : index
    %c0_94 = arith.constant 0 : index
    %c0_95 = arith.constant 0 : index
    %203 = vector.load %arg7[%c1_92, %c0_93, %c0_94, %c0_95] : memref<2x2x128x128xbf16, #tpu.memory_space<vmem>>, vector<1x1x128x128xbf16>
    %204 = vector.shape_cast %203 : vector<1x1x128x128xbf16> to vector<128x128xbf16>
    %cst_96 = arith.constant dense<0.000000e+00> : vector<16x128xf32>
    %205 = tpu.matmul %190, %204, %cst_96 {dimension_numbers = #tpu.dot_dimension_numbers<[1], [0], [0], [1], [0, 0, 1, 1], [], []>} : vector<16x128xbf16>, vector<128x128xbf16>, vector<16x128xf32> -> vector<16x128xf32>
    %206 = vector.extract_strided_slice %165 {offsets = [12, 0], sizes = [1, 128], strides = [1, 1]} : vector<16x128xf32> to vector<1x128xf32>
    %207 = vector.broadcast %206 : vector<1x128xf32> to vector<16x128xf32>
    %208 = arith.addf %205, %207 : vector<16x128xf32>
    %209 = arith.truncf %196 : vector<16x128xf32> to vector<16x128xbf16>
    %210 = arith.truncf %202 : vector<16x128xf32> to vector<16x128xbf16>
    %cst_97 = arith.constant dense<0.000000e+00> : vector<16x16xf32>
    %211 = tpu.matmul %209, %210, %cst_97 {dimension_numbers = #tpu.dot_dimension_numbers<[1], [1], [0], [0], [0, 0, 1, 0], [], []>} : vector<16x128xbf16>, vector<16x128xbf16>, vector<16x16xf32> -> vector<16x16xf32>
    %212 = arith.addf %211, %1 : vector<16x16xf32>
    %cst_98 = arith.constant dense<0xFF800000> : vector<16xf32>
    %213 = vector.multi_reduction <maximumf>, %212, %cst_98 [1] : vector<16x16xf32> to vector<16xf32>
    %214 = vector.shape_cast %213 : vector<16xf32> to vector<16x1xf32>
    %215 = vector.broadcast %214 : vector<16x1xf32> to vector<16x16xf32>
    %216 = arith.subf %212, %215 : vector<16x16xf32>
    %217 = math.exp %216 : vector<16x16xf32>
    %cst_99 = arith.constant dense<0.000000e+00> : vector<16xf32>
    %218 = vector.multi_reduction <add>, %217, %cst_99 [1] : vector<16x16xf32> to vector<16xf32>
    %219 = vector.shape_cast %218 : vector<16xf32> to vector<16x1xf32>
    %220 = tpu.reciprocal %219 {approx = true} : vector<16x1xf32> -> vector<16x1xf32>
    %221 = vector.broadcast %220 : vector<16x1xf32> to vector<16x16xf32>
    %222 = arith.mulf %217, %221 : vector<16x16xf32>
    %223 = arith.truncf %222 : vector<16x16xf32> to vector<16x16xbf16>
    %224 = arith.truncf %208 : vector<16x128xf32> to vector<16x128xbf16>
    %cst_100 = arith.constant dense<0.000000e+00> : vector<16x128xf32>
    %225 = tpu.matmul %223, %224, %cst_100 {dimension_numbers = #tpu.dot_dimension_numbers<[1], [0], [0], [1], [0, 0, 1, 1], [], []>} : vector<16x16xbf16>, vector<16x128xbf16>, vector<16x128xf32> -> vector<16x128xf32>
    %226 = arith.truncf %225 : vector<16x128xf32> to vector<16x128xbf16>
    %c1_101 = arith.constant 1 : index
    %c0_102 = arith.constant 0 : index
    %c0_103 = arith.constant 0 : index
    %c0_104 = arith.constant 0 : index
    %227 = vector.load %arg8[%c1_101, %c0_102, %c0_103, %c0_104] : memref<2x2x128x128xbf16, #tpu.memory_space<vmem>>, vector<1x1x128x128xbf16>
    %228 = vector.shape_cast %227 : vector<1x1x128x128xbf16> to vector<128x128xbf16>
    %cst_105 = arith.constant dense<0.000000e+00> : vector<16x128xf32>
    %229 = tpu.matmul %226, %228, %cst_105 {dimension_numbers = #tpu.dot_dimension_numbers<[1], [0], [0], [1], [0, 0, 1, 1], [], []>} : vector<16x128xbf16>, vector<128x128xbf16>, vector<16x128xf32> -> vector<16x128xf32>
    %c1_106 = arith.constant 1 : index
    %c1_107 = arith.constant 1 : index
    %c0_108 = arith.constant 0 : index
    %c0_109 = arith.constant 0 : index
    %230 = vector.load %arg5[%c1_106, %c1_107, %c0_108, %c0_109] : memref<2x2x128x128xbf16, #tpu.memory_space<vmem>>, vector<1x1x128x128xbf16>
    %231 = vector.shape_cast %230 : vector<1x1x128x128xbf16> to vector<128x128xbf16>
    %cst_110 = arith.constant dense<0.000000e+00> : vector<16x128xf32>
    %232 = tpu.matmul %190, %231, %cst_110 {dimension_numbers = #tpu.dot_dimension_numbers<[1], [0], [0], [1], [0, 0, 1, 1], [], []>} : vector<16x128xbf16>, vector<128x128xbf16>, vector<16x128xf32> -> vector<16x128xf32>
    %233 = vector.extract_strided_slice %165 {offsets = [9, 0], sizes = [1, 128], strides = [1, 1]} : vector<16x128xf32> to vector<1x128xf32>
    %234 = vector.broadcast %233 : vector<1x128xf32> to vector<16x128xf32>
    %235 = arith.addf %232, %234 : vector<16x128xf32>
    %c1_111 = arith.constant 1 : index
    %c1_112 = arith.constant 1 : index
    %c0_113 = arith.constant 0 : index
    %c0_114 = arith.constant 0 : index
    %236 = vector.load %arg6[%c1_111, %c1_112, %c0_113, %c0_114] : memref<2x2x128x128xbf16, #tpu.memory_space<vmem>>, vector<1x1x128x128xbf16>
    %237 = vector.shape_cast %236 : vector<1x1x128x128xbf16> to vector<128x128xbf16>
    %cst_115 = arith.constant dense<0.000000e+00> : vector<16x128xf32>
    %238 = tpu.matmul %190, %237, %cst_115 {dimension_numbers = #tpu.dot_dimension_numbers<[1], [0], [0], [1], [0, 0, 1, 1], [], []>} : vector<16x128xbf16>, vector<128x128xbf16>, vector<16x128xf32> -> vector<16x128xf32>
    %239 = vector.extract_strided_slice %165 {offsets = [11, 0], sizes = [1, 128], strides = [1, 1]} : vector<16x128xf32> to vector<1x128xf32>
    %240 = vector.broadcast %239 : vector<1x128xf32> to vector<16x128xf32>
    %241 = arith.addf %238, %240 : vector<16x128xf32>
    %c1_116 = arith.constant 1 : index
    %c1_117 = arith.constant 1 : index
    %c0_118 = arith.constant 0 : index
    %c0_119 = arith.constant 0 : index
    %242 = vector.load %arg7[%c1_116, %c1_117, %c0_118, %c0_119] : memref<2x2x128x128xbf16, #tpu.memory_space<vmem>>, vector<1x1x128x128xbf16>
    %243 = vector.shape_cast %242 : vector<1x1x128x128xbf16> to vector<128x128xbf16>
    %cst_120 = arith.constant dense<0.000000e+00> : vector<16x128xf32>
    %244 = tpu.matmul %190, %243, %cst_120 {dimension_numbers = #tpu.dot_dimension_numbers<[1], [0], [0], [1], [0, 0, 1, 1], [], []>} : vector<16x128xbf16>, vector<128x128xbf16>, vector<16x128xf32> -> vector<16x128xf32>
    %245 = vector.extract_strided_slice %165 {offsets = [13, 0], sizes = [1, 128], strides = [1, 1]} : vector<16x128xf32> to vector<1x128xf32>
    %246 = vector.broadcast %245 : vector<1x128xf32> to vector<16x128xf32>
    %247 = arith.addf %244, %246 : vector<16x128xf32>
    %248 = arith.truncf %235 : vector<16x128xf32> to vector<16x128xbf16>
    %249 = arith.truncf %241 : vector<16x128xf32> to vector<16x128xbf16>
    %cst_121 = arith.constant dense<0.000000e+00> : vector<16x16xf32>
    %250 = tpu.matmul %248, %249, %cst_121 {dimension_numbers = #tpu.dot_dimension_numbers<[1], [1], [0], [0], [0, 0, 1, 0], [], []>} : vector<16x128xbf16>, vector<16x128xbf16>, vector<16x16xf32> -> vector<16x16xf32>
    %251 = arith.addf %250, %1 : vector<16x16xf32>
    %cst_122 = arith.constant dense<0xFF800000> : vector<16xf32>
    %252 = vector.multi_reduction <maximumf>, %251, %cst_122 [1] : vector<16x16xf32> to vector<16xf32>
    %253 = vector.shape_cast %252 : vector<16xf32> to vector<16x1xf32>
    %254 = vector.broadcast %253 : vector<16x1xf32> to vector<16x16xf32>
    %255 = arith.subf %251, %254 : vector<16x16xf32>
    %256 = math.exp %255 : vector<16x16xf32>
    %cst_123 = arith.constant dense<0.000000e+00> : vector<16xf32>
    %257 = vector.multi_reduction <add>, %256, %cst_123 [1] : vector<16x16xf32> to vector<16xf32>
    %258 = vector.shape_cast %257 : vector<16xf32> to vector<16x1xf32>
    %259 = tpu.reciprocal %258 {approx = true} : vector<16x1xf32> -> vector<16x1xf32>
    %260 = vector.broadcast %259 : vector<16x1xf32> to vector<16x16xf32>
    %261 = arith.mulf %256, %260 : vector<16x16xf32>
    %262 = arith.truncf %261 : vector<16x16xf32> to vector<16x16xbf16>
    %263 = arith.truncf %247 : vector<16x128xf32> to vector<16x128xbf16>
    %cst_124 = arith.constant dense<0.000000e+00> : vector<16x128xf32>
    %264 = tpu.matmul %262, %263, %cst_124 {dimension_numbers = #tpu.dot_dimension_numbers<[1], [0], [0], [1], [0, 0, 1, 1], [], []>} : vector<16x16xbf16>, vector<16x128xbf16>, vector<16x128xf32> -> vector<16x128xf32>
    %265 = arith.truncf %264 : vector<16x128xf32> to vector<16x128xbf16>
    %c1_125 = arith.constant 1 : index
    %c1_126 = arith.constant 1 : index
    %c0_127 = arith.constant 0 : index
    %c0_128 = arith.constant 0 : index
    %266 = vector.load %arg8[%c1_125, %c1_126, %c0_127, %c0_128] : memref<2x2x128x128xbf16, #tpu.memory_space<vmem>>, vector<1x1x128x128xbf16>
    %267 = vector.shape_cast %266 : vector<1x1x128x128xbf16> to vector<128x128xbf16>
    %cst_129 = arith.constant dense<0.000000e+00> : vector<16x128xf32>
    %268 = tpu.matmul %265, %267, %cst_129 {dimension_numbers = #tpu.dot_dimension_numbers<[1], [0], [0], [1], [0, 0, 1, 1], [], []>} : vector<16x128xbf16>, vector<128x128xbf16>, vector<16x128xf32> -> vector<16x128xf32>
    %269 = arith.addf %229, %268 : vector<16x128xf32>
    %270 = arith.addf %163, %269 : vector<16x128xf32>
    %271 = vector.extract_strided_slice %165 {offsets = [4, 0], sizes = [1, 128], strides = [1, 1]} : vector<16x128xf32> to vector<1x128xf32>
    %272 = vector.broadcast %271 : vector<1x128xf32> to vector<16x128xf32>
    %273 = arith.addf %270, %272 : vector<16x128xf32>
    %274 = vector.extract_strided_slice %165 {offsets = [2, 0], sizes = [1, 128], strides = [1, 1]} : vector<16x128xf32> to vector<1x128xf32>
    %275 = vector.extract_strided_slice %165 {offsets = [3, 0], sizes = [1, 128], strides = [1, 1]} : vector<16x128xf32> to vector<1x128xf32>
    %cst_130 = arith.constant dense<0.000000e+00> : vector<16xf32>
    %276 = vector.multi_reduction <add>, %273, %cst_130 [1] : vector<16x128xf32> to vector<16xf32>
    %277 = vector.shape_cast %276 : vector<16xf32> to vector<16x1xf32>
    %cst_131 = arith.constant 3.125000e-02 : f32
    %278 = vector.broadcast %cst_131 : f32 to vector<16x1xf32>
    %279 = arith.mulf %277, %278 : vector<16x1xf32>
    %280 = arith.mulf %273, %273 : vector<16x128xf32>
    %cst_132 = arith.constant dense<0.000000e+00> : vector<16xf32>
    %281 = vector.multi_reduction <add>, %280, %cst_132 [1] : vector<16x128xf32> to vector<16xf32>
    %282 = vector.shape_cast %281 : vector<16xf32> to vector<16x1xf32>
    %cst_133 = arith.constant 3.125000e-02 : f32
    %283 = vector.broadcast %cst_133 : f32 to vector<16x1xf32>
    %284 = arith.mulf %282, %283 : vector<16x1xf32>
    %285 = arith.mulf %279, %279 : vector<16x1xf32>
    %286 = arith.subf %284, %285 : vector<16x1xf32>
    %287 = vector.broadcast %279 : vector<16x1xf32> to vector<16x128xf32>
    %288 = arith.subf %273, %287 : vector<16x128xf32>
    %cst_134 = arith.constant 9.99999974E-6 : f32
    %289 = vector.broadcast %cst_134 : f32 to vector<16x1xf32>
    %290 = arith.addf %286, %289 : vector<16x1xf32>
    %291 = math.rsqrt %290 : vector<16x1xf32>
    %292 = vector.broadcast %291 : vector<16x1xf32> to vector<16x128xf32>
    %293 = arith.mulf %288, %292 : vector<16x128xf32>
    %294 = vector.broadcast %274 : vector<1x128xf32> to vector<16x128xf32>
    %295 = arith.mulf %293, %294 : vector<16x128xf32>
    %296 = vector.broadcast %275 : vector<1x128xf32> to vector<16x128xf32>
    %297 = arith.addf %295, %296 : vector<16x128xf32>
    %298 = arith.truncf %297 : vector<16x128xf32> to vector<16x128xbf16>
    %c1_135 = arith.constant 1 : index
    %c0_136 = arith.constant 0 : index
    %c0_137 = arith.constant 0 : index
    %299 = vector.load %arg9[%c1_135, %c0_136, %c0_137] : memref<2x128x128xbf16, #tpu.memory_space<vmem>>, vector<1x128x128xbf16>
    %300 = vector.shape_cast %299 : vector<1x128x128xbf16> to vector<128x128xbf16>
    %cst_138 = arith.constant dense<0.000000e+00> : vector<16x128xf32>
    %301 = tpu.matmul %298, %300, %cst_138 {dimension_numbers = #tpu.dot_dimension_numbers<[1], [0], [0], [1], [0, 0, 1, 1], [], []>} : vector<16x128xbf16>, vector<128x128xbf16>, vector<16x128xf32> -> vector<16x128xf32>
    %302 = vector.extract_strided_slice %165 {offsets = [6, 0], sizes = [1, 128], strides = [1, 1]} : vector<16x128xf32> to vector<1x128xf32>
    %303 = vector.broadcast %302 : vector<1x128xf32> to vector<16x128xf32>
    %304 = arith.addf %301, %303 : vector<16x128xf32>
    %cst_139 = arith.constant 5.000000e-01 : f32
    %305 = vector.broadcast %cst_139 : f32 to vector<16x128xf32>
    %306 = arith.mulf %305, %304 : vector<16x128xf32>
    %307 = arith.mulf %304, %304 : vector<16x128xf32>
    %308 = arith.mulf %304, %307 : vector<16x128xf32>
    %cst_140 = arith.constant 4.471500e-02 : f32
    %309 = vector.broadcast %cst_140 : f32 to vector<16x128xf32>
    %310 = arith.mulf %309, %308 : vector<16x128xf32>
    %311 = arith.addf %304, %310 : vector<16x128xf32>
    %cst_141 = arith.constant 0.797884583 : f32
    %312 = vector.broadcast %cst_141 : f32 to vector<16x128xf32>
    %313 = arith.mulf %312, %311 : vector<16x128xf32>
    %314 = math.tanh %313 : vector<16x128xf32>
    %cst_142 = arith.constant 1.000000e+00 : f32
    %315 = vector.broadcast %cst_142 : f32 to vector<16x128xf32>
    %316 = arith.addf %315, %314 : vector<16x128xf32>
    %317 = arith.mulf %306, %316 : vector<16x128xf32>
    %318 = arith.truncf %317 : vector<16x128xf32> to vector<16x128xbf16>
    %c1_143 = arith.constant 1 : index
    %c0_144 = arith.constant 0 : index
    %c0_145 = arith.constant 0 : index
    %319 = vector.load %arg10[%c1_143, %c0_144, %c0_145] : memref<2x128x128xbf16, #tpu.memory_space<vmem>>, vector<1x128x128xbf16>
    %320 = vector.shape_cast %319 : vector<1x128x128xbf16> to vector<128x128xbf16>
    %cst_146 = arith.constant dense<0.000000e+00> : vector<16x128xf32>
    %321 = tpu.matmul %318, %320, %cst_146 {dimension_numbers = #tpu.dot_dimension_numbers<[1], [0], [0], [1], [0, 0, 1, 1], [], []>} : vector<16x128xbf16>, vector<128x128xbf16>, vector<16x128xf32> -> vector<16x128xf32>
    %322 = arith.addf %273, %321 : vector<16x128xf32>
    %323 = vector.extract_strided_slice %165 {offsets = [5, 0], sizes = [1, 128], strides = [1, 1]} : vector<16x128xf32> to vector<1x128xf32>
    %324 = vector.broadcast %323 : vector<1x128xf32> to vector<16x128xf32>
    %325 = arith.addf %322, %324 : vector<16x128xf32>
    %c0_147 = arith.constant 0 : index
    %c0_148 = arith.constant 0 : index
    %326 = vector.load %arg3[%c0_147, %c0_148] : memref<8x16xf32, #tpu.memory_space<vmem>>, vector<8x16xf32>
    %cst_149 = arith.constant dense<0.000000e+00> : vector<8x128xf32>
    %327 = tpu.matmul %326, %325, %cst_149 {dimension_numbers = #tpu.dot_dimension_numbers<[1], [0], [0], [1], [0, 0, 1, 1], [], []>} : vector<8x16xf32>, vector<16x128xf32>, vector<8x128xf32> -> vector<8x128xf32>
    %c0_150 = arith.constant 0 : index
    %c0_151 = arith.constant 0 : index
    %328 = vector.load %arg11[%c0_150, %c0_151] : memref<2x128xf32, #tpu.memory_space<vmem>>, vector<2x128xf32>
    %329 = vector.extract_strided_slice %328 {offsets = [0, 0], sizes = [1, 128], strides = [1, 1]} : vector<2x128xf32> to vector<1x128xf32>
    %330 = vector.extract_strided_slice %328 {offsets = [1, 0], sizes = [1, 128], strides = [1, 1]} : vector<2x128xf32> to vector<1x128xf32>
    %cst_152 = arith.constant dense<0.000000e+00> : vector<8xf32>
    %331 = vector.multi_reduction <add>, %327, %cst_152 [1] : vector<8x128xf32> to vector<8xf32>
    %332 = vector.shape_cast %331 : vector<8xf32> to vector<8x1xf32>
    %cst_153 = arith.constant 3.125000e-02 : f32
    %333 = vector.broadcast %cst_153 : f32 to vector<8x1xf32>
    %334 = arith.mulf %332, %333 : vector<8x1xf32>
    %335 = arith.mulf %327, %327 : vector<8x128xf32>
    %cst_154 = arith.constant dense<0.000000e+00> : vector<8xf32>
    %336 = vector.multi_reduction <add>, %335, %cst_154 [1] : vector<8x128xf32> to vector<8xf32>
    %337 = vector.shape_cast %336 : vector<8xf32> to vector<8x1xf32>
    %cst_155 = arith.constant 3.125000e-02 : f32
    %338 = vector.broadcast %cst_155 : f32 to vector<8x1xf32>
    %339 = arith.mulf %337, %338 : vector<8x1xf32>
    %340 = arith.mulf %334, %334 : vector<8x1xf32>
    %341 = arith.subf %339, %340 : vector<8x1xf32>
    %342 = vector.broadcast %334 : vector<8x1xf32> to vector<8x128xf32>
    %343 = arith.subf %327, %342 : vector<8x128xf32>
    %cst_156 = arith.constant 9.99999974E-6 : f32
    %344 = vector.broadcast %cst_156 : f32 to vector<8x1xf32>
    %345 = arith.addf %341, %344 : vector<8x1xf32>
    %346 = math.rsqrt %345 : vector<8x1xf32>
    %347 = vector.broadcast %346 : vector<8x1xf32> to vector<8x128xf32>
    %348 = arith.mulf %343, %347 : vector<8x128xf32>
    %349 = vector.broadcast %329 : vector<1x128xf32> to vector<8x128xf32>
    %350 = arith.mulf %348, %349 : vector<8x128xf32>
    %351 = vector.broadcast %330 : vector<1x128xf32> to vector<8x128xf32>
    %352 = arith.addf %350, %351 : vector<8x128xf32>
    %353 = arith.truncf %352 : vector<8x128xf32> to vector<8x128xbf16>
    %c0_157 = arith.constant 0 : index
    %c0_158 = arith.constant 0 : index
    %354 = vector.load %arg12[%c0_157, %c0_158] : memref<128x128xbf16, #tpu.memory_space<vmem>>, vector<128x128xbf16>
    %cst_159 = arith.constant dense<0.000000e+00> : vector<8x128xf32>
    %355 = tpu.matmul %353, %354, %cst_159 {dimension_numbers = #tpu.dot_dimension_numbers<[1], [0], [0], [1], [0, 0, 1, 1], [], []>} : vector<8x128xbf16>, vector<128x128xbf16>, vector<8x128xf32> -> vector<8x128xf32>
    %c0_160 = arith.constant 0 : index
    %c0_161 = arith.constant 0 : index
    %356 = vector.load %arg13[%c0_160, %c0_161] : memref<1x128xf32, #tpu.memory_space<vmem>>, vector<1x128xf32>
    %357 = vector.broadcast %356 : vector<1x128xf32> to vector<8x128xf32>
    %358 = arith.addf %355, %357 : vector<8x128xf32>
    %c0_162 = arith.constant 0 : index
    %c0_163 = arith.constant 0 : index
    %359 = vector.load %arg14[%c0_162, %c0_163] : memref<8x128xf32, #tpu.memory_space<vmem>>, vector<8x128xf32>
    tpu.vector_store %arg14[%c0_162, %c0_163], %358 {strides = array<i32>} : memref<8x128xf32, #tpu.memory_space<vmem>>, vector<8x128xf32>,
    return
  }
  func.func @transform_0(%arg0: i32) -> (i32, i32) {
    %c0_i32 = arith.constant 0 : i32
    %c0_i32_0 = arith.constant 0 : i32
    %c0_i32_1 = arith.constant 0 : i32
    return %c0_i32, %c0_i32_0 : i32, i32
  }
  func.func @transform_1(%arg0: i32) -> (i32, i32) {
    %c0_i32 = arith.constant 0 : i32
    %c0_i32_0 = arith.constant 0 : i32
    %c0_i32_1 = arith.constant 0 : i32
    return %c0_i32, %c0_i32_0 : i32, i32
  }
  func.func @transform_2(%arg0: i32) -> (i32, i32) {
    %c0_i32 = arith.constant 0 : i32
    %c0_i32_0 = arith.constant 0 : i32
    %c0_i32_1 = arith.constant 0 : i32
    return %c0_i32, %c0_i32_0 : i32, i32
  }
  func.func @transform_3(%arg0: i32) -> (i32, i32, i32) {
    %c0_i32 = arith.constant 0 : i32
    %c0_i32_0 = arith.constant 0 : i32
    %c0_i32_1 = arith.constant 0 : i32
    %c0_i32_2 = arith.constant 0 : i32
    return %c0_i32, %c0_i32_0, %c0_i32_1 : i32, i32, i32
  }
  func.func @transform_4(%arg0: i32) -> (i32, i32, i32, i32) {
    %c0_i32 = arith.constant 0 : i32
    %c0_i32_0 = arith.constant 0 : i32
    %c0_i32_1 = arith.constant 0 : i32
    %c0_i32_2 = arith.constant 0 : i32
    %c0_i32_3 = arith.constant 0 : i32
    return %c0_i32, %c0_i32_0, %c0_i32_1, %c0_i32_2 : i32, i32, i32, i32
  }
  func.func @transform_5(%arg0: i32) -> (i32, i32, i32, i32) {
    %c0_i32 = arith.constant 0 : i32
    %c0_i32_0 = arith.constant 0 : i32
    %c0_i32_1 = arith.constant 0 : i32
    %c0_i32_2 = arith.constant 0 : i32
    %c0_i32_3 = arith.constant 0 : i32
    return %c0_i32, %c0_i32_0, %c0_i32_1, %c0_i32_2 : i32, i32, i32, i32
  }
  func.func @transform_6(%arg0: i32) -> (i32, i32, i32, i32) {
    %c0_i32 = arith.constant 0 : i32
    %c0_i32_0 = arith.constant 0 : i32
    %c0_i32_1 = arith.constant 0 : i32
    %c0_i32_2 = arith.constant 0 : i32
    %c0_i32_3 = arith.constant 0 : i32
    return %c0_i32, %c0_i32_0, %c0_i32_1, %c0_i32_2 : i32, i32, i32, i32
  }
  func.func @transform_7(%arg0: i32) -> (i32, i32, i32, i32) {
    %c0_i32 = arith.constant 0 : i32
    %c0_i32_0 = arith.constant 0 : i32
    %c0_i32_1 = arith.constant 0 : i32
    %c0_i32_2 = arith.constant 0 : i32
    %c0_i32_3 = arith.constant 0 : i32
    return %c0_i32, %c0_i32_0, %c0_i32_1, %c0_i32_2 : i32, i32, i32, i32
  }
  func.func @transform_8(%arg0: i32) -> (i32, i32, i32) {
    %c0_i32 = arith.constant 0 : i32
    %c0_i32_0 = arith.constant 0 : i32
    %c0_i32_1 = arith.constant 0 : i32
    %c0_i32_2 = arith.constant 0 : i32
    return %c0_i32, %c0_i32_0, %c0_i32_1 : i32, i32, i32
  }
  func.func @transform_9(%arg0: i32) -> (i32, i32, i32) {
    %c0_i32 = arith.constant 0 : i32
    %c0_i32_0 = arith.constant 0 : i32
    %c0_i32_1 = arith.constant 0 : i32
    %c0_i32_2 = arith.constant 0 : i32
    return %c0_i32, %c0_i32_0, %c0_i32_1 : i32, i32, i32
  }
  func.func @transform_10(%arg0: i32) -> (i32, i32) {
    %c0_i32 = arith.constant 0 : i32
    %c0_i32_0 = arith.constant 0 : i32
    %c0_i32_1 = arith.constant 0 : i32
    return %c0_i32, %c0_i32_0 : i32, i32
  }
  func.func @transform_11(%arg0: i32) -> (i32, i32) {
    %c0_i32 = arith.constant 0 : i32
    %c0_i32_0 = arith.constant 0 : i32
    %c0_i32_1 = arith.constant 0 : i32
    return %c0_i32, %c0_i32_0 : i32, i32
  }
  func.func @transform_12(%arg0: i32) -> (i32, i32) {
    %c0_i32 = arith.constant 0 : i32
    %c0_i32_0 = arith.constant 0 : i32
    %c0_i32_1 = arith.constant 0 : i32
    return %c0_i32, %c0_i32_0 : i32, i32
  }
  func.func @transform_13(%arg0: i32) -> (i32, i32) {
    %c0_i32 = arith.constant 0 : i32
    %c0_i32_0 = arith.constant 0 : i32
    %c0_i32_1 = arith.constant 0 : i32
    return %c0_i32, %c0_i32_0 : i32, i32
  }
}

</mosaic_0001>

<llo_original>
// kernel: tpu_custom_call.1
$region0: #{tpu_custom_call.1}
  #allocation0 [shape = 'u32[]', space=smem, size = 0x4, offset = 0x4, fixed_abs, tag = 'smem constant byte address 0x4 - core index']
  #allocation1 [shape = 'u32[72,128]{1,0:T(1,128)}', space=vmem, size = 0x9000, scoped, tag = 'internal scratch']
  %s0 = inlined_call_operand.hbm [shape: f32[16,128], index: 0, kind: input, shape index: {}]
  %s1 = inlined_call_operand.hbm [shape: f32[16,16], index: 1, kind: input, shape index: {}]
  %s2 = inlined_call_operand.hbm [shape: f32[8,16], index: 2, kind: input, shape index: {}]
  %s3 = inlined_call_operand.hbm [shape: f32[2,16,128], index: 3, kind: input, shape index: {}]
  %s4 = inlined_call_operand.hbm [shape: bf16[2,2,128,128], index: 4, kind: input, shape index: {}]
  %s5 = inlined_call_operand.hbm [shape: bf16[2,2,128,128], index: 5, kind: input, shape index: {}]
  %s6 = inlined_call_operand.hbm [shape: bf16[2,2,128,128], index: 6, kind: input, shape index: {}]
  %s7 = inlined_call_operand.hbm [shape: bf16[2,2,128,128], index: 7, kind: input, shape index: {}]
  %s8 = inlined_call_operand.hbm [shape: bf16[2,128,128], index: 8, kind: input, shape index: {}]
  %s9 = inlined_call_operand.hbm [shape: bf16[2,128,128], index: 9, kind: input, shape index: {}]
  %s10 = inlined_call_operand.vmem [shape: f32[2,128], index: 10, kind: input, shape index: {}]
  %s11 = inlined_call_operand.hbm [shape: bf16[128,128], index: 11, kind: input, shape index: {}]
  %s12 = inlined_call_operand.vmem [shape: f32[1,128], index: 12, kind: input, shape index: {}]
  %s13 = inlined_call_operand.hbm [shape: f32[8,128], index: 13, kind: output, shape index: {}]
  %s14 = sld [smem:[#allocation0]]
  $region106: #{tpu_custom_call.1} parent=0
    _
  %s16 = ssub.s32 1, %s14
  %s17 = scalar_select 0, %s16, %s14
  $region1: #{tpu_custom_call.1} parent=0
    #allocation2 [shape = 'u8[8192]{0}', space=vmem, size = 0x2000, scoped, tag = 'input window, operand 0, single buffered']
    #allocation3 [shape = 's32[1]{0}', space=sflag, size = 0x4, scoped, tag = 'scoped memory for tpu_custom_call.1']
    #allocation4 [shape = 's32[1]{0}', space=sflag, size = 0x4, scoped, tag = 'scoped memory for tpu_custom_call.1']
    #allocation5 [shape = 'u8[8192]{0}', space=vmem, size = 0x2000, scoped, tag = 'input window, operand 1, single buffered']
    #allocation6 [shape = 's32[1]{0}', space=sflag, size = 0x4, scoped, tag = 'scoped memory for tpu_custom_call.1']
    #allocation7 [shape = 'u8[4096]{0}', space=vmem, size = 0x1000, scoped, tag = 'input window, operand 2, single buffered']
    #allocation8 [shape = 'u8[16384]{0}', space=vmem, size = 0x4000, scoped, tag = 'input window, operand 3, single buffered']
    #allocation9 [shape = 's32[1]{0}', space=sflag, size = 0x4, scoped, tag = 'scoped memory for tpu_custom_call.1']
    #allocation10 [shape = 'u8[131072]{0}', space=vmem, size = 0x20000, scoped, tag = 'input window, operand 4, single buffered']
    #allocation11 [shape = 'u8[131072]{0}', space=vmem, size = 0x20000, scoped, tag = 'input window, operand 5, single buffered']
    #allocation12 [shape = 's32[1]{0}', space=sflag, size = 0x4, scoped, tag = 'scoped memory for tpu_custom_call.1']
    #allocation13 [shape = 'u8[131072]{0}', space=vmem, size = 0x20000, scoped, tag = 'input window, operand 6, single buffered']
    #allocation14 [shape = 'u8[131072]{0}', space=vmem, size = 0x20000, scoped, tag = 'input window, operand 7, single buffered']
    #allocation15 [shape = 's32[1]{0}', space=sflag, size = 0x4, scoped, tag = 'scoped memory for tpu_custom_call.1']
    #allocation16 [shape = 'u8[65536]{0}', space=vmem, size = 0x10000, scoped, tag = 'input window, operand 8, single buffered']
    #allocation17 [shape = 'u8[65536]{0}', space=vmem, size = 0x10000, scoped, tag = 'input window, operand 9, single buffered']
    #allocation18 [shape = 's32[1]{0}', space=sflag, size = 0x4, scoped, tag = 'scoped memory for tpu_custom_call.1']
    #allocation19 [shape = 'u8[32768]{0}', space=vmem, size = 0x8000, scoped, tag = 'input window, operand 11, single buffered']
    #allocation20 [shape = 'u8[4096]{0}', space=vmem, size = 0x1000, scoped, tag = 'output window, operand 0, single buffered']
    %18 = vsyncpa [#allocation3], 0
    %19 = vsyncpa [#allocation6], 0
    %20 = vsyncpa [#allocation9], 0
    %21 = vsyncpa [#allocation12], 0
    %22 = vsyncpa [#allocation15], 0
    %23 = vsyncpa [#allocation18], 0
    %24 = vsyncpa [#allocation4], 0
    // Predicated region
    $region2: #{tpu_custom_call.1} parent=1 // pred_check
      _
    $region3: #{tpu_custom_call.1} parent=1 // pred_check_branch
      %26 = sbr.rel (0) target = $region5
    $region4: #{tpu_custom_call.1} parent=1 // pred_region
      %28 = vsyncadd [#allocation3], 0
      %s29 = sshll.u32 %s0, 4
      %s30 = int_to_ptr.hbm [resolvable:$true] %s29
      %s31 = sshll.u32 [#allocation2], 4
      %s32 = int_to_ptr.vmem [resolvable:$true] %s31
      %37 = dma.hbm_to_vmem [thread:$0]  %s30, 256, %s32, [#allocation3], 128, 128, 8
    $region5: #{tpu_custom_call.1} parent=1 // pred_fallthru
      _
    // Predicated region
    $region6: #{tpu_custom_call.1} parent=1 // pred_check
      _
    $region7: #{tpu_custom_call.1} parent=1 // pred_check_branch
      %39 = sbr.rel (0) target = $region9
    $region8: #{tpu_custom_call.1} parent=1 // pred_region
      %41 = vsyncadd [#allocation6], 0
      %s42 = sshll.u32 %s1, 4
      %s43 = int_to_ptr.hbm [resolvable:$true] %s42
      %s44 = sshll.u32 [#allocation5], 4
      %s45 = int_to_ptr.vmem [resolvable:$true] %s44
      %50 = dma.hbm_to_vmem [thread:$0]  %s43, 256, %s45, [#allocation6], 128, 128, 8
    $region9: #{tpu_custom_call.1} parent=1 // pred_fallthru
      _
    // Predicated region
    $region10: #{tpu_custom_call.1} parent=1 // pred_check
      _
    $region11: #{tpu_custom_call.1} parent=1 // pred_check_branch
      %52 = sbr.rel (0) target = $region13
    $region12: #{tpu_custom_call.1} parent=1 // pred_region
      %54 = vsyncadd [#allocation6], 0
      %s56 = sshll.u32 %s2, 4
      %s57 = int_to_ptr.hbm [resolvable:$true] %s56
      %s58 = sshll.u32 [#allocation7], 4
      %s59 = int_to_ptr.vmem [resolvable:$true] %s58
      %61 = dma.hbm_to_vmem [thread:$0]  %s57, 128, %s59, [#allocation6]
    $region13: #{tpu_custom_call.1} parent=1 // pred_fallthru
      _
    // Predicated region
    $region14: #{tpu_custom_call.1} parent=1 // pred_check
      _
    $region15: #{tpu_custom_call.1} parent=1 // pred_check_branch
      %63 = sbr.rel (0) target = $region17
    $region16: #{tpu_custom_call.1} parent=1 // pred_region
      %65 = vsyncadd [#allocation9], 0
      %s66 = sshll.u32 %s3, 4
      %s67 = int_to_ptr.hbm [resolvable:$true] %s66
      %s68 = sshll.u32 [#allocation8], 4
      %s69 = int_to_ptr.vmem [resolvable:$true] %s68
      %74 = dma.hbm_to_vmem [thread:$0]  %s67, 512, %s69, [#allocation9], 128, 128, 8
    $region17: #{tpu_custom_call.1} parent=1 // pred_fallthru
      _
    // Predicated region
    $region18: #{tpu_custom_call.1} parent=1 // pred_check
      _
    $region19: #{tpu_custom_call.1} parent=1 // pred_check_branch
      %76 = sbr.rel (0) target = $region21
    $region20: #{tpu_custom_call.1} parent=1 // pred_region
      %78 = vsyncadd [#allocation9], 0
      %s79 = sshll.u32 %s4, 4
      %s80 = int_to_ptr.hbm [resolvable:$true] %s79
      %s81 = sshll.u32 [#allocation10], 4
      %s82 = int_to_ptr.vmem [resolvable:$true] %s81
      %87 = dma.hbm_to_vmem [thread:$0]  %s80, 4096, %s82, [#allocation9], 64, 64, 4
    $region21: #{tpu_custom_call.1} parent=1 // pred_fallthru
      _
    // Predicated region
    $region22: #{tpu_custom_call.1} parent=1 // pred_check
      _
    $region23: #{tpu_custom_call.1} parent=1 // pred_check_branch
      %89 = sbr.rel (0) target = $region25
    $region24: #{tpu_custom_call.1} parent=1 // pred_region
      %91 = vsyncadd [#allocation12], 0
      %s92 = sshll.u32 %s5, 4
      %s93 = int_to_ptr.hbm [resolvable:$true] %s92
      %s94 = sshll.u32 [#allocation11], 4
      %s95 = int_to_ptr.vmem [resolvable:$true] %s94
      %100 = dma.hbm_to_vmem [thread:$0]  %s93, 4096, %s95, [#allocation12], 64, 64, 4
    $region25: #{tpu_custom_call.1} parent=1 // pred_fallthru
      _
    // Predicated region
    $region26: #{tpu_custom_call.1} parent=1 // pred_check
      _
    $region27: #{tpu_custom_call.1} parent=1 // pred_check_branch
      %102 = sbr.rel (0) target = $region29
    $region28: #{tpu_custom_call.1} parent=1 // pred_region
      %104 = vsyncadd [#allocation12], 0
      %s105 = sshll.u32 %s6, 4
      %s106 = int_to_ptr.hbm [resolvable:$true] %s105
      %s107 = sshll.u32 [#allocation13], 4
      %s108 = int_to_ptr.vmem [resolvable:$true] %s107
      %113 = dma.hbm_to_vmem [thread:$0]  %s106, 4096, %s108, [#allocation12], 64, 64, 4
    $region29: #{tpu_custom_call.1} parent=1 // pred_fallthru
      _
    // Predicated region
    $region30: #{tpu_custom_call.1} parent=1 // pred_check
      _
    $region31: #{tpu_custom_call.1} parent=1 // pred_check_branch
      %115 = sbr.rel (0) target = $region33
    $region32: #{tpu_custom_call.1} parent=1 // pred_region
      %117 = vsyncadd [#allocation15], 0
      %s118 = sshll.u32 %s7, 4
      %s119 = int_to_ptr.hbm [resolvable:$true] %s118
      %s120 = sshll.u32 [#allocation14], 4
      %s121 = int_to_ptr.vmem [resolvable:$true] %s120
      %126 = dma.hbm_to_vmem [thread:$0]  %s119, 4096, %s121, [#allocation15], 64, 64, 4
    $region33: #{tpu_custom_call.1} parent=1 // pred_fallthru
      _
    // Predicated region
    $region34: #{tpu_custom_call.1} parent=1 // pred_check
      _
    $region35: #{tpu_custom_call.1} parent=1 // pred_check_branch
      %128 = sbr.rel (0) target = $region37
    $region36: #{tpu_custom_call.1} parent=1 // pred_region
      %130 = vsyncadd [#allocation15], 0
      %s131 = sshll.u32 %s8, 4
      %s132 = int_to_ptr.hbm [resolvable:$true] %s131
      %s133 = sshll.u32 [#allocation16], 4
      %s134 = int_to_ptr.vmem [resolvable:$true] %s133
      %139 = dma.hbm_to_vmem [thread:$0]  %s132, 2048, %s134, [#allocation15], 64, 64, 4
    $region37: #{tpu_custom_call.1} parent=1 // pred_fallthru
      _
    // Predicated region
    $region38: #{tpu_custom_call.1} parent=1 // pred_check
      _
    $region39: #{tpu_custom_call.1} parent=1 // pred_check_branch
      %141 = sbr.rel (0) target = $region41
    $region40: #{tpu_custom_call.1} parent=1 // pred_region
      %143 = vsyncadd [#allocation18], 0
      %s144 = sshll.u32 %s9, 4
      %s145 = int_to_ptr.hbm [resolvable:$true] %s144
      %s146 = sshll.u32 [#allocation17], 4
      %s147 = int_to_ptr.vmem [resolvable:$true] %s146
      %152 = dma.hbm_to_vmem [thread:$0]  %s145, 2048, %s147, [#allocation18], 64, 64, 4
    $region41: #{tpu_custom_call.1} parent=1 // pred_fallthru
      _
    // Predicated region
    $region42: #{tpu_custom_call.1} parent=1 // pred_check
      _
    $region43: #{tpu_custom_call.1} parent=1 // pred_check_branch
      %154 = sbr.rel (0) target = $region45
    $region44: #{tpu_custom_call.1} parent=1 // pred_region
      _
    $region45: #{tpu_custom_call.1} parent=1 // pred_fallthru
      _
    // Predicated region
    $region46: #{tpu_custom_call.1} parent=1 // pred_check
      _
    $region47: #{tpu_custom_call.1} parent=1 // pred_check_branch
      %156 = sbr.rel (0) target = $region49
    $region48: #{tpu_custom_call.1} parent=1 // pred_region
      %158 = vsyncadd [#allocation18], 0
      %s159 = sshll.u32 %s11, 4
      %s160 = int_to_ptr.hbm [resolvable:$true] %s159
      %s161 = sshll.u32 [#allocation19], 4
      %s162 = int_to_ptr.vmem [resolvable:$true] %s161
      %167 = dma.hbm_to_vmem [thread:$0]  %s160, 1024, %s162, [#allocation18], 64, 64, 4
    $region49: #{tpu_custom_call.1} parent=1 // pred_fallthru
      _
    // Predicated region
    $region50: #{tpu_custom_call.1} parent=1 // pred_check
      _
    $region51: #{tpu_custom_call.1} parent=1 // pred_check_branch
      %169 = sbr.rel (0) target = $region53
    $region52: #{tpu_custom_call.1} parent=1 // pred_region
      _
    $region53: #{tpu_custom_call.1} parent=1 // pred_fallthru
      _
    // Predicated region
    $region54: #{tpu_custom_call.1} parent=1 // pred_check
      _
    $region55: #{tpu_custom_call.1} parent=1 // pred_check_branch
      %171 = sbr.rel (0) target = $region57
    $region56: #{tpu_custom_call.1} parent=1 // pred_region
      %173 = dma.done [#allocation3], 256
    $region57: #{tpu_custom_call.1} parent=1 // pred_fallthru
      _
    // Predicated region
    $region58: #{tpu_custom_call.1} parent=1 // pred_check
      _
    $region59: #{tpu_custom_call.1} parent=1 // pred_check_branch
      %175 = sbr.rel (0) target = $region61
    $region60: #{tpu_custom_call.1} parent=1 // pred_region
      %177 = dma.done [#allocation6], 256
    $region61: #{tpu_custom_call.1} parent=1 // pred_fallthru
      _
    // Predicated region
    $region62: #{tpu_custom_call.1} parent=1 // pred_check
      _
    $region63: #{tpu_custom_call.1} parent=1 // pred_check_branch
      %179 = sbr.rel (0) target = $region65
    $region64: #{tpu_custom_call.1} parent=1 // pred_region
      %181 = dma.done [#allocation6], 128
    $region65: #{tpu_custom_call.1} parent=1 // pred_fallthru
      _
    // Predicated region
    $region66: #{tpu_custom_call.1} parent=1 // pred_check
      _
    $region67: #{tpu_custom_call.1} parent=1 // pred_check_branch
      %183 = sbr.rel (0) target = $region69
    $region68: #{tpu_custom_call.1} parent=1 // pred_region
      %185 = dma.done [#allocation9], 512
    $region69: #{tpu_custom_call.1} parent=1 // pred_fallthru
      _
    // Predicated region
    $region70: #{tpu_custom_call.1} parent=1 // pred_check
      _
    $region71: #{tpu_custom_call.1} parent=1 // pred_check_branch
      %187 = sbr.rel (0) target = $region73
    $region72: #{tpu_custom_call.1} parent=1 // pred_region
      %189 = dma.done [#allocation9], 4096
    $region73: #{tpu_custom_call.1} parent=1 // pred_fallthru
      _
    // Predicated region
    $region74: #{tpu_custom_call.1} parent=1 // pred_check
      _
    $region75: #{tpu_custom_call.1} parent=1 // pred_check_branch
      %191 = sbr.rel (0) target = $region77
    $region76: #{tpu_custom_call.1} parent=1 // pred_region
      %193 = dma.done [#allocation12], 4096
    $region77: #{tpu_custom_call.1} parent=1 // pred_fallthru
      _
    // Predicated region
    $region78: #{tpu_custom_call.1} parent=1 // pred_check
      _
    $region79: #{tpu_custom_call.1} parent=1 // pred_check_branch
      %195 = sbr.rel (0) target = $region81
    $region80: #{tpu_custom_call.1} parent=1 // pred_region
      %197 = dma.done [#allocation12], 4096
    $region81: #{tpu_custom_call.1} parent=1 // pred_fallthru
      _
    // Predicated region
    $region82: #{tpu_custom_call.1} parent=1 // pred_check
      _
    $region83: #{tpu_custom_call.1} parent=1 // pred_check_branch
      %199 = sbr.rel (0) target = $region85
    $region84: #{tpu_custom_call.1} parent=1 // pred_region
      %201 = dma.done [#allocation15], 4096
    $region85: #{tpu_custom_call.1} parent=1 // pred_fallthru
      _
    // Predicated region
    $region86: #{tpu_custom_call.1} parent=1 // pred_check
      _
    $region87: #{tpu_custom_call.1} parent=1 // pred_check_branch
      %203 = sbr.rel (0) target = $region89
    $region88: #{tpu_custom_call.1} parent=1 // pred_region
      %205 = dma.done [#allocation15], 2048
    $region89: #{tpu_custom_call.1} parent=1 // pred_fallthru
      _
    // Predicated region
    $region90: #{tpu_custom_call.1} parent=1 // pred_check
      _
    $region91: #{tpu_custom_call.1} parent=1 // pred_check_branch
      %207 = sbr.rel (0) target = $region93
    $region92: #{tpu_custom_call.1} parent=1 // pred_region
      %209 = dma.done [#allocation18], 2048
    $region93: #{tpu_custom_call.1} parent=1 // pred_fallthru
      _
    // Predicated region
    $region94: #{tpu_custom_call.1} parent=1 // pred_check
      _
    $region95: #{tpu_custom_call.1} parent=1 // pred_check_branch
      %211 = sbr.rel (0) target = $region97
    $region96: #{tpu_custom_call.1} parent=1 // pred_region
      %213 = dma.done [#allocation18], 1024
    $region97: #{tpu_custom_call.1} parent=1 // pred_fallthru
      _
    %v215 = vld [vmem:[#allocation2] sm:$0xff]
    %v216 = vld [vmem:[#allocation2 + $0x8] sm:$0xff]
    %v217 = vld [vmem:[#allocation5] sm:$0xff]
    %v218 = vld [vmem:[#allocation5 + $0x8] sm:$0xff]
    %v219 = vld [vmem:[#allocation8] sm:$0xff]
    %v220 = vld [vmem:[#allocation8 + $0x8] sm:$0xff]
    %221 = vadd.xlane.f32.xlu0 %v215
    %v222 = vpop.xlane.xlu0 %221
    %223 = vadd.xlane.f32.xlu0 %v216
    %v224 = vpop.xlane.xlu0 %223
    %v225 = vmul.f32 %v222, 0.03125
    %v226 = vmul.f32 %v224, 0.03125
    %v227 = vmul.f32 %v215, %v215
    %v228 = vmul.f32 %v216, %v216
    %229 = vadd.xlane.f32.xlu0 %v227
    %v230 = vpop.xlane.xlu0 %229
    %231 = vadd.xlane.f32.xlu0 %v228
    %v232 = vpop.xlane.xlu0 %231
    %v233 = vmul.f32 %v230, 0.03125
    %v234 = vmul.f32 %v232, 0.03125
    %v235 = vmul.f32 %v225, %v225
    %v236 = vmul.f32 %v226, %v226
    %v237 = vsub.f32 %v233, %v235
    %v238 = vsub.f32 %v234, %v236
    %v239 = vsub.f32 %v215, %v225
    %v240 = vsub.f32 %v216, %v226
    %v241 = vadd.f32 %v237, 1e-05
    %v242 = vadd.f32 %v238, 1e-05
    %v243 = vrsqrt.pop %v241
    %v244 = vmul.f32 %v243, %v241
    %v245 = vmul.f32 %v244, %v243
    %v246 = vmul.f32 0.5, %v245
    %v247 = vsub.f32 1.5, %v246
    %v248 = vmul.f32 %v243, %v247
    %vm249 = vweird.f32 %v241
    %vm250 = vweird.f32 %v243
    %vm251 = vmor %vm249, %vm250
    %v252 = vsel %vm251, %v243, %v248
    %v253 = vrsqrt.pop %v242
    %v254 = vmul.f32 %v253, %v242
    %v255 = vmul.f32 %v254, %v253
    %v256 = vmul.f32 0.5, %v255
    %v257 = vsub.f32 1.5, %v256
    %v258 = vmul.f32 %v253, %v257
    %vm259 = vweird.f32 %v242
    %vm260 = vweird.f32 %v253
    %vm261 = vmor %vm259, %vm260
    %v262 = vsel %vm261, %v253, %v258
    %v263 = vmul.f32 %v239, %v252
    %v264 = vmul.f32 %v240, %v262
    %v265 = vperm.slane %v219, 0
    %v266 = vmul.f32 %v263, %v265
    %v267 = vmul.f32 %v264, %v265
    %v268 = vperm.slane %v219, 1
    %v269 = vadd.f32 %v266, %v268
    %v270 = vadd.f32 %v267, %v268
    %v271 = vpack.c.bf16 %v270, %v269
    %v272 = vld [vmem:[#allocation10] sm:$0xf]
    %v273 = vld [vmem:[#allocation10 + $0x4] sm:$0xf]
    %v274 = vld [vmem:[#allocation10 + $0x8] sm:$0xf]
    %v275 = vld [vmem:[#allocation10 + $0xc] sm:$0xf]
    %v276 = vld [vmem:[#allocation10 + $0x10] sm:$0xf]
    %v277 = vld [vmem:[#allocation10 + $0x14] sm:$0xf]
    %v278 = vld [vmem:[#allocation10 + $0x18] sm:$0xf]
    %v279 = vld [vmem:[#allocation10 + $0x1c] sm:$0xf]
    %v280 = vld [vmem:[#allocation10 + $0x20] sm:$0xf]
    %v281 = vld [vmem:[#allocation10 + $0x24] sm:$0xf]
    %v282 = vld [vmem:[#allocation10 + $0x28] sm:$0xf]
    %v283 = vld [vmem:[#allocation10 + $0x2c] sm:$0xf]
    %v284 = vld [vmem:[#allocation10 + $0x30] sm:$0xf]
    %v285 = vld [vmem:[#allocation10 + $0x34] sm:$0xf]
    %v286 = vld [vmem:[#allocation10 + $0x38] sm:$0xf]
    %v287 = vld [vmem:[#allocation10 + $0x3c] sm:$0xf]
    %v288 = vperm.slane %v220, 0
    %v305 = vunpack.c.l.b16 %v272
    %v306 = vunpack.c.l.b16 %v273
    %v307 = vunpack.c.l.b16 %v274
    %v308 = vunpack.c.l.b16 %v275
    %v309 = vunpack.c.l.b16 %v276
    %v310 = vunpack.c.l.b16 %v277
    %v311 = vunpack.c.l.b16 %v278
    %v312 = vunpack.c.l.b16 %v279
    %v313 = vunpack.c.l.b16 %v280
    %v314 = vunpack.c.l.b16 %v281
    %v315 = vunpack.c.l.b16 %v282
    %v316 = vunpack.c.l.b16 %v283
    %v317 = vunpack.c.l.b16 %v284
    %v318 = vunpack.c.l.b16 %v285
    %v319 = vunpack.c.l.b16 %v286
    %v320 = vunpack.c.l.b16 %v287
    %v321 = vpack.c.b16 %v306, %v305
    %v322 = vpack.c.b16 %v308, %v307
    %v323 = vpack.c.b16 %v310, %v309
    %v324 = vpack.c.b16 %v312, %v311
    %v325 = vpack.c.b16 %v314, %v313
    %v326 = vpack.c.b16 %v316, %v315
    %v327 = vpack.c.b16 %v318, %v317
    %v328 = vpack.c.b16 %v320, %v319
    %337 = vmatpush.bf16.msra.mxu0 %v328
    %338 = vmatpush.bf16.msra.mxu0 %v327
    %339 = vmatpush.bf16.msra.mxu0 %v326
    %340 = vmatpush.bf16.msra.mxu0 %v325
    %341 = vmatpush.bf16.msra.mxu0 %v324
    %342 = vmatpush.bf16.msra.mxu0 %v323
    %343 = vmatpush.bf16.msra.mxu0 %v322
    %344 = vmatpush.bf16.msra.mxu0 %v321
    %345 = vmatmul.bf16.gmra.mxu0 %v271
    %v346 = vpop.f32.mrf.mxu0
    %v347 = vadd.f32 %v288, %v346
    %v348 = vpop.f32.mrf.mxu0
    %v349 = vadd.f32 %v288, %v348
    %350 = vdwg.mxu0
    %v351 = vld [vmem:[#allocation11] sm:$0xf]
    %v352 = vld [vmem:[#allocation11 + $0x4] sm:$0xf]
    %v353 = vld [vmem:[#allocation11 + $0x8] sm:$0xf]
    %v354 = vld [vmem:[#allocation11 + $0xc] sm:$0xf]
    %v355 = vld [vmem:[#allocation11 + $0x10] sm:$0xf]
    %v356 = vld [vmem:[#allocation11 + $0x14] sm:$0xf]
    %v357 = vld [vmem:[#allocation11 + $0x18] sm:$0xf]
    %v358 = vld [vmem:[#allocation11 + $0x1c] sm:$0xf]
    %v359 = vld [vmem:[#allocation11 + $0x20] sm:$0xf]
    %v360 = vld [vmem:[#allocation11 + $0x24] sm:$0xf]
    %v361 = vld [vmem:[#allocation11 + $0x28] sm:$0xf]
    %v362 = vld [vmem:[#allocation11 + $0x2c] sm:$0xf]
    %v363 = vld [vmem:[#allocation11 + $0x30] sm:$0xf]
    %v364 = vld [vmem:[#allocation11 + $0x34] sm:$0xf]
    %v365 = vld [vmem:[#allocation11 + $0x38] sm:$0xf]
    %v366 = vld [vmem:[#allocation11 + $0x3c] sm:$0xf]
    %v367 = vperm.slane %v220, 2
    %v384 = vunpack.c.l.b16 %v351
    %v385 = vunpack.c.l.b16 %v352
    %v386 = vunpack.c.l.b16 %v353
    %v387 = vunpack.c.l.b16 %v354
    %v388 = vunpack.c.l.b16 %v355
    %v389 = vunpack.c.l.b16 %v356
    %v390 = vunpack.c.l.b16 %v357
    %v391 = vunpack.c.l.b16 %v358
    %v392 = vunpack.c.l.b16 %v359
    %v393 = vunpack.c.l.b16 %v360
    %v394 = vunpack.c.l.b16 %v361
    %v395 = vunpack.c.l.b16 %v362
    %v396 = vunpack.c.l.b16 %v363
    %v397 = vunpack.c.l.b16 %v364
    %v398 = vunpack.c.l.b16 %v365
    %v399 = vunpack.c.l.b16 %v366
    %v400 = vpack.c.b16 %v385, %v384
    %v401 = vpack.c.b16 %v387, %v386
    %v402 = vpack.c.b16 %v389, %v388
    %v403 = vpack.c.b16 %v391, %v390
    %v404 = vpack.c.b16 %v393, %v392
    %v405 = vpack.c.b16 %v395, %v394
    %v406 = vpack.c.b16 %v397, %v396
    %v407 = vpack.c.b16 %v399, %v398
    %416 = vmatpush.bf16.msra.mxu0 %v407
    %417 = vmatpush.bf16.msra.mxu0 %v406
    %418 = vmatpush.bf16.msra.mxu0 %v405
    %419 = vmatpush.bf16.msra.mxu0 %v404
    %420 = vmatpush.bf16.msra.mxu0 %v403
    %421 = vmatpush.bf16.msra.mxu0 %v402
    %422 = vmatpush.bf16.msra.mxu0 %v401
    %423 = vmatpush.bf16.msra.mxu0 %v400
    %424 = vmatmul.bf16.gmra.mxu0 %v271
    %v425 = vpop.f32.mrf.mxu0
    %v426 = vadd.f32 %v367, %v425
    %v427 = vpop.f32.mrf.mxu0
    %v428 = vadd.f32 %v367, %v427
    %429 = vdwg.mxu0
    %v430 = vld [vmem:[#allocation13] sm:$0xf]
    %v431 = vld [vmem:[#allocation13 + $0x4] sm:$0xf]
    %v432 = vld [vmem:[#allocation13 + $0x8] sm:$0xf]
    %v433 = vld [vmem:[#allocation13 + $0xc] sm:$0xf]
    %v434 = vld [vmem:[#allocation13 + $0x10] sm:$0xf]
    %v435 = vld [vmem:[#allocation13 + $0x14] sm:$0xf]
    %v436 = vld [vmem:[#allocation13 + $0x18] sm:$0xf]
    %v437 = vld [vmem:[#allocation13 + $0x1c] sm:$0xf]
    %v438 = vld [vmem:[#allocation13 + $0x20] sm:$0xf]
    %v439 = vld [vmem:[#allocation13 + $0x24] sm:$0xf]
    %v440 = vld [vmem:[#allocation13 + $0x28] sm:$0xf]
    %v441 = vld [vmem:[#allocation13 + $0x2c] sm:$0xf]
    %v442 = vld [vmem:[#allocation13 + $0x30] sm:$0xf]
    %v443 = vld [vmem:[#allocation13 + $0x34] sm:$0xf]
    %v444 = vld [vmem:[#allocation13 + $0x38] sm:$0xf]
    %v445 = vld [vmem:[#allocation13 + $0x3c] sm:$0xf]
    %v446 = vperm.slane %v220, 4
    %v463 = vunpack.c.l.b16 %v430
    %v464 = vunpack.c.l.b16 %v431
    %v465 = vunpack.c.l.b16 %v432
    %v466 = vunpack.c.l.b16 %v433
    %v467 = vunpack.c.l.b16 %v434
    %v468 = vunpack.c.l.b16 %v435
    %v469 = vunpack.c.l.b16 %v436
    %v470 = vunpack.c.l.b16 %v437
    %v471 = vunpack.c.l.b16 %v438
    %v472 = vunpack.c.l.b16 %v439
    %v473 = vunpack.c.l.b16 %v440
    %v474 = vunpack.c.l.b16 %v441
    %v475 = vunpack.c.l.b16 %v442
    %v476 = vunpack.c.l.b16 %v443
    %v477 = vunpack.c.l.b16 %v444
    %v478 = vunpack.c.l.b16 %v445
    %v479 = vpack.c.b16 %v464, %v463
    %v480 = vpack.c.b16 %v466, %v465
    %v481 = vpack.c.b16 %v468, %v467
    %v482 = vpack.c.b16 %v470, %v469
    %v483 = vpack.c.b16 %v472, %v471
    %v484 = vpack.c.b16 %v474, %v473
    %v485 = vpack.c.b16 %v476, %v475
    %v486 = vpack.c.b16 %v478, %v477
    %495 = vmatpush.bf16.msra.mxu0 %v486
    %496 = vmatpush.bf16.msra.mxu0 %v485
    %497 = vmatpush.bf16.msra.mxu0 %v484
    %498 = vmatpush.bf16.msra.mxu0 %v483
    %499 = vmatpush.bf16.msra.mxu0 %v482
    %500 = vmatpush.bf16.msra.mxu0 %v481
    %501 = vmatpush.bf16.msra.mxu0 %v480
    %502 = vmatpush.bf16.msra.mxu0 %v479
    %503 = vmatmul.bf16.gmra.mxu0 %v271
    %v504 = vpop.f32.mrf.mxu0
    %v505 = vadd.f32 %v446, %v504
    %v506 = vpop.f32.mrf.mxu0
    %v507 = vadd.f32 %v446, %v506
    %508 = vdwg.mxu0
    %v509 = vpack.c.bf16 %v349, %v347
    %v510 = vpack.c.bf16 %v428, %v426
    %511 = vmatpush.bf16.xpose.msra.mxu0 0
    %512 = vmatpush.bf16.xpose.msra.mxu0 0
    %513 = vmatpush.bf16.xpose.msra.mxu0 0
    %514 = vmatpush.bf16.xpose.msra.mxu0 0
    %515 = vmatpush.bf16.xpose.msra.mxu0 0
    %516 = vmatpush.bf16.xpose.msra.mxu0 0
    %517 = vmatpush.bf16.xpose.msra.mxu0 0
    %518 = vmatpush.bf16.xpose.msra.mxu0 %v510
    %519 = vmatmul.bf16.gmra.mxu0 %v509
    %v520 = vpop.f32.mrf.mxu0
    %v521 = vadd.f32 %v217, %v520
    %v522 = vpop.f32.mrf.mxu0
    %v523 = vadd.f32 %v218, %v522
    %524 = vdwg.mxu0
    %vm525 = vcmask 130048
    %v526 = vsel %vm525, %v521, -inf
    %527 = vmax.xlane.f32.xlu0 %v526
    %v528 = vpop.xlane.xlu0 %527
    %v529 = vsel %vm525, %v523, -inf
    %530 = vmax.xlane.f32.xlu0 %v529
    %v531 = vpop.xlane.xlu0 %530
    %v532 = vsub.f32 %v521, %v528
    %v533 = vsub.f32 %v523, %v531
    %v534 = vmul.f32 %v532, 1.442695
    %v535 = vpow.pop %v534
    %v536 = vmul.f32 %v533, 1.442695
    %v537 = vpow.pop %v536
    %v538 = vsel %vm525, %v535, 0.0
    %539 = vadd.xlane.f32.xlu0 %v538
    %v540 = vpop.xlane.xlu0 %539
    %v541 = vsel %vm525, %v537, 0.0
    %542 = vadd.xlane.f32.xlu0 %v541
    %v543 = vpop.xlane.xlu0 %542
    %v544 = vrcp.pop %v540
    %v545 = vrcp.pop %v543
    %v546 = vmul.f32 %v535, %v544
    %v547 = vmul.f32 %v537, %v545
    %v548 = vpack.c.bf16 %v547, %v546
    %v549 = vpack.c.bf16 %v507, %v505
    %v551 = vsel %vm525, %v548, 0
    %553 = vmatpush.bf16.msra.mxu0 0
    %554 = vmatpush.bf16.msra.mxu0 0
    %555 = vmatpush.bf16.msra.mxu0 0
    %556 = vmatpush.bf16.msra.mxu0 0
    %557 = vmatpush.bf16.msra.mxu0 0
    %558 = vmatpush.bf16.msra.mxu0 0
    %559 = vmatpush.bf16.msra.mxu0 0
    %560 = vmatpush.bf16.msra.mxu0 %v549
    %561 = vmatmul.bf16.gmra.mxu0 %v551
    %v562 = vpop.f32.mrf.mxu0
    %v563 = vadd.f32 0.0, %v562
    %v564 = vpop.f32.mrf.mxu0
    %v565 = vadd.f32 0.0, %v564
    %566 = vdwg.mxu0
    %v567 = vpack.c.bf16 %v565, %v563
    %v568 = vld [vmem:[#allocation14] sm:$0xf]
    %v569 = vld [vmem:[#allocation14 + $0x4] sm:$0xf]
    %v570 = vld [vmem:[#allocation14 + $0x8] sm:$0xf]
    %v571 = vld [vmem:[#allocation14 + $0xc] sm:$0xf]
    %v572 = vld [vmem:[#allocation14 + $0x10] sm:$0xf]
    %v573 = vld [vmem:[#allocation14 + $0x14] sm:$0xf]
    %v574 = vld [vmem:[#allocation14 + $0x18] sm:$0xf]
    %v575 = vld [vmem:[#allocation14 + $0x1c] sm:$0xf]
    %v576 = vld [vmem:[#allocation14 + $0x20] sm:$0xf]
    %v577 = vld [vmem:[#allocation14 + $0x24] sm:$0xf]
    %v578 = vld [vmem:[#allocation14 + $0x28] sm:$0xf]
    %v579 = vld [vmem:[#allocation14 + $0x2c] sm:$0xf]
    %v580 = vld [vmem:[#allocation14 + $0x30] sm:$0xf]
    %v581 = vld [vmem:[#allocation14 + $0x34] sm:$0xf]
    %v582 = vld [vmem:[#allocation14 + $0x38] sm:$0xf]
    %v583 = vld [vmem:[#allocation14 + $0x3c] sm:$0xf]
    %s584 = scalar_lea.vmem [#allocation10], 64
    %v585 = vld [vmem:[%s584] sm:$0xf]
    %v586 = vld [vmem:[%s584 + $0x4] sm:$0xf]
    %v587 = vld [vmem:[%s584 + $0x8] sm:$0xf]
    %v588 = vld [vmem:[%s584 + $0xc] sm:$0xf]
    %v589 = vld [vmem:[%s584 + $0x10] sm:$0xf]
    %v590 = vld [vmem:[%s584 + $0x14] sm:$0xf]
    %v591 = vld [vmem:[%s584 + $0x18] sm:$0xf]
    %v592 = vld [vmem:[%s584 + $0x1c] sm:$0xf]
    %v593 = vld [vmem:[%s584 + $0x20] sm:$0xf]
    %v594 = vld [vmem:[%s584 + $0x24] sm:$0xf]
    %v595 = vld [vmem:[%s584 + $0x28] sm:$0xf]
    %v596 = vld [vmem:[%s584 + $0x2c] sm:$0xf]
    %v597 = vld [vmem:[%s584 + $0x30] sm:$0xf]
    %v598 = vld [vmem:[%s584 + $0x34] sm:$0xf]
    %v599 = vld [vmem:[%s584 + $0x38] sm:$0xf]
    %v600 = vld [vmem:[%s584 + $0x3c] sm:$0xf]
    %v601 = vperm.slane %v220, 1
    %v618 = vunpack.c.l.b16 %v585
    %v619 = vunpack.c.l.b16 %v586
    %v620 = vunpack.c.l.b16 %v587
    %v621 = vunpack.c.l.b16 %v588
    %v622 = vunpack.c.l.b16 %v589
    %v623 = vunpack.c.l.b16 %v590
    %v624 = vunpack.c.l.b16 %v591
    %v625 = vunpack.c.l.b16 %v592
    %v626 = vunpack.c.l.b16 %v593
    %v627 = vunpack.c.l.b16 %v594
    %v628 = vunpack.c.l.b16 %v595
    %v629 = vunpack.c.l.b16 %v596
    %v630 = vunpack.c.l.b16 %v597
    %v631 = vunpack.c.l.b16 %v598
    %v632 = vunpack.c.l.b16 %v599
    %v633 = vunpack.c.l.b16 %v600
    %v634 = vpack.c.b16 %v619, %v618
    %v635 = vpack.c.b16 %v621, %v620
    %v636 = vpack.c.b16 %v623, %v622
    %v637 = vpack.c.b16 %v625, %v624
    %v638 = vpack.c.b16 %v627, %v626
    %v639 = vpack.c.b16 %v629, %v628
    %v640 = vpack.c.b16 %v631, %v630
    %v641 = vpack.c.b16 %v633, %v632
    %650 = vmatpush.bf16.msra.mxu0 %v641
    %651 = vmatpush.bf16.msra.mxu0 %v640
    %652 = vmatpush.bf16.msra.mxu0 %v639
    %653 = vmatpush.bf16.msra.mxu0 %v638
    %654 = vmatpush.bf16.msra.mxu0 %v637
    %655 = vmatpush.bf16.msra.mxu0 %v636
    %656 = vmatpush.bf16.msra.mxu0 %v635
    %657 = vmatpush.bf16.msra.mxu0 %v634
    %658 = vmatmul.bf16.gmra.mxu0 %v271
    %v659 = vpop.f32.mrf.mxu0
    %v660 = vadd.f32 %v601, %v659
    %v661 = vpop.f32.mrf.mxu0
    %v662 = vadd.f32 %v601, %v661
    %663 = vdwg.mxu0
    %s664 = scalar_lea.vmem [#allocation11], 64
    %v665 = vld [vmem:[%s664] sm:$0xf]
    %v666 = vld [vmem:[%s664 + $0x4] sm:$0xf]
    %v667 = vld [vmem:[%s664 + $0x8] sm:$0xf]
    %v668 = vld [vmem:[%s664 + $0xc] sm:$0xf]
    %v669 = vld [vmem:[%s664 + $0x10] sm:$0xf]
    %v670 = vld [vmem:[%s664 + $0x14] sm:$0xf]
    %v671 = vld [vmem:[%s664 + $0x18] sm:$0xf]
    %v672 = vld [vmem:[%s664 + $0x1c] sm:$0xf]
    %v673 = vld [vmem:[%s664 + $0x20] sm:$0xf]
    %v674 = vld [vmem:[%s664 + $0x24] sm:$0xf]
    %v675 = vld [vmem:[%s664 + $0x28] sm:$0xf]
    %v676 = vld [vmem:[%s664 + $0x2c] sm:$0xf]
    %v677 = vld [vmem:[%s664 + $0x30] sm:$0xf]
    %v678 = vld [vmem:[%s664 + $0x34] sm:$0xf]
    %v679 = vld [vmem:[%s664 + $0x38] sm:$0xf]
    %v680 = vld [vmem:[%s664 + $0x3c] sm:$0xf]
    %v681 = vperm.slane %v220, 3
    %v698 = vunpack.c.l.b16 %v665
    %v699 = vunpack.c.l.b16 %v666
    %v700 = vunpack.c.l.b16 %v667
    %v701 = vunpack.c.l.b16 %v668
    %v702 = vunpack.c.l.b16 %v669
    %v703 = vunpack.c.l.b16 %v670
    %v704 = vunpack.c.l.b16 %v671
    %v705 = vunpack.c.l.b16 %v672
    %v706 = vunpack.c.l.b16 %v673
    %v707 = vunpack.c.l.b16 %v674
    %v708 = vunpack.c.l.b16 %v675
    %v709 = vunpack.c.l.b16 %v676
    %v710 = vunpack.c.l.b16 %v677
    %v711 = vunpack.c.l.b16 %v678
    %v712 = vunpack.c.l.b16 %v679
    %v713 = vunpack.c.l.b16 %v680
    %v714 = vpack.c.b16 %v699, %v698
    %v715 = vpack.c.b16 %v701, %v700
    %v716 = vpack.c.b16 %v703, %v702
    %v717 = vpack.c.b16 %v705, %v704
    %v718 = vpack.c.b16 %v707, %v706
    %v719 = vpack.c.b16 %v709, %v708
    %v720 = vpack.c.b16 %v711, %v710
    %v721 = vpack.c.b16 %v713, %v712
    %730 = vmatpush.bf16.msra.mxu0 %v721
    %731 = vmatpush.bf16.msra.mxu0 %v720
    %732 = vmatpush.bf16.msra.mxu0 %v719
    %733 = vmatpush.bf16.msra.mxu0 %v718
    %734 = vmatpush.bf16.msra.mxu0 %v717
    %735 = vmatpush.bf16.msra.mxu0 %v716
    %736 = vmatpush.bf16.msra.mxu0 %v715
    %737 = vmatpush.bf16.msra.mxu0 %v714
    %738 = vmatmul.bf16.gmra.mxu0 %v271
    %v739 = vpop.f32.mrf.mxu0
    %v740 = vadd.f32 %v681, %v739
    %v741 = vpop.f32.mrf.mxu0
    %v742 = vadd.f32 %v681, %v741
    %743 = vdwg.mxu0
    %s744 = scalar_lea.vmem [#allocation13], 64
    %v745 = vld [vmem:[%s744] sm:$0xf]
    %v746 = vld [vmem:[%s744 + $0x4] sm:$0xf]
    %v747 = vld [vmem:[%s744 + $0x8] sm:$0xf]
    %v748 = vld [vmem:[%s744 + $0xc] sm:$0xf]
    %v749 = vld [vmem:[%s744 + $0x10] sm:$0xf]
    %v750 = vld [vmem:[%s744 + $0x14] sm:$0xf]
    %v751 = vld [vmem:[%s744 + $0x18] sm:$0xf]
    %v752 = vld [vmem:[%s744 + $0x1c] sm:$0xf]
    %v753 = vld [vmem:[%s744 + $0x20] sm:$0xf]
    %v754 = vld [vmem:[%s744 + $0x24] sm:$0xf]
    %v755 = vld [vmem:[%s744 + $0x28] sm:$0xf]
    %v756 = vld [vmem:[%s744 + $0x2c] sm:$0xf]
    %v757 = vld [vmem:[%s744 + $0x30] sm:$0xf]
    %v758 = vld [vmem:[%s744 + $0x34] sm:$0xf]
    %v759 = vld [vmem:[%s744 + $0x38] sm:$0xf]
    %v760 = vld [vmem:[%s744 + $0x3c] sm:$0xf]
    %v761 = vperm.slane %v220, 5
    %v778 = vunpack.c.l.b16 %v745
    %v779 = vunpack.c.l.b16 %v746
    %v780 = vunpack.c.l.b16 %v747
    %v781 = vunpack.c.l.b16 %v748
    %v782 = vunpack.c.l.b16 %v749
    %v783 = vunpack.c.l.b16 %v750
    %v784 = vunpack.c.l.b16 %v751
    %v785 = vunpack.c.l.b16 %v752
    %v786 = vunpack.c.l.b16 %v753
    %v787 = vunpack.c.l.b16 %v754
    %v788 = vunpack.c.l.b16 %v755
    %v789 = vunpack.c.l.b16 %v756
    %v790 = vunpack.c.l.b16 %v757
    %v791 = vunpack.c.l.b16 %v758
    %v792 = vunpack.c.l.b16 %v759
    %v793 = vunpack.c.l.b16 %v760
    %v794 = vpack.c.b16 %v779, %v778
    %v795 = vpack.c.b16 %v781, %v780
    %v796 = vpack.c.b16 %v783, %v782
    %v797 = vpack.c.b16 %v785, %v784
    %v798 = vpack.c.b16 %v787, %v786
    %v799 = vpack.c.b16 %v789, %v788
    %v800 = vpack.c.b16 %v791, %v790
    %v801 = vpack.c.b16 %v793, %v792
    %810 = vmatpush.bf16.msra.mxu0 %v801
    %811 = vmatpush.bf16.msra.mxu0 %v800
    %812 = vmatpush.bf16.msra.mxu0 %v799
    %813 = vmatpush.bf16.msra.mxu0 %v798
    %814 = vmatpush.bf16.msra.mxu0 %v797
    %815 = vmatpush.bf16.msra.mxu0 %v796
    %816 = vmatpush.bf16.msra.mxu0 %v795
    %817 = vmatpush.bf16.msra.mxu0 %v794
    %818 = vmatmul.bf16.gmra.mxu0 %v271
    %v819 = vpop.f32.mrf.mxu0
    %v820 = vadd.f32 %v761, %v819
    %v821 = vpop.f32.mrf.mxu0
    %v822 = vadd.f32 %v761, %v821
    %823 = vdwg.mxu0
    %v824 = vpack.c.bf16 %v662, %v660
    %v825 = vpack.c.bf16 %v742, %v740
    %826 = vmatpush.bf16.xpose.msra.mxu0 0
    %827 = vmatpush.bf16.xpose.msra.mxu0 0
    %828 = vmatpush.bf16.xpose.msra.mxu0 0
    %829 = vmatpush.bf16.xpose.msra.mxu0 0
    %830 = vmatpush.bf16.xpose.msra.mxu0 0
    %831 = vmatpush.bf16.xpose.msra.mxu0 0
    %832 = vmatpush.bf16.xpose.msra.mxu0 0
    %833 = vmatpush.bf16.xpose.msra.mxu0 %v825
    %834 = vmatmul.bf16.gmra.mxu0 %v824
    %v835 = vpop.f32.mrf.mxu0
    %v836 = vadd.f32 %v217, %v835
    %v837 = vpop.f32.mrf.mxu0
    %v838 = vadd.f32 %v218, %v837
    %839 = vdwg.mxu0
    %v840 = vsel %vm525, %v836, -inf
    %841 = vmax.xlane.f32.xlu0 %v840
    %v842 = vpop.xlane.xlu0 %841
    %v843 = vsel %vm525, %v838, -inf
    %844 = vmax.xlane.f32.xlu0 %v843
    %v845 = vpop.xlane.xlu0 %844
    %v846 = vsub.f32 %v836, %v842
    %v847 = vsub.f32 %v838, %v845
    %v848 = vmul.f32 %v846, 1.442695
    %v849 = vpow.pop %v848
    %v850 = vmul.f32 %v847, 1.442695
    %v851 = vpow.pop %v850
    %v852 = vsel %vm525, %v849, 0.0
    %853 = vadd.xlane.f32.xlu0 %v852
    %v854 = vpop.xlane.xlu0 %853
    %v855 = vsel %vm525, %v851, 0.0
    %856 = vadd.xlane.f32.xlu0 %v855
    %v857 = vpop.xlane.xlu0 %856
    %v858 = vrcp.pop %v854
    %v859 = vrcp.pop %v857
    %v860 = vmul.f32 %v849, %v858
    %v861 = vmul.f32 %v851, %v859
    %v862 = vpack.c.bf16 %v861, %v860
    %v863 = vpack.c.bf16 %v822, %v820
    %v865 = vsel %vm525, %v862, 0
    %867 = vmatpush.bf16.msra.mxu0 0
    %868 = vmatpush.bf16.msra.mxu0 0
    %869 = vmatpush.bf16.msra.mxu0 0
    %870 = vmatpush.bf16.msra.mxu0 0
    %871 = vmatpush.bf16.msra.mxu0 0
    %872 = vmatpush.bf16.msra.mxu0 0
    %873 = vmatpush.bf16.msra.mxu0 0
    %874 = vmatpush.bf16.msra.mxu0 %v863
    %875 = vmatmul.bf16.gmra.mxu0 %v865
    %v876 = vpop.f32.mrf.mxu0
    %v877 = vadd.f32 0.0, %v876
    %v878 = vpop.f32.mrf.mxu0
    %v879 = vadd.f32 0.0, %v878
    %880 = vdwg.mxu0
    %v881 = vpack.c.bf16 %v879, %v877
    %s882 = scalar_lea.vmem [#allocation14], 64
    %v883 = vld [vmem:[%s882] sm:$0xf]
    %v884 = vld [vmem:[%s882 + $0x4] sm:$0xf]
    %v885 = vld [vmem:[%s882 + $0x8] sm:$0xf]
    %v886 = vld [vmem:[%s882 + $0xc] sm:$0xf]
    %v887 = vld [vmem:[%s882 + $0x10] sm:$0xf]
    %v888 = vld [vmem:[%s882 + $0x14] sm:$0xf]
    %v889 = vld [vmem:[%s882 + $0x18] sm:$0xf]
    %v890 = vld [vmem:[%s882 + $0x1c] sm:$0xf]
    %v891 = vld [vmem:[%s882 + $0x20] sm:$0xf]
    %v892 = vld [vmem:[%s882 + $0x24] sm:$0xf]
    %v893 = vld [vmem:[%s882 + $0x28] sm:$0xf]
    %v894 = vld [vmem:[%s882 + $0x2c] sm:$0xf]
    %v895 = vld [vmem:[%s882 + $0x30] sm:$0xf]
    %v896 = vld [vmem:[%s882 + $0x34] sm:$0xf]
    %v897 = vld [vmem:[%s882 + $0x38] sm:$0xf]
    %v898 = vld [vmem:[%s882 + $0x3c] sm:$0xf]
    %v915 = vunpack.c.l.b16 %v883
    %v916 = vunpack.c.l.b16 %v884
    %v917 = vunpack.c.l.b16 %v885
    %v918 = vunpack.c.l.b16 %v886
    %v919 = vunpack.c.l.b16 %v887
    %v920 = vunpack.c.l.b16 %v888
    %v921 = vunpack.c.l.b16 %v889
    %v922 = vunpack.c.l.b16 %v890
    %v923 = vunpack.c.l.b16 %v891
    %v924 = vunpack.c.l.b16 %v892
    %v925 = vunpack.c.l.b16 %v893
    %v926 = vunpack.c.l.b16 %v894
    %v927 = vunpack.c.l.b16 %v895
    %v928 = vunpack.c.l.b16 %v896
    %v929 = vunpack.c.l.b16 %v897
    %v930 = vunpack.c.l.b16 %v898
    %v931 = vpack.c.b16 %v916, %v915
    %v932 = vpack.c.b16 %v918, %v917
    %v933 = vpack.c.b16 %v920, %v919
    %v934 = vpack.c.b16 %v922, %v921
    %v935 = vpack.c.b16 %v924, %v923
    %v936 = vpack.c.b16 %v926, %v925
    %v937 = vpack.c.b16 %v928, %v927
    %v938 = vpack.c.b16 %v930, %v929
    %947 = vmatpush.bf16.msra.mxu0 %v938
    %948 = vmatpush.bf16.msra.mxu0 %v937
    %949 = vmatpush.bf16.msra.mxu0 %v936
    %950 = vmatpush.bf16.msra.mxu0 %v935
    %951 = vmatpush.bf16.msra.mxu0 %v934
    %952 = vmatpush.bf16.msra.mxu0 %v933
    %953 = vmatpush.bf16.msra.mxu0 %v932
    %954 = vmatpush.bf16.msra.mxu0 %v931
    %955 = vmatmul.bf16.gmra.mxu0 %v881
    %v956 = vpop.f32.mrf.mxu0
    %v957 = vadd.f32 0.0, %v956
    %v958 = vpop.f32.mrf.mxu0
    %v959 = vadd.f32 0.0, %v958
    %960 = vdwg.mxu0
    %v977 = vunpack.c.l.b16 %v568
    %v978 = vunpack.c.l.b16 %v569
    %v979 = vunpack.c.l.b16 %v570
    %v980 = vunpack.c.l.b16 %v571
    %v981 = vunpack.c.l.b16 %v572
    %v982 = vunpack.c.l.b16 %v573
    %v983 = vunpack.c.l.b16 %v574
    %v984 = vunpack.c.l.b16 %v575
    %v985 = vunpack.c.l.b16 %v576
    %v986 = vunpack.c.l.b16 %v577
    %v987 = vunpack.c.l.b16 %v578
    %v988 = vunpack.c.l.b16 %v579
    %v989 = vunpack.c.l.b16 %v580
    %v990 = vunpack.c.l.b16 %v581
    %v991 = vunpack.c.l.b16 %v582
    %v992 = vunpack.c.l.b16 %v583
    %v993 = vpack.c.b16 %v978, %v977
    %v994 = vpack.c.b16 %v980, %v979
    %v995 = vpack.c.b16 %v982, %v981
    %v996 = vpack.c.b16 %v984, %v983
    %v997 = vpack.c.b16 %v986, %v985
    %v998 = vpack.c.b16 %v988, %v987
    %v999 = vpack.c.b16 %v990, %v989
    %v1000 = vpack.c.b16 %v992, %v991
    %1009 = vmatpush.bf16.msra.mxu0 %v1000
    %1010 = vmatpush.bf16.msra.mxu0 %v999
    %1011 = vmatpush.bf16.msra.mxu0 %v998
    %1012 = vmatpush.bf16.msra.mxu0 %v997
    %1013 = vmatpush.bf16.msra.mxu0 %v996
    %1014 = vmatpush.bf16.msra.mxu0 %v995
    %1015 = vmatpush.bf16.msra.mxu0 %v994
    %1016 = vmatpush.bf16.msra.mxu0 %v993
    %1017 = vmatmul.bf16.gmra.mxu0 %v567
    %v1018 = vpop.f32.mrf.mxu0
    %v1019 = vadd.f32 %v957, %v1018
    %v1020 = vpop.f32.mrf.mxu0
    %v1021 = vadd.f32 %v959, %v1020
    %1022 = vdwg.mxu0
    %v1023 = vadd.f32 %v215, %v1019
    %v1024 = vadd.f32 %v216, %v1021
    %v1025 = vperm.slane %v219, 4
    %v1026 = vadd.f32 %v1023, %v1025
    %v1027 = vadd.f32 %v1024, %v1025
    %1028 = vadd.xlane.f32.xlu0 %v1026
    %v1029 = vpop.xlane.xlu0 %1028
    %1030 = vadd.xlane.f32.xlu0 %v1027
    %v1031 = vpop.xlane.xlu0 %1030
    %v1032 = vmul.f32 %v1029, 0.03125
    %v1033 = vmul.f32 %v1031, 0.03125
    %v1034 = vmul.f32 %v1026, %v1026
    %v1035 = vmul.f32 %v1027, %v1027
    %1036 = vadd.xlane.f32.xlu0 %v1034
    %v1037 = vpop.xlane.xlu0 %1036
    %1038 = vadd.xlane.f32.xlu0 %v1035
    %v1039 = vpop.xlane.xlu0 %1038
    %v1040 = vmul.f32 %v1037, 0.03125
    %v1041 = vmul.f32 %v1039, 0.03125
    %v1042 = vmul.f32 %v1032, %v1032
    %v1043 = vmul.f32 %v1033, %v1033
    %v1044 = vsub.f32 %v1040, %v1042
    %v1045 = vsub.f32 %v1041, %v1043
    %v1046 = vsub.f32 %v1026, %v1032
    %v1047 = vsub.f32 %v1027, %v1033
    %v1048 = vadd.f32 %v1044, 1e-05
    %v1049 = vadd.f32 %v1045, 1e-05
    %v1050 = vrsqrt.pop %v1048
    %v1051 = vmul.f32 %v1050, %v1048
    %v1052 = vmul.f32 %v1051, %v1050
    %v1053 = vmul.f32 0.5, %v1052
    %v1054 = vsub.f32 1.5, %v1053
    %v1055 = vmul.f32 %v1050, %v1054
    %vm1056 = vweird.f32 %v1048
    %vm1057 = vweird.f32 %v1050
    %vm1058 = vmor %vm1056, %vm1057
    %v1059 = vsel %vm1058, %v1050, %v1055
    %v1060 = vrsqrt.pop %v1049
    %v1061 = vmul.f32 %v1060, %v1049
    %v1062 = vmul.f32 %v1061, %v1060
    %v1063 = vmul.f32 0.5, %v1062
    %v1064 = vsub.f32 1.5, %v1063
    %v1065 = vmul.f32 %v1060, %v1064
    %vm1066 = vweird.f32 %v1049
    %vm1067 = vweird.f32 %v1060
    %vm1068 = vmor %vm1066, %vm1067
    %v1069 = vsel %vm1068, %v1060, %v1065
    %v1070 = vmul.f32 %v1046, %v1059
    %v1071 = vmul.f32 %v1047, %v1069
    %v1072 = vperm.slane %v219, 2
    %v1073 = vmul.f32 %v1070, %v1072
    %v1074 = vmul.f32 %v1071, %v1072
    %v1075 = vperm.slane %v219, 3
    %v1076 = vadd.f32 %v1073, %v1075
    %v1077 = vadd.f32 %v1074, %v1075
    %v1078 = vpack.c.bf16 %v1077, %v1076
    %v1079 = vld [vmem:[#allocation16] sm:$0xf]
    %v1080 = vld [vmem:[#allocation16 + $0x4] sm:$0xf]
    %v1081 = vld [vmem:[#allocation16 + $0x8] sm:$0xf]
    %v1082 = vld [vmem:[#allocation16 + $0xc] sm:$0xf]
    %v1083 = vld [vmem:[#allocation16 + $0x10] sm:$0xf]
    %v1084 = vld [vmem:[#allocation16 + $0x14] sm:$0xf]
    %v1085 = vld [vmem:[#allocation16 + $0x18] sm:$0xf]
    %v1086 = vld [vmem:[#allocation16 + $0x1c] sm:$0xf]
    %v1087 = vld [vmem:[#allocation16 + $0x20] sm:$0xf]
    %v1088 = vld [vmem:[#allocation16 + $0x24] sm:$0xf]
    %v1089 = vld [vmem:[#allocation16 + $0x28] sm:$0xf]
    %v1090 = vld [vmem:[#allocation16 + $0x2c] sm:$0xf]
    %v1091 = vld [vmem:[#allocation16 + $0x30] sm:$0xf]
    %v1092 = vld [vmem:[#allocation16 + $0x34] sm:$0xf]
    %v1093 = vld [vmem:[#allocation16 + $0x38] sm:$0xf]
    %v1094 = vld [vmem:[#allocation16 + $0x3c] sm:$0xf]
    %v1095 = vperm.slane %v219, 6
    %v1112 = vunpack.c.l.b16 %v1079
    %v1113 = vunpack.c.l.b16 %v1080
    %v1114 = vunpack.c.l.b16 %v1081
    %v1115 = vunpack.c.l.b16 %v1082
    %v1116 = vunpack.c.l.b16 %v1083
    %v1117 = vunpack.c.l.b16 %v1084
    %v1118 = vunpack.c.l.b16 %v1085
    %v1119 = vunpack.c.l.b16 %v1086
    %v1120 = vunpack.c.l.b16 %v1087
    %v1121 = vunpack.c.l.b16 %v1088
    %v1122 = vunpack.c.l.b16 %v1089
    %v1123 = vunpack.c.l.b16 %v1090
    %v1124 = vunpack.c.l.b16 %v1091
    %v1125 = vunpack.c.l.b16 %v1092
    %v1126 = vunpack.c.l.b16 %v1093
    %v1127 = vunpack.c.l.b16 %v1094
    %v1128 = vpack.c.b16 %v1113, %v1112
    %v1129 = vpack.c.b16 %v1115, %v1114
    %v1130 = vpack.c.b16 %v1117, %v1116
    %v1131 = vpack.c.b16 %v1119, %v1118
    %v1132 = vpack.c.b16 %v1121, %v1120
    %v1133 = vpack.c.b16 %v1123, %v1122
    %v1134 = vpack.c.b16 %v1125, %v1124
    %v1135 = vpack.c.b16 %v1127, %v1126
    %1144 = vmatpush.bf16.msra.mxu0 %v1135
    %1145 = vmatpush.bf16.msra.mxu0 %v1134
    %1146 = vmatpush.bf16.msra.mxu0 %v1133
    %1147 = vmatpush.bf16.msra.mxu0 %v1132
    %1148 = vmatpush.bf16.msra.mxu0 %v1131
    %1149 = vmatpush.bf16.msra.mxu0 %v1130
    %1150 = vmatpush.bf16.msra.mxu0 %v1129
    %1151 = vmatpush.bf16.msra.mxu0 %v1128
    %1152 = vmatmul.bf16.gmra.mxu0 %v1078
    %v1153 = vpop.f32.mrf.mxu0
    %v1154 = vadd.f32 %v1095, %v1153
    %v1155 = vpop.f32.mrf.mxu0
    %v1156 = vadd.f32 %v1095, %v1155
    %1157 = vdwg.mxu0
    %v1158 = vmul.f32 %v1154, 0.5
    %v1159 = vmul.f32 %v1156, 0.5
    %v1160 = vmul.f32 %v1154, %v1154
    %v1161 = vmul.f32 %v1156, %v1156
    %v1162 = vmul.f32 %v1154, %v1160
    %v1163 = vmul.f32 %v1156, %v1161
    %v1164 = vmul.f32 %v1162, 0.044715
    %v1165 = vmul.f32 %v1163, 0.044715
    %v1166 = vadd.f32 %v1154, %v1164
    %v1167 = vadd.f32 %v1156, %v1165
    %v1168 = vmul.f32 %v1166, 0.7978846
    %v1169 = vmul.f32 %v1167, 0.7978846
    %v1170 = vtanh.pop %v1168
    %v1171 = vtanh.pop %v1169
    %v1172 = vadd.f32 %v1170, 1.0
    %v1173 = vadd.f32 %v1171, 1.0
    %v1174 = vmul.f32 %v1158, %v1172
    %v1175 = vmul.f32 %v1159, %v1173
    %v1176 = vpack.c.bf16 %v1175, %v1174
    %v1177 = vld [vmem:[#allocation17] sm:$0xf]
    %v1178 = vld [vmem:[#allocation17 + $0x4] sm:$0xf]
    %v1179 = vld [vmem:[#allocation17 + $0x8] sm:$0xf]
    %v1180 = vld [vmem:[#allocation17 + $0xc] sm:$0xf]
    %v1181 = vld [vmem:[#allocation17 + $0x10] sm:$0xf]
    %v1182 = vld [vmem:[#allocation17 + $0x14] sm:$0xf]
    %v1183 = vld [vmem:[#allocation17 + $0x18] sm:$0xf]
    %v1184 = vld [vmem:[#allocation17 + $0x1c] sm:$0xf]
    %v1185 = vld [vmem:[#allocation17 + $0x20] sm:$0xf]
    %v1186 = vld [vmem:[#allocation17 + $0x24] sm:$0xf]
    %v1187 = vld [vmem:[#allocation17 + $0x28] sm:$0xf]
    %v1188 = vld [vmem:[#allocation17 + $0x2c] sm:$0xf]
    %v1189 = vld [vmem:[#allocation17 + $0x30] sm:$0xf]
    %v1190 = vld [vmem:[#allocation17 + $0x34] sm:$0xf]
    %v1191 = vld [vmem:[#allocation17 + $0x38] sm:$0xf]
    %v1192 = vld [vmem:[#allocation17 + $0x3c] sm:$0xf]
    %v1209 = vunpack.c.l.b16 %v1177
    %v1210 = vunpack.c.l.b16 %v1178
    %v1211 = vunpack.c.l.b16 %v1179
    %v1212 = vunpack.c.l.b16 %v1180
    %v1213 = vunpack.c.l.b16 %v1181
    %v1214 = vunpack.c.l.b16 %v1182
    %v1215 = vunpack.c.l.b16 %v1183
    %v1216 = vunpack.c.l.b16 %v1184
    %v1217 = vunpack.c.l.b16 %v1185
    %v1218 = vunpack.c.l.b16 %v1186
    %v1219 = vunpack.c.l.b16 %v1187
    %v1220 = vunpack.c.l.b16 %v1188
    %v1221 = vunpack.c.l.b16 %v1189
    %v1222 = vunpack.c.l.b16 %v1190
    %v1223 = vunpack.c.l.b16 %v1191
    %v1224 = vunpack.c.l.b16 %v1192
    %v1225 = vpack.c.b16 %v1210, %v1209
    %v1226 = vpack.c.b16 %v1212, %v1211
    %v1227 = vpack.c.b16 %v1214, %v1213
    %v1228 = vpack.c.b16 %v1216, %v1215
    %v1229 = vpack.c.b16 %v1218, %v1217
    %v1230 = vpack.c.b16 %v1220, %v1219
    %v1231 = vpack.c.b16 %v1222, %v1221
    %v1232 = vpack.c.b16 %v1224, %v1223
    %1241 = vmatpush.bf16.msra.mxu0 %v1232
    %1242 = vmatpush.bf16.msra.mxu0 %v1231
    %1243 = vmatpush.bf16.msra.mxu0 %v1230
    %1244 = vmatpush.bf16.msra.mxu0 %v1229
    %1245 = vmatpush.bf16.msra.mxu0 %v1228
    %1246 = vmatpush.bf16.msra.mxu0 %v1227
    %1247 = vmatpush.bf16.msra.mxu0 %v1226
    %1248 = vmatpush.bf16.msra.mxu0 %v1225
    %1249 = vmatmul.bf16.gmra.mxu0 %v1176
    %v1250 = vpop.f32.mrf.mxu0
    %v1251 = vadd.f32 0.0, %v1250
    %v1252 = vpop.f32.mrf.mxu0
    %v1253 = vadd.f32 0.0, %v1252
    %1254 = vdwg.mxu0
    %v1255 = vadd.f32 %v1026, %v1251
    %v1256 = vadd.f32 %v1027, %v1253
    %v1257 = vperm.slane %v219, 5
    %v1258 = vadd.f32 %v1255, %v1257
    %v1259 = vadd.f32 %v1256, %v1257
    %s1260 = scalar_lea.vmem [#allocation8], 16
    %v1261 = vld [vmem:[%s1260] sm:$0xff]
    %v1262 = vld [vmem:[%s1260 + $0x8] sm:$0xff]
    %1263 = vadd.xlane.f32.xlu0 %v1258
    %v1264 = vpop.xlane.xlu0 %1263
    %1265 = vadd.xlane.f32.xlu0 %v1259
    %v1266 = vpop.xlane.xlu0 %1265
    %v1267 = vmul.f32 %v1264, 0.03125
    %v1268 = vmul.f32 %v1266, 0.03125
    %v1269 = vmul.f32 %v1258, %v1258
    %v1270 = vmul.f32 %v1259, %v1259
    %1271 = vadd.xlane.f32.xlu0 %v1269
    %v1272 = vpop.xlane.xlu0 %1271
    %1273 = vadd.xlane.f32.xlu0 %v1270
    %v1274 = vpop.xlane.xlu0 %1273
    %v1275 = vmul.f32 %v1272, 0.03125
    %v1276 = vmul.f32 %v1274, 0.03125
    %v1277 = vmul.f32 %v1267, %v1267
    %v1278 = vmul.f32 %v1268, %v1268
    %v1279 = vsub.f32 %v1275, %v1277
    %v1280 = vsub.f32 %v1276, %v1278
    %v1281 = vsub.f32 %v1258, %v1267
    %v1282 = vsub.f32 %v1259, %v1268
    %v1283 = vadd.f32 %v1279, 1e-05
    %v1284 = vadd.f32 %v1280, 1e-05
    %v1285 = vrsqrt.pop %v1283
    %v1286 = vmul.f32 %v1285, %v1283
    %v1287 = vmul.f32 %v1286, %v1285
    %v1288 = vmul.f32 0.5, %v1287
    %v1289 = vsub.f32 1.5, %v1288
    %v1290 = vmul.f32 %v1285, %v1289
    %vm1291 = vweird.f32 %v1283
    %vm1292 = vweird.f32 %v1285
    %vm1293 = vmor %vm1291, %vm1292
    %v1294 = vsel %vm1293, %v1285, %v1290
    %v1295 = vrsqrt.pop %v1284
    %v1296 = vmul.f32 %v1295, %v1284
    %v1297 = vmul.f32 %v1296, %v1295
    %v1298 = vmul.f32 0.5, %v1297
    %v1299 = vsub.f32 1.5, %v1298
    %v1300 = vmul.f32 %v1295, %v1299
    %vm1301 = vweird.f32 %v1284
    %vm1302 = vweird.f32 %v1295
    %vm1303 = vmor %vm1301, %vm1302
    %v1304 = vsel %vm1303, %v1295, %v1300
    %v1305 = vmul.f32 %v1281, %v1294
    %v1306 = vmul.f32 %v1282, %v1304
    %v1307 = vperm.slane %v1261, 0
    %v1308 = vmul.f32 %v1305, %v1307
    %v1309 = vmul.f32 %v1306, %v1307
    %v1310 = vperm.slane %v1261, 1
    %v1311 = vadd.f32 %v1308, %v1310
    %v1312 = vadd.f32 %v1309, %v1310
    %v1313 = vpack.c.bf16 %v1312, %v1311
    %s1314 = scalar_lea.vmem [#allocation10], 128
    %v1315 = vld [vmem:[%s1314] sm:$0xf]
    %v1316 = vld [vmem:[%s1314 + $0x4] sm:$0xf]
    %v1317 = vld [vmem:[%s1314 + $0x8] sm:$0xf]
    %v1318 = vld [vmem:[%s1314 + $0xc] sm:$0xf]
    %v1319 = vld [vmem:[%s1314 + $0x10] sm:$0xf]
    %v1320 = vld [vmem:[%s1314 + $0x14] sm:$0xf]
    %v1321 = vld [vmem:[%s1314 + $0x18] sm:$0xf]
    %v1322 = vld [vmem:[%s1314 + $0x1c] sm:$0xf]
    %v1323 = vld [vmem:[%s1314 + $0x20] sm:$0xf]
    %v1324 = vld [vmem:[%s1314 + $0x24] sm:$0xf]
    %v1325 = vld [vmem:[%s1314 + $0x28] sm:$0xf]
    %v1326 = vld [vmem:[%s1314 + $0x2c] sm:$0xf]
    %v1327 = vld [vmem:[%s1314 + $0x30] sm:$0xf]
    %v1328 = vld [vmem:[%s1314 + $0x34] sm:$0xf]
    %v1329 = vld [vmem:[%s1314 + $0x38] sm:$0xf]
    %v1330 = vld [vmem:[%s1314 + $0x3c] sm:$0xf]
    %v1331 = vperm.slane %v1262, 0
    %v1348 = vunpack.c.l.b16 %v1315
    %v1349 = vunpack.c.l.b16 %v1316
    %v1350 = vunpack.c.l.b16 %v1317
    %v1351 = vunpack.c.l.b16 %v1318
    %v1352 = vunpack.c.l.b16 %v1319
    %v1353 = vunpack.c.l.b16 %v1320
    %v1354 = vunpack.c.l.b16 %v1321
    %v1355 = vunpack.c.l.b16 %v1322
    %v1356 = vunpack.c.l.b16 %v1323
    %v1357 = vunpack.c.l.b16 %v1324
    %v1358 = vunpack.c.l.b16 %v1325
    %v1359 = vunpack.c.l.b16 %v1326
    %v1360 = vunpack.c.l.b16 %v1327
    %v1361 = vunpack.c.l.b16 %v1328
    %v1362 = vunpack.c.l.b16 %v1329
    %v1363 = vunpack.c.l.b16 %v1330
    %v1364 = vpack.c.b16 %v1349, %v1348
    %v1365 = vpack.c.b16 %v1351, %v1350
    %v1366 = vpack.c.b16 %v1353, %v1352
    %v1367 = vpack.c.b16 %v1355, %v1354
    %v1368 = vpack.c.b16 %v1357, %v1356
    %v1369 = vpack.c.b16 %v1359, %v1358
    %v1370 = vpack.c.b16 %v1361, %v1360
    %v1371 = vpack.c.b16 %v1363, %v1362
    %1380 = vmatpush.bf16.msra.mxu0 %v1371
    %1381 = vmatpush.bf16.msra.mxu0 %v1370
    %1382 = vmatpush.bf16.msra.mxu0 %v1369
    %1383 = vmatpush.bf16.msra.mxu0 %v1368
    %1384 = vmatpush.bf16.msra.mxu0 %v1367
    %1385 = vmatpush.bf16.msra.mxu0 %v1366
    %1386 = vmatpush.bf16.msra.mxu0 %v1365
    %1387 = vmatpush.bf16.msra.mxu0 %v1364
    %1388 = vmatmul.bf16.gmra.mxu0 %v1313
    %v1389 = vpop.f32.mrf.mxu0
    %v1390 = vadd.f32 %v1331, %v1389
    %v1391 = vpop.f32.mrf.mxu0
    %v1392 = vadd.f32 %v1331, %v1391
    %1393 = vdwg.mxu0
    %s1394 = scalar_lea.vmem [#allocation11], 128
    %v1395 = vld [vmem:[%s1394] sm:$0xf]
    %v1396 = vld [vmem:[%s1394 + $0x4] sm:$0xf]
    %v1397 = vld [vmem:[%s1394 + $0x8] sm:$0xf]
    %v1398 = vld [vmem:[%s1394 + $0xc] sm:$0xf]
    %v1399 = vld [vmem:[%s1394 + $0x10] sm:$0xf]
    %v1400 = vld [vmem:[%s1394 + $0x14] sm:$0xf]
    %v1401 = vld [vmem:[%s1394 + $0x18] sm:$0xf]
    %v1402 = vld [vmem:[%s1394 + $0x1c] sm:$0xf]
    %v1403 = vld [vmem:[%s1394 + $0x20] sm:$0xf]
    %v1404 = vld [vmem:[%s1394 + $0x24] sm:$0xf]
    %v1405 = vld [vmem:[%s1394 + $0x28] sm:$0xf]
    %v1406 = vld [vmem:[%s1394 + $0x2c] sm:$0xf]
    %v1407 = vld [vmem:[%s1394 + $0x30] sm:$0xf]
    %v1408 = vld [vmem:[%s1394 + $0x34] sm:$0xf]
    %v1409 = vld [vmem:[%s1394 + $0x38] sm:$0xf]
    %v1410 = vld [vmem:[%s1394 + $0x3c] sm:$0xf]
    %v1411 = vperm.slane %v1262, 2
    %v1428 = vunpack.c.l.b16 %v1395
    %v1429 = vunpack.c.l.b16 %v1396
    %v1430 = vunpack.c.l.b16 %v1397
    %v1431 = vunpack.c.l.b16 %v1398
    %v1432 = vunpack.c.l.b16 %v1399
    %v1433 = vunpack.c.l.b16 %v1400
    %v1434 = vunpack.c.l.b16 %v1401
    %v1435 = vunpack.c.l.b16 %v1402
    %v1436 = vunpack.c.l.b16 %v1403
    %v1437 = vunpack.c.l.b16 %v1404
    %v1438 = vunpack.c.l.b16 %v1405
    %v1439 = vunpack.c.l.b16 %v1406
    %v1440 = vunpack.c.l.b16 %v1407
    %v1441 = vunpack.c.l.b16 %v1408
    %v1442 = vunpack.c.l.b16 %v1409
    %v1443 = vunpack.c.l.b16 %v1410
    %v1444 = vpack.c.b16 %v1429, %v1428
    %v1445 = vpack.c.b16 %v1431, %v1430
    %v1446 = vpack.c.b16 %v1433, %v1432
    %v1447 = vpack.c.b16 %v1435, %v1434
    %v1448 = vpack.c.b16 %v1437, %v1436
    %v1449 = vpack.c.b16 %v1439, %v1438
    %v1450 = vpack.c.b16 %v1441, %v1440
    %v1451 = vpack.c.b16 %v1443, %v1442
    %1460 = vmatpush.bf16.msra.mxu0 %v1451
    %1461 = vmatpush.bf16.msra.mxu0 %v1450
    %1462 = vmatpush.bf16.msra.mxu0 %v1449
    %1463 = vmatpush.bf16.msra.mxu0 %v1448
    %1464 = vmatpush.bf16.msra.mxu0 %v1447
    %1465 = vmatpush.bf16.msra.mxu0 %v1446
    %1466 = vmatpush.bf16.msra.mxu0 %v1445
    %1467 = vmatpush.bf16.msra.mxu0 %v1444
    %1468 = vmatmul.bf16.gmra.mxu0 %v1313
    %v1469 = vpop.f32.mrf.mxu0
    %v1470 = vadd.f32 %v1411, %v1469
    %v1471 = vpop.f32.mrf.mxu0
    %v1472 = vadd.f32 %v1411, %v1471
    %1473 = vdwg.mxu0
    %s1474 = scalar_lea.vmem [#allocation13], 128
    %v1475 = vld [vmem:[%s1474] sm:$0xf]
    %v1476 = vld [vmem:[%s1474 + $0x4] sm:$0xf]
    %v1477 = vld [vmem:[%s1474 + $0x8] sm:$0xf]
    %v1478 = vld [vmem:[%s1474 + $0xc] sm:$0xf]
    %v1479 = vld [vmem:[%s1474 + $0x10] sm:$0xf]
    %v1480 = vld [vmem:[%s1474 + $0x14] sm:$0xf]
    %v1481 = vld [vmem:[%s1474 + $0x18] sm:$0xf]
    %v1482 = vld [vmem:[%s1474 + $0x1c] sm:$0xf]
    %v1483 = vld [vmem:[%s1474 + $0x20] sm:$0xf]
    %v1484 = vld [vmem:[%s1474 + $0x24] sm:$0xf]
    %v1485 = vld [vmem:[%s1474 + $0x28] sm:$0xf]
    %v1486 = vld [vmem:[%s1474 + $0x2c] sm:$0xf]
    %v1487 = vld [vmem:[%s1474 + $0x30] sm:$0xf]
    %v1488 = vld [vmem:[%s1474 + $0x34] sm:$0xf]
    %v1489 = vld [vmem:[%s1474 + $0x38] sm:$0xf]
    %v1490 = vld [vmem:[%s1474 + $0x3c] sm:$0xf]
    %v1491 = vperm.slane %v1262, 4
    %v1508 = vunpack.c.l.b16 %v1475
    %v1509 = vunpack.c.l.b16 %v1476
    %v1510 = vunpack.c.l.b16 %v1477
    %v1511 = vunpack.c.l.b16 %v1478
    %v1512 = vunpack.c.l.b16 %v1479
    %v1513 = vunpack.c.l.b16 %v1480
    %v1514 = vunpack.c.l.b16 %v1481
    %v1515 = vunpack.c.l.b16 %v1482
    %v1516 = vunpack.c.l.b16 %v1483
    %v1517 = vunpack.c.l.b16 %v1484
    %v1518 = vunpack.c.l.b16 %v1485
    %v1519 = vunpack.c.l.b16 %v1486
    %v1520 = vunpack.c.l.b16 %v1487
    %v1521 = vunpack.c.l.b16 %v1488
    %v1522 = vunpack.c.l.b16 %v1489
    %v1523 = vunpack.c.l.b16 %v1490
    %v1524 = vpack.c.b16 %v1509, %v1508
    %v1525 = vpack.c.b16 %v1511, %v1510
    %v1526 = vpack.c.b16 %v1513, %v1512
    %v1527 = vpack.c.b16 %v1515, %v1514
    %v1528 = vpack.c.b16 %v1517, %v1516
    %v1529 = vpack.c.b16 %v1519, %v1518
    %v1530 = vpack.c.b16 %v1521, %v1520
    %v1531 = vpack.c.b16 %v1523, %v1522
    %1540 = vmatpush.bf16.msra.mxu0 %v1531
    %1541 = vmatpush.bf16.msra.mxu0 %v1530
    %1542 = vmatpush.bf16.msra.mxu0 %v1529
    %1543 = vmatpush.bf16.msra.mxu0 %v1528
    %1544 = vmatpush.bf16.msra.mxu0 %v1527
    %1545 = vmatpush.bf16.msra.mxu0 %v1526
    %1546 = vmatpush.bf16.msra.mxu0 %v1525
    %1547 = vmatpush.bf16.msra.mxu0 %v1524
    %1548 = vmatmul.bf16.gmra.mxu0 %v1313
    %v1549 = vpop.f32.mrf.mxu0
    %v1550 = vadd.f32 %v1491, %v1549
    %v1551 = vpop.f32.mrf.mxu0
    %v1552 = vadd.f32 %v1491, %v1551
    %1553 = vdwg.mxu0
    %v1554 = vpack.c.bf16 %v1392, %v1390
    %v1555 = vpack.c.bf16 %v1472, %v1470
    %1556 = vmatpush.bf16.xpose.msra.mxu0 0
    %1557 = vmatpush.bf16.xpose.msra.mxu0 0
    %1558 = vmatpush.bf16.xpose.msra.mxu0 0
    %1559 = vmatpush.bf16.xpose.msra.mxu0 0
    %1560 = vmatpush.bf16.xpose.msra.mxu0 0
    %1561 = vmatpush.bf16.xpose.msra.mxu0 0
    %1562 = vmatpush.bf16.xpose.msra.mxu0 0
    %1563 = vmatpush.bf16.xpose.msra.mxu0 %v1555
    %1564 = vmatmul.bf16.gmra.mxu0 %v1554
    %v1565 = vpop.f32.mrf.mxu0
    %v1566 = vadd.f32 %v217, %v1565
    %v1567 = vpop.f32.mrf.mxu0
    %v1568 = vadd.f32 %v218, %v1567
    %1569 = vdwg.mxu0
    %v1570 = vsel %vm525, %v1566, -inf
    %1571 = vmax.xlane.f32.xlu0 %v1570
    %v1572 = vpop.xlane.xlu0 %1571
    %v1573 = vsel %vm525, %v1568, -inf
    %1574 = vmax.xlane.f32.xlu0 %v1573
    %v1575 = vpop.xlane.xlu0 %1574
    %v1576 = vsub.f32 %v1566, %v1572
    %v1577 = vsub.f32 %v1568, %v1575
    %v1578 = vmul.f32 %v1576, 1.442695
    %v1579 = vpow.pop %v1578
    %v1580 = vmul.f32 %v1577, 1.442695
    %v1581 = vpow.pop %v1580
    %v1582 = vsel %vm525, %v1579, 0.0
    %1583 = vadd.xlane.f32.xlu0 %v1582
    %v1584 = vpop.xlane.xlu0 %1583
    %v1585 = vsel %vm525, %v1581, 0.0
    %1586 = vadd.xlane.f32.xlu0 %v1585
    %v1587 = vpop.xlane.xlu0 %1586
    %v1588 = vrcp.pop %v1584
    %v1589 = vrcp.pop %v1587
    %v1590 = vmul.f32 %v1579, %v1588
    %v1591 = vmul.f32 %v1581, %v1589
    %v1592 = vpack.c.bf16 %v1591, %v1590
    %v1593 = vpack.c.bf16 %v1552, %v1550
    %v1595 = vsel %vm525, %v1592, 0
    %1597 = vmatpush.bf16.msra.mxu0 0
    %1598 = vmatpush.bf16.msra.mxu0 0
    %1599 = vmatpush.bf16.msra.mxu0 0
    %1600 = vmatpush.bf16.msra.mxu0 0
    %1601 = vmatpush.bf16.msra.mxu0 0
    %1602 = vmatpush.bf16.msra.mxu0 0
    %1603 = vmatpush.bf16.msra.mxu0 0
    %1604 = vmatpush.bf16.msra.mxu0 %v1593
    %1605 = vmatmul.bf16.gmra.mxu0 %v1595
    %v1606 = vpop.f32.mrf.mxu0
    %v1607 = vadd.f32 0.0, %v1606
    %v1608 = vpop.f32.mrf.mxu0
    %v1609 = vadd.f32 0.0, %v1608
    %1610 = vdwg.mxu0
    %v1611 = vpack.c.bf16 %v1609, %v1607
    %s1612 = scalar_lea.vmem [#allocation14], 128
    %v1613 = vld [vmem:[%s1612] sm:$0xf]
    %v1614 = vld [vmem:[%s1612 + $0x4] sm:$0xf]
    %v1615 = vld [vmem:[%s1612 + $0x8] sm:$0xf]
    %v1616 = vld [vmem:[%s1612 + $0xc] sm:$0xf]
    %v1617 = vld [vmem:[%s1612 + $0x10] sm:$0xf]
    %v1618 = vld [vmem:[%s1612 + $0x14] sm:$0xf]
    %v1619 = vld [vmem:[%s1612 + $0x18] sm:$0xf]
    %v1620 = vld [vmem:[%s1612 + $0x1c] sm:$0xf]
    %v1621 = vld [vmem:[%s1612 + $0x20] sm:$0xf]
    %v1622 = vld [vmem:[%s1612 + $0x24] sm:$0xf]
    %v1623 = vld [vmem:[%s1612 + $0x28] sm:$0xf]
    %v1624 = vld [vmem:[%s1612 + $0x2c] sm:$0xf]
    %v1625 = vld [vmem:[%s1612 + $0x30] sm:$0xf]
    %v1626 = vld [vmem:[%s1612 + $0x34] sm:$0xf]
    %v1627 = vld [vmem:[%s1612 + $0x38] sm:$0xf]
    %v1628 = vld [vmem:[%s1612 + $0x3c] sm:$0xf]
    %s1629 = scalar_lea.vmem [#allocation10], 192
    %v1630 = vld [vmem:[%s1629] sm:$0xf]
    %v1631 = vld [vmem:[%s1629 + $0x4] sm:$0xf]
    %v1632 = vld [vmem:[%s1629 + $0x8] sm:$0xf]
    %v1633 = vld [vmem:[%s1629 + $0xc] sm:$0xf]
    %v1634 = vld [vmem:[%s1629 + $0x10] sm:$0xf]
    %v1635 = vld [vmem:[%s1629 + $0x14] sm:$0xf]
    %v1636 = vld [vmem:[%s1629 + $0x18] sm:$0xf]
    %v1637 = vld [vmem:[%s1629 + $0x1c] sm:$0xf]
    %v1638 = vld [vmem:[%s1629 + $0x20] sm:$0xf]
    %v1639 = vld [vmem:[%s1629 + $0x24] sm:$0xf]
    %v1640 = vld [vmem:[%s1629 + $0x28] sm:$0xf]
    %v1641 = vld [vmem:[%s1629 + $0x2c] sm:$0xf]
    %v1642 = vld [vmem:[%s1629 + $0x30] sm:$0xf]
    %v1643 = vld [vmem:[%s1629 + $0x34] sm:$0xf]
    %v1644 = vld [vmem:[%s1629 + $0x38] sm:$0xf]
    %v1645 = vld [vmem:[%s1629 + $0x3c] sm:$0xf]
    %v1646 = vperm.slane %v1262, 1
    %v1663 = vunpack.c.l.b16 %v1630
    %v1664 = vunpack.c.l.b16 %v1631
    %v1665 = vunpack.c.l.b16 %v1632
    %v1666 = vunpack.c.l.b16 %v1633
    %v1667 = vunpack.c.l.b16 %v1634
    %v1668 = vunpack.c.l.b16 %v1635
    %v1669 = vunpack.c.l.b16 %v1636
    %v1670 = vunpack.c.l.b16 %v1637
    %v1671 = vunpack.c.l.b16 %v1638
    %v1672 = vunpack.c.l.b16 %v1639
    %v1673 = vunpack.c.l.b16 %v1640
    %v1674 = vunpack.c.l.b16 %v1641
    %v1675 = vunpack.c.l.b16 %v1642
    %v1676 = vunpack.c.l.b16 %v1643
    %v1677 = vunpack.c.l.b16 %v1644
    %v1678 = vunpack.c.l.b16 %v1645
    %v1679 = vpack.c.b16 %v1664, %v1663
    %v1680 = vpack.c.b16 %v1666, %v1665
    %v1681 = vpack.c.b16 %v1668, %v1667
    %v1682 = vpack.c.b16 %v1670, %v1669
    %v1683 = vpack.c.b16 %v1672, %v1671
    %v1684 = vpack.c.b16 %v1674, %v1673
    %v1685 = vpack.c.b16 %v1676, %v1675
    %v1686 = vpack.c.b16 %v1678, %v1677
    %1695 = vmatpush.bf16.msra.mxu0 %v1686
    %1696 = vmatpush.bf16.msra.mxu0 %v1685
    %1697 = vmatpush.bf16.msra.mxu0 %v1684
    %1698 = vmatpush.bf16.msra.mxu0 %v1683
    %1699 = vmatpush.bf16.msra.mxu0 %v1682
    %1700 = vmatpush.bf16.msra.mxu0 %v1681
    %1701 = vmatpush.bf16.msra.mxu0 %v1680
    %1702 = vmatpush.bf16.msra.mxu0 %v1679
    %1703 = vmatmul.bf16.gmra.mxu0 %v1313
    %v1704 = vpop.f32.mrf.mxu0
    %v1705 = vadd.f32 %v1646, %v1704
    %v1706 = vpop.f32.mrf.mxu0
    %v1707 = vadd.f32 %v1646, %v1706
    %1708 = vdwg.mxu0
    %s1709 = scalar_lea.vmem [#allocation11], 192
    %v1710 = vld [vmem:[%s1709] sm:$0xf]
    %v1711 = vld [vmem:[%s1709 + $0x4] sm:$0xf]
    %v1712 = vld [vmem:[%s1709 + $0x8] sm:$0xf]
    %v1713 = vld [vmem:[%s1709 + $0xc] sm:$0xf]
    %v1714 = vld [vmem:[%s1709 + $0x10] sm:$0xf]
    %v1715 = vld [vmem:[%s1709 + $0x14] sm:$0xf]
    %v1716 = vld [vmem:[%s1709 + $0x18] sm:$0xf]
    %v1717 = vld [vmem:[%s1709 + $0x1c] sm:$0xf]
    %v1718 = vld [vmem:[%s1709 + $0x20] sm:$0xf]
    %v1719 = vld [vmem:[%s1709 + $0x24] sm:$0xf]
    %v1720 = vld [vmem:[%s1709 + $0x28] sm:$0xf]
    %v1721 = vld [vmem:[%s1709 + $0x2c] sm:$0xf]
    %v1722 = vld [vmem:[%s1709 + $0x30] sm:$0xf]
    %v1723 = vld [vmem:[%s1709 + $0x34] sm:$0xf]
    %v1724 = vld [vmem:[%s1709 + $0x38] sm:$0xf]
    %v1725 = vld [vmem:[%s1709 + $0x3c] sm:$0xf]
    %v1726 = vperm.slane %v1262, 3
    %v1743 = vunpack.c.l.b16 %v1710
    %v1744 = vunpack.c.l.b16 %v1711
    %v1745 = vunpack.c.l.b16 %v1712
    %v1746 = vunpack.c.l.b16 %v1713
    %v1747 = vunpack.c.l.b16 %v1714
    %v1748 = vunpack.c.l.b16 %v1715
    %v1749 = vunpack.c.l.b16 %v1716
    %v1750 = vunpack.c.l.b16 %v1717
    %v1751 = vunpack.c.l.b16 %v1718
    %v1752 = vunpack.c.l.b16 %v1719
    %v1753 = vunpack.c.l.b16 %v1720
    %v1754 = vunpack.c.l.b16 %v1721
    %v1755 = vunpack.c.l.b16 %v1722
    %v1756 = vunpack.c.l.b16 %v1723
    %v1757 = vunpack.c.l.b16 %v1724
    %v1758 = vunpack.c.l.b16 %v1725
    %v1759 = vpack.c.b16 %v1744, %v1743
    %v1760 = vpack.c.b16 %v1746, %v1745
    %v1761 = vpack.c.b16 %v1748, %v1747
    %v1762 = vpack.c.b16 %v1750, %v1749
    %v1763 = vpack.c.b16 %v1752, %v1751
    %v1764 = vpack.c.b16 %v1754, %v1753
    %v1765 = vpack.c.b16 %v1756, %v1755
    %v1766 = vpack.c.b16 %v1758, %v1757
    %1775 = vmatpush.bf16.msra.mxu0 %v1766
    %1776 = vmatpush.bf16.msra.mxu0 %v1765
    %1777 = vmatpush.bf16.msra.mxu0 %v1764
    %1778 = vmatpush.bf16.msra.mxu0 %v1763
    %1779 = vmatpush.bf16.msra.mxu0 %v1762
    %1780 = vmatpush.bf16.msra.mxu0 %v1761
    %1781 = vmatpush.bf16.msra.mxu0 %v1760
    %1782 = vmatpush.bf16.msra.mxu0 %v1759
    %1783 = vmatmul.bf16.gmra.mxu0 %v1313
    %v1784 = vpop.f32.mrf.mxu0
    %v1785 = vadd.f32 %v1726, %v1784
    %v1786 = vpop.f32.mrf.mxu0
    %v1787 = vadd.f32 %v1726, %v1786
    %1788 = vdwg.mxu0
    %s1789 = scalar_lea.vmem [#allocation13], 192
    %v1790 = vld [vmem:[%s1789] sm:$0xf]
    %v1791 = vld [vmem:[%s1789 + $0x4] sm:$0xf]
    %v1792 = vld [vmem:[%s1789 + $0x8] sm:$0xf]
    %v1793 = vld [vmem:[%s1789 + $0xc] sm:$0xf]
    %v1794 = vld [vmem:[%s1789 + $0x10] sm:$0xf]
    %v1795 = vld [vmem:[%s1789 + $0x14] sm:$0xf]
    %v1796 = vld [vmem:[%s1789 + $0x18] sm:$0xf]
    %v1797 = vld [vmem:[%s1789 + $0x1c] sm:$0xf]
    %v1798 = vld [vmem:[%s1789 + $0x20] sm:$0xf]
    %v1799 = vld [vmem:[%s1789 + $0x24] sm:$0xf]
    %v1800 = vld [vmem:[%s1789 + $0x28] sm:$0xf]
    %v1801 = vld [vmem:[%s1789 + $0x2c] sm:$0xf]
    %v1802 = vld [vmem:[%s1789 + $0x30] sm:$0xf]
    %v1803 = vld [vmem:[%s1789 + $0x34] sm:$0xf]
    %v1804 = vld [vmem:[%s1789 + $0x38] sm:$0xf]
    %v1805 = vld [vmem:[%s1789 + $0x3c] sm:$0xf]
    %v1806 = vperm.slane %v1262, 5
    %v1823 = vunpack.c.l.b16 %v1790
    %v1824 = vunpack.c.l.b16 %v1791
    %v1825 = vunpack.c.l.b16 %v1792
    %v1826 = vunpack.c.l.b16 %v1793
    %v1827 = vunpack.c.l.b16 %v1794
    %v1828 = vunpack.c.l.b16 %v1795
    %v1829 = vunpack.c.l.b16 %v1796
    %v1830 = vunpack.c.l.b16 %v1797
    %v1831 = vunpack.c.l.b16 %v1798
    %v1832 = vunpack.c.l.b16 %v1799
    %v1833 = vunpack.c.l.b16 %v1800
    %v1834 = vunpack.c.l.b16 %v1801
    %v1835 = vunpack.c.l.b16 %v1802
    %v1836 = vunpack.c.l.b16 %v1803
    %v1837 = vunpack.c.l.b16 %v1804
    %v1838 = vunpack.c.l.b16 %v1805
    %v1839 = vpack.c.b16 %v1824, %v1823
    %v1840 = vpack.c.b16 %v1826, %v1825
    %v1841 = vpack.c.b16 %v1828, %v1827
    %v1842 = vpack.c.b16 %v1830, %v1829
    %v1843 = vpack.c.b16 %v1832, %v1831
    %v1844 = vpack.c.b16 %v1834, %v1833
    %v1845 = vpack.c.b16 %v1836, %v1835
    %v1846 = vpack.c.b16 %v1838, %v1837
    %1855 = vmatpush.bf16.msra.mxu0 %v1846
    %1856 = vmatpush.bf16.msra.mxu0 %v1845
    %1857 = vmatpush.bf16.msra.mxu0 %v1844
    %1858 = vmatpush.bf16.msra.mxu0 %v1843
    %1859 = vmatpush.bf16.msra.mxu0 %v1842
    %1860 = vmatpush.bf16.msra.mxu0 %v1841
    %1861 = vmatpush.bf16.msra.mxu0 %v1840
    %1862 = vmatpush.bf16.msra.mxu0 %v1839
    %1863 = vmatmul.bf16.gmra.mxu0 %v1313
    %v1864 = vpop.f32.mrf.mxu0
    %v1865 = vadd.f32 %v1806, %v1864
    %v1866 = vpop.f32.mrf.mxu0
    %v1867 = vadd.f32 %v1806, %v1866
    %1868 = vdwg.mxu0
    %v1869 = vpack.c.bf16 %v1707, %v1705
    %v1870 = vpack.c.bf16 %v1787, %v1785
    %1871 = vmatpush.bf16.xpose.msra.mxu0 0
    %1872 = vmatpush.bf16.xpose.msra.mxu0 0
    %1873 = vmatpush.bf16.xpose.msra.mxu0 0
    %1874 = vmatpush.bf16.xpose.msra.mxu0 0
    %1875 = vmatpush.bf16.xpose.msra.mxu0 0
    %1876 = vmatpush.bf16.xpose.msra.mxu0 0
    %1877 = vmatpush.bf16.xpose.msra.mxu0 0
    %1878 = vmatpush.bf16.xpose.msra.mxu0 %v1870
    %1879 = vmatmul.bf16.gmra.mxu0 %v1869
    %v1880 = vpop.f32.mrf.mxu0
    %v1881 = vadd.f32 %v217, %v1880
    %v1882 = vpop.f32.mrf.mxu0
    %v1883 = vadd.f32 %v218, %v1882
    %1884 = vdwg.mxu0
    %v1885 = vsel %vm525, %v1881, -inf
    %1886 = vmax.xlane.f32.xlu0 %v1885
    %v1887 = vpop.xlane.xlu0 %1886
    %v1888 = vsel %vm525, %v1883, -inf
    %1889 = vmax.xlane.f32.xlu0 %v1888
    %v1890 = vpop.xlane.xlu0 %1889
    %v1891 = vsub.f32 %v1881, %v1887
    %v1892 = vsub.f32 %v1883, %v1890
    %v1893 = vmul.f32 %v1891, 1.442695
    %v1894 = vpow.pop %v1893
    %v1895 = vmul.f32 %v1892, 1.442695
    %v1896 = vpow.pop %v1895
    %v1897 = vsel %vm525, %v1894, 0.0
    %1898 = vadd.xlane.f32.xlu0 %v1897
    %v1899 = vpop.xlane.xlu0 %1898
    %v1900 = vsel %vm525, %v1896, 0.0
    %1901 = vadd.xlane.f32.xlu0 %v1900
    %v1902 = vpop.xlane.xlu0 %1901
    %v1903 = vrcp.pop %v1899
    %v1904 = vrcp.pop %v1902
    %v1905 = vmul.f32 %v1894, %v1903
    %v1906 = vmul.f32 %v1896, %v1904
    %v1907 = vpack.c.bf16 %v1906, %v1905
    %v1908 = vpack.c.bf16 %v1867, %v1865
    %v1910 = vsel %vm525, %v1907, 0
    %1912 = vmatpush.bf16.msra.mxu0 0
    %1913 = vmatpush.bf16.msra.mxu0 0
    %1914 = vmatpush.bf16.msra.mxu0 0
    %1915 = vmatpush.bf16.msra.mxu0 0
    %1916 = vmatpush.bf16.msra.mxu0 0
    %1917 = vmatpush.bf16.msra.mxu0 0
    %1918 = vmatpush.bf16.msra.mxu0 0
    %1919 = vmatpush.bf16.msra.mxu0 %v1908
    %1920 = vmatmul.bf16.gmra.mxu0 %v1910
    %v1921 = vpop.f32.mrf.mxu0
    %v1922 = vadd.f32 0.0, %v1921
    %v1923 = vpop.f32.mrf.mxu0
    %v1924 = vadd.f32 0.0, %v1923
    %1925 = vdwg.mxu0
    %v1926 = vpack.c.bf16 %v1924, %v1922
    %s1927 = scalar_lea.vmem [#allocation14], 192
    %v1928 = vld [vmem:[%s1927] sm:$0xf]
    %v1929 = vld [vmem:[%s1927 + $0x4] sm:$0xf]
    %v1930 = vld [vmem:[%s1927 + $0x8] sm:$0xf]
    %v1931 = vld [vmem:[%s1927 + $0xc] sm:$0xf]
    %v1932 = vld [vmem:[%s1927 + $0x10] sm:$0xf]
    %v1933 = vld [vmem:[%s1927 + $0x14] sm:$0xf]
    %v1934 = vld [vmem:[%s1927 + $0x18] sm:$0xf]
    %v1935 = vld [vmem:[%s1927 + $0x1c] sm:$0xf]
    %v1936 = vld [vmem:[%s1927 + $0x20] sm:$0xf]
    %v1937 = vld [vmem:[%s1927 + $0x24] sm:$0xf]
    %v1938 = vld [vmem:[%s1927 + $0x28] sm:$0xf]
    %v1939 = vld [vmem:[%s1927 + $0x2c] sm:$0xf]
    %v1940 = vld [vmem:[%s1927 + $0x30] sm:$0xf]
    %v1941 = vld [vmem:[%s1927 + $0x34] sm:$0xf]
    %v1942 = vld [vmem:[%s1927 + $0x38] sm:$0xf]
    %v1943 = vld [vmem:[%s1927 + $0x3c] sm:$0xf]
    %v1960 = vunpack.c.l.b16 %v1928
    %v1961 = vunpack.c.l.b16 %v1929
    %v1962 = vunpack.c.l.b16 %v1930
    %v1963 = vunpack.c.l.b16 %v1931
    %v1964 = vunpack.c.l.b16 %v1932
    %v1965 = vunpack.c.l.b16 %v1933
    %v1966 = vunpack.c.l.b16 %v1934
    %v1967 = vunpack.c.l.b16 %v1935
    %v1968 = vunpack.c.l.b16 %v1936
    %v1969 = vunpack.c.l.b16 %v1937
    %v1970 = vunpack.c.l.b16 %v1938
    %v1971 = vunpack.c.l.b16 %v1939
    %v1972 = vunpack.c.l.b16 %v1940
    %v1973 = vunpack.c.l.b16 %v1941
    %v1974 = vunpack.c.l.b16 %v1942
    %v1975 = vunpack.c.l.b16 %v1943
    %v1976 = vpack.c.b16 %v1961, %v1960
    %v1977 = vpack.c.b16 %v1963, %v1962
    %v1978 = vpack.c.b16 %v1965, %v1964
    %v1979 = vpack.c.b16 %v1967, %v1966
    %v1980 = vpack.c.b16 %v1969, %v1968
    %v1981 = vpack.c.b16 %v1971, %v1970
    %v1982 = vpack.c.b16 %v1973, %v1972
    %v1983 = vpack.c.b16 %v1975, %v1974
    %1992 = vmatpush.bf16.msra.mxu0 %v1983
    %1993 = vmatpush.bf16.msra.mxu0 %v1982
    %1994 = vmatpush.bf16.msra.mxu0 %v1981
    %1995 = vmatpush.bf16.msra.mxu0 %v1980
    %1996 = vmatpush.bf16.msra.mxu0 %v1979
    %1997 = vmatpush.bf16.msra.mxu0 %v1978
    %1998 = vmatpush.bf16.msra.mxu0 %v1977
    %1999 = vmatpush.bf16.msra.mxu0 %v1976
    %2000 = vmatmul.bf16.gmra.mxu0 %v1926
    %v2001 = vpop.f32.mrf.mxu0
    %v2002 = vadd.f32 0.0, %v2001
    %v2003 = vpop.f32.mrf.mxu0
    %v2004 = vadd.f32 0.0, %v2003
    %2005 = vdwg.mxu0
    %v2022 = vunpack.c.l.b16 %v1613
    %v2023 = vunpack.c.l.b16 %v1614
    %v2024 = vunpack.c.l.b16 %v1615
    %v2025 = vunpack.c.l.b16 %v1616
    %v2026 = vunpack.c.l.b16 %v1617
    %v2027 = vunpack.c.l.b16 %v1618
    %v2028 = vunpack.c.l.b16 %v1619
    %v2029 = vunpack.c.l.b16 %v1620
    %v2030 = vunpack.c.l.b16 %v1621
    %v2031 = vunpack.c.l.b16 %v1622
    %v2032 = vunpack.c.l.b16 %v1623
    %v2033 = vunpack.c.l.b16 %v1624
    %v2034 = vunpack.c.l.b16 %v1625
    %v2035 = vunpack.c.l.b16 %v1626
    %v2036 = vunpack.c.l.b16 %v1627
    %v2037 = vunpack.c.l.b16 %v1628
    %v2038 = vpack.c.b16 %v2023, %v2022
    %v2039 = vpack.c.b16 %v2025, %v2024
    %v2040 = vpack.c.b16 %v2027, %v2026
    %v2041 = vpack.c.b16 %v2029, %v2028
    %v2042 = vpack.c.b16 %v2031, %v2030
    %v2043 = vpack.c.b16 %v2033, %v2032
    %v2044 = vpack.c.b16 %v2035, %v2034
    %v2045 = vpack.c.b16 %v2037, %v2036
    %2054 = vmatpush.bf16.msra.mxu0 %v2045
    %2055 = vmatpush.bf16.msra.mxu0 %v2044
    %2056 = vmatpush.bf16.msra.mxu0 %v2043
    %2057 = vmatpush.bf16.msra.mxu0 %v2042
    %2058 = vmatpush.bf16.msra.mxu0 %v2041
    %2059 = vmatpush.bf16.msra.mxu0 %v2040
    %2060 = vmatpush.bf16.msra.mxu0 %v2039
    %2061 = vmatpush.bf16.msra.mxu0 %v2038
    %2062 = vmatmul.bf16.gmra.mxu0 %v1611
    %v2063 = vpop.f32.mrf.mxu0
    %v2064 = vadd.f32 %v2002, %v2063
    %v2065 = vpop.f32.mrf.mxu0
    %v2066 = vadd.f32 %v2004, %v2065
    %2067 = vdwg.mxu0
    %v2068 = vadd.f32 %v1258, %v2064
    %v2069 = vadd.f32 %v1259, %v2066
    %v2070 = vperm.slane %v1261, 4
    %v2071 = vadd.f32 %v2068, %v2070
    %v2072 = vadd.f32 %v2069, %v2070
    %2073 = vadd.xlane.f32.xlu0 %v2071
    %v2074 = vpop.xlane.xlu0 %2073
    %2075 = vadd.xlane.f32.xlu0 %v2072
    %v2076 = vpop.xlane.xlu0 %2075
    %v2077 = vmul.f32 %v2074, 0.03125
    %v2078 = vmul.f32 %v2076, 0.03125
    %v2079 = vmul.f32 %v2071, %v2071
    %v2080 = vmul.f32 %v2072, %v2072
    %2081 = vadd.xlane.f32.xlu0 %v2079
    %v2082 = vpop.xlane.xlu0 %2081
    %2083 = vadd.xlane.f32.xlu0 %v2080
    %v2084 = vpop.xlane.xlu0 %2083
    %v2085 = vmul.f32 %v2082, 0.03125
    %v2086 = vmul.f32 %v2084, 0.03125
    %v2087 = vmul.f32 %v2077, %v2077
    %v2088 = vmul.f32 %v2078, %v2078
    %v2089 = vsub.f32 %v2085, %v2087
    %v2090 = vsub.f32 %v2086, %v2088
    %v2091 = vsub.f32 %v2071, %v2077
    %v2092 = vsub.f32 %v2072, %v2078
    %v2093 = vadd.f32 %v2089, 1e-05
    %v2094 = vadd.f32 %v2090, 1e-05
    %v2095 = vrsqrt.pop %v2093
    %v2096 = vmul.f32 %v2095, %v2093
    %v2097 = vmul.f32 %v2096, %v2095
    %v2098 = vmul.f32 0.5, %v2097
    %v2099 = vsub.f32 1.5, %v2098
    %v2100 = vmul.f32 %v2095, %v2099
    %vm2101 = vweird.f32 %v2093
    %vm2102 = vweird.f32 %v2095
    %vm2103 = vmor %vm2101, %vm2102
    %v2104 = vsel %vm2103, %v2095, %v2100
    %v2105 = vrsqrt.pop %v2094
    %v2106 = vmul.f32 %v2105, %v2094
    %v2107 = vmul.f32 %v2106, %v2105
    %v2108 = vmul.f32 0.5, %v2107
    %v2109 = vsub.f32 1.5, %v2108
    %v2110 = vmul.f32 %v2105, %v2109
    %vm2111 = vweird.f32 %v2094
    %vm2112 = vweird.f32 %v2105
    %vm2113 = vmor %vm2111, %vm2112
    %v2114 = vsel %vm2113, %v2105, %v2110
    %v2115 = vmul.f32 %v2091, %v2104
    %v2116 = vmul.f32 %v2092, %v2114
    %v2117 = vperm.slane %v1261, 2
    %v2118 = vmul.f32 %v2115, %v2117
    %v2119 = vmul.f32 %v2116, %v2117
    %v2120 = vperm.slane %v1261, 3
    %v2121 = vadd.f32 %v2118, %v2120
    %v2122 = vadd.f32 %v2119, %v2120
    %v2123 = vpack.c.bf16 %v2122, %v2121
    %s2124 = scalar_lea.vmem [#allocation16], 64
    %v2125 = vld [vmem:[%s2124] sm:$0xf]
    %v2126 = vld [vmem:[%s2124 + $0x4] sm:$0xf]
    %v2127 = vld [vmem:[%s2124 + $0x8] sm:$0xf]
    %v2128 = vld [vmem:[%s2124 + $0xc] sm:$0xf]
    %v2129 = vld [vmem:[%s2124 + $0x10] sm:$0xf]
    %v2130 = vld [vmem:[%s2124 + $0x14] sm:$0xf]
    %v2131 = vld [vmem:[%s2124 + $0x18] sm:$0xf]
    %v2132 = vld [vmem:[%s2124 + $0x1c] sm:$0xf]
    %v2133 = vld [vmem:[%s2124 + $0x20] sm:$0xf]
    %v2134 = vld [vmem:[%s2124 + $0x24] sm:$0xf]
    %v2135 = vld [vmem:[%s2124 + $0x28] sm:$0xf]
    %v2136 = vld [vmem:[%s2124 + $0x2c] sm:$0xf]
    %v2137 = vld [vmem:[%s2124 + $0x30] sm:$0xf]
    %v2138 = vld [vmem:[%s2124 + $0x34] sm:$0xf]
    %v2139 = vld [vmem:[%s2124 + $0x38] sm:$0xf]
    %v2140 = vld [vmem:[%s2124 + $0x3c] sm:$0xf]
    %v2141 = vperm.slane %v1261, 6
    %v2158 = vunpack.c.l.b16 %v2125
    %v2159 = vunpack.c.l.b16 %v2126
    %v2160 = vunpack.c.l.b16 %v2127
    %v2161 = vunpack.c.l.b16 %v2128
    %v2162 = vunpack.c.l.b16 %v2129
    %v2163 = vunpack.c.l.b16 %v2130
    %v2164 = vunpack.c.l.b16 %v2131
    %v2165 = vunpack.c.l.b16 %v2132
    %v2166 = vunpack.c.l.b16 %v2133
    %v2167 = vunpack.c.l.b16 %v2134
    %v2168 = vunpack.c.l.b16 %v2135
    %v2169 = vunpack.c.l.b16 %v2136
    %v2170 = vunpack.c.l.b16 %v2137
    %v2171 = vunpack.c.l.b16 %v2138
    %v2172 = vunpack.c.l.b16 %v2139
    %v2173 = vunpack.c.l.b16 %v2140
    %v2174 = vpack.c.b16 %v2159, %v2158
    %v2175 = vpack.c.b16 %v2161, %v2160
    %v2176 = vpack.c.b16 %v2163, %v2162
    %v2177 = vpack.c.b16 %v2165, %v2164
    %v2178 = vpack.c.b16 %v2167, %v2166
    %v2179 = vpack.c.b16 %v2169, %v2168
    %v2180 = vpack.c.b16 %v2171, %v2170
    %v2181 = vpack.c.b16 %v2173, %v2172
    %2190 = vmatpush.bf16.msra.mxu0 %v2181
    %2191 = vmatpush.bf16.msra.mxu0 %v2180
    %2192 = vmatpush.bf16.msra.mxu0 %v2179
    %2193 = vmatpush.bf16.msra.mxu0 %v2178
    %2194 = vmatpush.bf16.msra.mxu0 %v2177
    %2195 = vmatpush.bf16.msra.mxu0 %v2176
    %2196 = vmatpush.bf16.msra.mxu0 %v2175
    %2197 = vmatpush.bf16.msra.mxu0 %v2174
    %2198 = vmatmul.bf16.gmra.mxu0 %v2123
    %v2199 = vpop.f32.mrf.mxu0
    %v2200 = vadd.f32 %v2141, %v2199
    %v2201 = vpop.f32.mrf.mxu0
    %v2202 = vadd.f32 %v2141, %v2201
    %2203 = vdwg.mxu0
    %v2204 = vmul.f32 %v2200, 0.5
    %v2205 = vmul.f32 %v2202, 0.5
    %v2206 = vmul.f32 %v2200, %v2200
    %v2207 = vmul.f32 %v2202, %v2202
    %v2208 = vmul.f32 %v2200, %v2206
    %v2209 = vmul.f32 %v2202, %v2207
    %v2210 = vmul.f32 %v2208, 0.044715
    %v2211 = vmul.f32 %v2209, 0.044715
    %v2212 = vadd.f32 %v2200, %v2210
    %v2213 = vadd.f32 %v2202, %v2211
    %v2214 = vmul.f32 %v2212, 0.7978846
    %v2215 = vmul.f32 %v2213, 0.7978846
    %v2216 = vtanh.pop %v2214
    %v2217 = vtanh.pop %v2215
    %v2218 = vadd.f32 %v2216, 1.0
    %v2219 = vadd.f32 %v2217, 1.0
    %v2220 = vmul.f32 %v2204, %v2218
    %v2221 = vmul.f32 %v2205, %v2219
    %v2222 = vpack.c.bf16 %v2221, %v2220
    %s2223 = scalar_lea.vmem [#allocation17], 64
    %v2224 = vld [vmem:[%s2223] sm:$0xf]
    %v2225 = vld [vmem:[%s2223 + $0x4] sm:$0xf]
    %v2226 = vld [vmem:[%s2223 + $0x8] sm:$0xf]
    %v2227 = vld [vmem:[%s2223 + $0xc] sm:$0xf]
    %v2228 = vld [vmem:[%s2223 + $0x10] sm:$0xf]
    %v2229 = vld [vmem:[%s2223 + $0x14] sm:$0xf]
    %v2230 = vld [vmem:[%s2223 + $0x18] sm:$0xf]
    %v2231 = vld [vmem:[%s2223 + $0x1c] sm:$0xf]
    %v2232 = vld [vmem:[%s2223 + $0x20] sm:$0xf]
    %v2233 = vld [vmem:[%s2223 + $0x24] sm:$0xf]
    %v2234 = vld [vmem:[%s2223 + $0x28] sm:$0xf]
    %v2235 = vld [vmem:[%s2223 + $0x2c] sm:$0xf]
    %v2236 = vld [vmem:[%s2223 + $0x30] sm:$0xf]
    %v2237 = vld [vmem:[%s2223 + $0x34] sm:$0xf]
    %v2238 = vld [vmem:[%s2223 + $0x38] sm:$0xf]
    %v2239 = vld [vmem:[%s2223 + $0x3c] sm:$0xf]
    %v2256 = vunpack.c.l.b16 %v2224
    %v2257 = vunpack.c.l.b16 %v2225
    %v2258 = vunpack.c.l.b16 %v2226
    %v2259 = vunpack.c.l.b16 %v2227
    %v2260 = vunpack.c.l.b16 %v2228
    %v2261 = vunpack.c.l.b16 %v2229
    %v2262 = vunpack.c.l.b16 %v2230
    %v2263 = vunpack.c.l.b16 %v2231
    %v2264 = vunpack.c.l.b16 %v2232
    %v2265 = vunpack.c.l.b16 %v2233
    %v2266 = vunpack.c.l.b16 %v2234
    %v2267 = vunpack.c.l.b16 %v2235
    %v2268 = vunpack.c.l.b16 %v2236
    %v2269 = vunpack.c.l.b16 %v2237
    %v2270 = vunpack.c.l.b16 %v2238
    %v2271 = vunpack.c.l.b16 %v2239
    %v2272 = vpack.c.b16 %v2257, %v2256
    %v2273 = vpack.c.b16 %v2259, %v2258
    %v2274 = vpack.c.b16 %v2261, %v2260
    %v2275 = vpack.c.b16 %v2263, %v2262
    %v2276 = vpack.c.b16 %v2265, %v2264
    %v2277 = vpack.c.b16 %v2267, %v2266
    %v2278 = vpack.c.b16 %v2269, %v2268
    %v2279 = vpack.c.b16 %v2271, %v2270
    %2288 = vmatpush.bf16.msra.mxu0 %v2279
    %2289 = vmatpush.bf16.msra.mxu0 %v2278
    %2290 = vmatpush.bf16.msra.mxu0 %v2277
    %2291 = vmatpush.bf16.msra.mxu0 %v2276
    %2292 = vmatpush.bf16.msra.mxu0 %v2275
    %2293 = vmatpush.bf16.msra.mxu0 %v2274
    %2294 = vmatpush.bf16.msra.mxu0 %v2273
    %2295 = vmatpush.bf16.msra.mxu0 %v2272
    %2296 = vmatmul.bf16.gmra.mxu0 %v2222
    %v2297 = vpop.f32.mrf.mxu0
    %v2298 = vadd.f32 0.0, %v2297
    %v2299 = vpop.f32.mrf.mxu0
    %v2300 = vadd.f32 0.0, %v2299
    %2301 = vdwg.mxu0
    %v2302 = vadd.f32 %v2071, %v2298
    %v2303 = vadd.f32 %v2072, %v2300
    %v2304 = vperm.slane %v1261, 5
    %v2305 = vadd.f32 %v2302, %v2304
    %v2306 = vadd.f32 %v2303, %v2304
    %v2307 = vld [vmem:[#allocation7] sm:$0xff]
    %v2309 = vsel %vm525, %v2307, 0
    %2311 = vmatpush.msra.mxu0 0.0
    %2312 = vmatpush.msra.mxu0 0.0
    %2313 = vmatpush.msra.mxu0 0.0
    %2314 = vmatpush.msra.mxu0 0.0
    %2315 = vmatpush.msra.mxu0 0.0
    %2316 = vmatpush.msra.mxu0 0.0
    %2317 = vmatpush.msra.mxu0 0.0
    %2318 = vmatpush.msra.mxu0 0.0
    %2319 = vmatpush.msra.mxu0 0.0
    %2320 = vmatpush.msra.mxu0 0.0
    %2321 = vmatpush.msra.mxu0 0.0
    %2322 = vmatpush.msra.mxu0 0.0
    %2323 = vmatpush.msra.mxu0 0.0
    %2324 = vmatpush.msra.mxu0 0.0
    %2325 = vmatpush.msra.mxu0 %v2306
    %2326 = vmatpush.msra.mxu0 %v2305
    %2327 = vmatmul.f32.gmra.mxu0 %v2309
    %v2328 = vpop.f32.mrf.mxu0
    %v2329 = vadd.f32 0.0, %v2328
    %2330 = vdwg.mxu0
    %v2331 = vld [vmem:[%s10] sm:$0x3]
    %2332 = vadd.xlane.f32.xlu0 %v2329
    %v2333 = vpop.xlane.xlu0 %2332
    %v2334 = vmul.f32 %v2333, 0.03125
    %v2335 = vmul.f32 %v2329, %v2329
    %2336 = vadd.xlane.f32.xlu0 %v2335
    %v2337 = vpop.xlane.xlu0 %2336
    %v2338 = vmul.f32 %v2337, 0.03125
    %v2339 = vmul.f32 %v2334, %v2334
    %v2340 = vsub.f32 %v2338, %v2339
    %v2341 = vsub.f32 %v2329, %v2334
    %v2342 = vadd.f32 %v2340, 1e-05
    %v2343 = vrsqrt.pop %v2342
    %v2344 = vmul.f32 %v2343, %v2342
    %v2345 = vmul.f32 %v2344, %v2343
    %v2346 = vmul.f32 0.5, %v2345
    %v2347 = vsub.f32 1.5, %v2346
    %v2348 = vmul.f32 %v2343, %v2347
    %vm2349 = vweird.f32 %v2342
    %vm2350 = vweird.f32 %v2343
    %vm2351 = vmor %vm2349, %vm2350
    %v2352 = vsel %vm2351, %v2343, %v2348
    %v2353 = vmul.f32 %v2341, %v2352
    %v2354 = vperm.slane %v2331, 0
    %v2355 = vmul.f32 %v2353, %v2354
    %v2356 = vperm.slane %v2331, 1
    %v2357 = vadd.f32 %v2355, %v2356
    %v2358 = vpack.c.bf16 %v2357, %v2357
    %v2359 = vld [vmem:[#allocation19] sm:$0xf]
    %v2360 = vld [vmem:[#allocation19 + $0x4] sm:$0xf]
    %v2361 = vld [vmem:[#allocation19 + $0x8] sm:$0xf]
    %v2362 = vld [vmem:[#allocation19 + $0xc] sm:$0xf]
    %v2363 = vld [vmem:[#allocation19 + $0x10] sm:$0xf]
    %v2364 = vld [vmem:[#allocation19 + $0x14] sm:$0xf]
    %v2365 = vld [vmem:[#allocation19 + $0x18] sm:$0xf]
    %v2366 = vld [vmem:[#allocation19 + $0x1c] sm:$0xf]
    %v2367 = vld [vmem:[#allocation19 + $0x20] sm:$0xf]
    %v2368 = vld [vmem:[#allocation19 + $0x24] sm:$0xf]
    %v2369 = vld [vmem:[#allocation19 + $0x28] sm:$0xf]
    %v2370 = vld [vmem:[#allocation19 + $0x2c] sm:$0xf]
    %v2371 = vld [vmem:[#allocation19 + $0x30] sm:$0xf]
    %v2372 = vld [vmem:[#allocation19 + $0x34] sm:$0xf]
    %v2373 = vld [vmem:[#allocation19 + $0x38] sm:$0xf]
    %v2374 = vld [vmem:[#allocation19 + $0x3c] sm:$0xf]
    %v2375 = vld [vmem:[%s12] sm:$0x1]
    %v2377 = vperm.slane %v2375, 0
    %v2395 = vunpack.c.l.b16 %v2359
    %v2396 = vunpack.c.l.b16 %v2360
    %v2397 = vunpack.c.l.b16 %v2361
    %v2398 = vunpack.c.l.b16 %v2362
    %v2399 = vunpack.c.l.b16 %v2363
    %v2400 = vunpack.c.l.b16 %v2364
    %v2401 = vunpack.c.l.b16 %v2365
    %v2402 = vunpack.c.l.b16 %v2366
    %v2403 = vunpack.c.l.b16 %v2367
    %v2404 = vunpack.c.l.b16 %v2368
    %v2405 = vunpack.c.l.b16 %v2369
    %v2406 = vunpack.c.l.b16 %v2370
    %v2407 = vunpack.c.l.b16 %v2371
    %v2408 = vunpack.c.l.b16 %v2372
    %v2409 = vunpack.c.l.b16 %v2373
    %v2410 = vunpack.c.l.b16 %v2374
    %v2411 = vpack.c.b16 %v2396, %v2395
    %v2412 = vpack.c.b16 %v2398, %v2397
    %v2413 = vpack.c.b16 %v2400, %v2399
    %v2414 = vpack.c.b16 %v2402, %v2401
    %v2415 = vpack.c.b16 %v2404, %v2403
    %v2416 = vpack.c.b16 %v2406, %v2405
    %v2417 = vpack.c.b16 %v2408, %v2407
    %v2418 = vpack.c.b16 %v2410, %v2409
    %2427 = vmatpush.bf16.msra.mxu0 %v2418
    %2428 = vmatpush.bf16.msra.mxu0 %v2417
    %2429 = vmatpush.bf16.msra.mxu0 %v2416
    %2430 = vmatpush.bf16.msra.mxu0 %v2415
    %2431 = vmatpush.bf16.msra.mxu0 %v2414
    %2432 = vmatpush.bf16.msra.mxu0 %v2413
    %2433 = vmatpush.bf16.msra.mxu0 %v2412
    %2434 = vmatpush.bf16.msra.mxu0 %v2411
    %2435 = vmatmul.bf16.gmra.mxu0 %v2358
    %v2436 = vpop.f32.mrf.mxu0
    %v2437 = vadd.f32 %v2377, %v2436
    %v2438 = vpop.f32.mrf.mxu0
    %2439 = vdwg.mxu0
    %2440 = vst [vmem:[#allocation20] sm:$0xff] %v2437
    // Predicated region
    $region98: #{tpu_custom_call.1} parent=1 // pred_check
      _
    $region99: #{tpu_custom_call.1} parent=1 // pred_check_branch
      %2442 = sbr.rel (0) target = $region101
    $region100: #{tpu_custom_call.1} parent=1 // pred_region
      %2444 = vsyncadd [#allocation4], 0
      %s2446 = sshll.u32 [#allocation20], 4
      %s2447 = int_to_ptr.vmem [resolvable:$true] %s2446
      %s2448 = sshll.u32 %s13, 4
      %s2449 = int_to_ptr.hbm [resolvable:$true] %s2448
      %2451 = dma.vmem_to_hbm [thread:$0]  %s2447, 128, %s2449, [#allocation4]
    $region101: #{tpu_custom_call.1} parent=1 // pred_fallthru
      _
    // Predicated region
    $region102: #{tpu_custom_call.1} parent=1 // pred_check
      _
    $region103: #{tpu_custom_call.1} parent=1 // pred_check_branch
      %2453 = sbr.rel (0) target = $region105
    $region104: #{tpu_custom_call.1} parent=1 // pred_region
      %2455 = dma.done [#allocation4], 128
    $region105: #{tpu_custom_call.1} parent=1 // pred_fallthru
      _
    %2456 = vsyncpa [#allocation3], 1
    %2457 = vsyncpa [#allocation6], 1
    %2458 = vsyncpa [#allocation9], 1
    %2459 = vsyncpa [#allocation12], 1
    %2460 = vsyncpa [#allocation15], 1
    %2461 = vsyncpa [#allocation18], 1
    %2462 = vsyncpa [#allocation4], 1

</llo_original>
